<compile_context>
chip_gen: v5e
topology: v5e:2x2
jax: 0.10.0
libtpu: 0.0.40
codegen_flags: <defaults>
</compile_context>

<pallas_src>
import functools
import math

import numpy as np
import jax
import jax.numpy as jnp
from jax.experimental import pallas as pl
from jax.experimental.pallas import tpu as pltpu


# -----------------------------------------------------------------------------
# random_grouping: deterministic host-side equivalent of the PyTorch helper.
# The permutation is applied once in the wrapper as a single column gather.
# -----------------------------------------------------------------------------
def random_grouping(in_features: int, n_group: int, seed: int = 0):
    rng = np.random.RandomState(seed)
    perm = rng.permutation(in_features)
    sizes = in_features // n_group + (np.arange(n_group) < in_features % n_group)
    splits = np.cumsum(sizes)[:-1]
    return [np.sort(g) for g in np.split(perm, splits)]


# -----------------------------------------------------------------------------
# Fused encoder kernel: all layers in one invocation, everything VMEM-resident.
#   refs = (x_ref, [wg, bg, wqkv_t, wo_t, gamma, beta] * num_layers, o_ref)
# -----------------------------------------------------------------------------
def attomics_encoder_kernel(*refs, num_layers, num_heads, n_group, group_pad):
    x_ref = refs[0]
    o_ref = refs[-1]
    p_refs = refs[1:-1]

    B = x_ref.shape[0]
    G = n_group
    H = num_heads

    xg = x_ref[...]                 # (B, G*group_pad): permuted, padded, lane-dense
    h3 = None                       # grouped activation (B, G, E_prev) for layers >= 1

    for li in range(num_layers):
        (wg_ref, bg_ref, wqkv_ref, wo_ref,
         gamma_ref, beta_ref) = p_refs[6 * li:6 * (li + 1)]
        E = wo_ref.shape[0]
        d = E // H
        scale = 1.0 / math.sqrt(d)                      # SDPA default 1/sqrt(head_dim)

        wg = wg_ref[...]                                # (G, s_in, E)
        bg = bg_ref[...]                                # (G, 1, E)

        # (1) grouped per-group Linear: G small MXU matmuls, no block-diagonal
        #     redundancy.  Layer 0 slices lanes of the (already permuted) flat
        #     input; later layers index the grouped activation directly.
        z_list = []
        for g in range(G):
            if li == 0:
                inp_g = xg[:, g * group_pad:(g + 1) * group_pad]   # (B, s_pad)
            else:
                inp_g = h3[:, g]                                   # (B, E_prev)
            z_list.append(jnp.dot(inp_g, wg[g],
                                  preferred_element_type=jnp.float32) + bg[g])
        z3 = jnp.stack(z_list, axis=1)                  # (B, G, E)
        z2d = z3.reshape(B * G, E)                      # leading-dim merge (free)

        # (2) fused QKV projection: single (B*G, E) @ (E, 3E) matmul
        qkv = jnp.dot(z2d, wqkv_ref[...], preferred_element_type=jnp.float32)

        def split_heads(off):
            # columns [off + h*d, off + (h+1)*d) of qkv -> (B*H, G, d)
            per_head = [qkv[:, off + hh * d: off + (hh + 1) * d].reshape(B, G, d)
                        for hh in range(H)]
            return jnp.stack(per_head, axis=1).reshape(B * H, G, d)

        qh = split_heads(0)
        kh = split_heads(E)
        vh = split_heads(2 * E)

        # (3) scaled dot-product attention over groups; all (batch, head)
        #     pairs batched into a single leading axis -> two batched einsums,
        #     softmax denominator through the EUP reciprocal.
        sc = jnp.einsum('zqd,zkd->zqk', qh, kh,
                        preferred_element_type=jnp.float32) * scale
        sc = sc - jnp.max(sc, axis=-1, keepdims=True)
        p = jnp.exp(sc)
        p = p * pl.reciprocal(jnp.sum(p, axis=-1, keepdims=True), approx=True)
        av = jnp.einsum('zqk,zkd->zqd', p, vh,
                        preferred_element_type=jnp.float32)          # (B*H, G, d)

        # merge heads: (B*H, G, d) -> (B, G, E) with (h, d)-packed columns
        av4 = av.reshape(B, H, G, d)
        a3 = jnp.concatenate([av4[:, hh] for hh in range(H)], axis=-1)
        a2d = a3.reshape(B * G, E)

        out2d = jnp.dot(a2d, wo_ref[...], preferred_element_type=jnp.float32)

        # (4) residual (attention out + grouped-MLP out) + LayerNorm(eps=1e-5)
        r = out2d + z2d
        mean = jnp.mean(r, axis=-1, keepdims=True)
        var = jnp.mean((r - mean) ** 2, axis=-1, keepdims=True)
        nrm = (r - mean) * jax.lax.rsqrt(var + 1e-5)
        nrm = nrm * gamma_ref[...] + beta_ref[...]

        h3 = nrm.reshape(B, G, E)                       # stays grouped for next layer

    # (5) single lane-dense flat store (B, G*E_last): unmasked wide vst.
    o_ref[...] = jnp.concatenate([h3[:, g] for g in range(G)], axis=-1)


def attomics_encoder_forward(x, gather_idx, layer_params, *, num_heads, n_group,
                             group_pad, flatten_output=True):
    B = x.shape[0]
    num_layers = len(layer_params)
    E_last = layer_params[-1]["wo_t"].shape[0]

    # Layer-0 random-grouping permutation (+ per-group padding) as ONE XLA
    # gather outside the kernel: layout plumbing, not compute.
    xg = jnp.take(x, gather_idx, axis=1)                # (B, n_group*group_pad)

    flat_params = []
    for p in layer_params:
        flat_params += [p["wg"], p["bg"], p["wqkv_t"], p["wo_t"],
                        p["gamma"], p["beta"]]

    vspec = pl.BlockSpec(memory_space=pltpu.MemorySpace.VMEM)
    kernel = functools.partial(attomics_encoder_kernel,
                               num_layers=num_layers,
                               num_heads=num_heads,
                               n_group=n_group,
                               group_pad=group_pad)
    out = pl.pallas_call(
        kernel,
        out_shape=jax.ShapeDtypeStruct((B, n_group * E_last), jnp.float32),
        in_specs=[vspec] * (1 + len(flat_params)),
        out_specs=vspec,
    )(xg, *flat_params)

    if not flatten_output:
        out = out.reshape(B, n_group, E_last)            # free metadata reshape in XLA
    return out


# -----------------------------------------------------------------------------
# Parameter init: PyTorch-Linear-style uniform bounds; per-group weights are
# stacked into (G, s_in, E) tensors (layer-0 groups zero-padded to s_pad rows).
# -----------------------------------------------------------------------------
def init_encoder_params(key, in_features, n_group, group_size_list, num_heads):
    groups = random_grouping(in_features, n_group)
    G = n_group
    s_pad = max(len(g) for g in groups)

    # gather index: per-group sorted feature ids, padded to s_pad.  Pad slots
    # point at feature 0; the matching weight rows are zero so they contribute
    # nothing (handles unequal group sizes).
    gidx = np.zeros((G, s_pad), dtype=np.int32)
    for g, rows in enumerate(groups):
        gidx[g, :len(rows)] = rows
    gather_idx = jnp.asarray(gidx.reshape(-1))

    layers = []
    for li, E in enumerate(group_size_list):
        assert E % num_heads == 0, "group_size must be divisible by num_heads"
        s_in = s_pad if li == 0 else group_size_list[li - 1]

        wg = np.zeros((G, s_in, E), dtype=np.float32)
        bg = np.zeros((G, 1, E), dtype=np.float32)
        for g in range(G):
            s_real = len(groups[g]) if li == 0 else s_in
            bnd = 1.0 / math.sqrt(s_real)
            key, k1, k2 = jax.random.split(key, 3)
            wg[g, :s_real, :] = np.asarray(
                jax.random.uniform(k1, (s_real, E), jnp.float32, -bnd, bnd))
            bg[g, 0, :] = np.asarray(
                jax.random.uniform(k2, (E,), jnp.float32, -bnd, bnd))

        bnd_a = 1.0 / math.sqrt(E)
        key, kq, kk, kv, ko = jax.random.split(key, 5)
        wq = jax.random.uniform(kq, (E, E), jnp.float32, -bnd_a, bnd_a)
        wk = jax.random.uniform(kk, (E, E), jnp.float32, -bnd_a, bnd_a)
        wv = jax.random.uniform(kv, (E, E), jnp.float32, -bnd_a, bnd_a)
        wo = jax.random.uniform(ko, (E, E), jnp.float32, -bnd_a, bnd_a)

        layers.append(dict(
            wg=jnp.asarray(wg),                             # (G, s_in, E)
            bg=jnp.asarray(bg),                             # (G, 1, E)
            wqkv_t=jnp.concatenate([wq, wk, wv], axis=1),   # (E, 3E), y = x @ W.T form
            wo_t=wo,                                        # (E, E)
            gamma=jnp.ones((1, E), jnp.float32),            # LayerNorm affine defaults
            beta=jnp.zeros((1, E), jnp.float32),
        ))
    return gather_idx, s_pad, layers


# -----------------------------------------------------------------------------
# Pure-JAX reference (same math) for a correctness check.
# -----------------------------------------------------------------------------
def attomics_encoder_reference(x, gather_idx, layer_params, *, num_heads,
                               n_group, group_pad):
    B = x.shape[0]
    G, H = n_group, num_heads
    h3 = x[:, gather_idx].reshape(B, G, group_pad)
    E = layer_params[-1]["wo_t"].shape[0]
    for p in layer_params:
        E = p["wo_t"].shape[0]
        d = E // H
        z = jnp.einsum('bgs,gse->bge', h3, p["wg"]) + p["bg"].reshape(1, G, E)
        qkv = z @ p["wqkv_t"]
        q, k, v = qkv[..., :E], qkv[..., E:2 * E], qkv[..., 2 * E:]

        def hd(t):
            return t.reshape(B, G, H, d).transpose(0, 2, 1, 3)   # (B, H, G, d)

        qh, kh, vh = hd(q), hd(k), hd(v)
        sc = jnp.einsum('bhqd,bhkd->bhqk', qh, kh) / math.sqrt(d)
        pr = jax.nn.softmax(sc, axis=-1)
        av = jnp.einsum('bhqk,bhkd->bhqd', pr, vh)
        attn = av.transpose(0, 2, 1, 3).reshape(B, G, E)
        out = attn @ p["wo_t"]
        r = out + z
        mean = r.mean(-1, keepdims=True)
        var = ((r - mean) ** 2).mean(-1, keepdims=True)
        nrm = (r - mean) / jnp.sqrt(var + 1e-5)
        h3 = nrm * p["gamma"].reshape(1, 1, E) + p["beta"].reshape(1, 1, E)
    return h3.reshape(B, G * E)


# -----------------------------------------------------------------------------
if __name__ == "__main__":
    B = 4
    in_features = 64
    n_group = 8
    group_size_list = [32, 16]
    num_heads = 4
    flatten_output = True

    key = jax.random.PRNGKey(0)
    key, kx, kp = jax.random.split(key, 3)
    x = jax.random.normal(kx, (B, in_features), dtype=jnp.float32)

    gather_idx, group_pad, layer_params = init_encoder_params(
        kp, in_features, n_group, group_size_list, num_heads)

    out = attomics_encoder_forward(x, gather_idx, layer_params,
                                   num_heads=num_heads, n_group=n_group,
                                   group_pad=group_pad,
                                   flatten_output=flatten_output)
    out = jax.block_until_ready(out)

    ref = attomics_encoder_reference(x, gather_idx, layer_params,
                                     num_heads=num_heads, n_group=n_group,
                                     group_pad=group_pad)

    expected = (B, n_group * group_size_list[-1])
    assert out.shape == expected, (out.shape, expected)
    assert bool(jnp.all(jnp.isfinite(out)))
    assert bool(jnp.allclose(out, ref, rtol=2e-2, atol=2e-2)), \
        float(jnp.max(jnp.abs(out - ref)))
    print("KERNEL_OK")
</pallas_src>

<mosaic_0001>
module attributes {stable_mosaic.version = 11 : i64} {
  func.func @attomics_encoder_kernel(%arg0: memref<4x64xf32, #tpu.memory_space<vmem>>, %arg1: memref<8x8x32xf32, #tpu.memory_space<vmem>>, %arg2: memref<8x1x32xf32, #tpu.memory_space<vmem>>, %arg3: memref<32x96xf32, #tpu.memory_space<vmem>>, %arg4: memref<32x32xf32, #tpu.memory_space<vmem>>, %arg5: memref<1x32xf32, #tpu.memory_space<vmem>>, %arg6: memref<1x32xf32, #tpu.memory_space<vmem>>, %arg7: memref<8x32x16xf32, #tpu.memory_space<vmem>>, %arg8: memref<8x1x16xf32, #tpu.memory_space<vmem>>, %arg9: memref<16x48xf32, #tpu.memory_space<vmem>>, %arg10: memref<16x16xf32, #tpu.memory_space<vmem>>, %arg11: memref<1x16xf32, #tpu.memory_space<vmem>>, %arg12: memref<1x16xf32, #tpu.memory_space<vmem>>, %arg13: memref<4x128xf32, #tpu.memory_space<vmem>>) attributes {dimension_semantics = [], scalar_prefetch = 0 : i64, scratch_operands = 0 : i64, tpu.core_type = #tpu.core_type<tc>} {
    %c0 = arith.constant 0 : index
    %c0_0 = arith.constant 0 : index
    %0 = vector.load %arg0[%c0, %c0_0] : memref<4x64xf32, #tpu.memory_space<vmem>>, vector<4x64xf32>
    %c0_1 = arith.constant 0 : index
    %c0_2 = arith.constant 0 : index
    %c0_3 = arith.constant 0 : index
    %1 = vector.load %arg1[%c0_1, %c0_2, %c0_3] : memref<8x8x32xf32, #tpu.memory_space<vmem>>, vector<8x8x32xf32>
    %c0_4 = arith.constant 0 : index
    %c0_5 = arith.constant 0 : index
    %c0_6 = arith.constant 0 : index
    %2 = vector.load %arg2[%c0_4, %c0_5, %c0_6] : memref<8x1x32xf32, #tpu.memory_space<vmem>>, vector<8x1x32xf32>
    %3 = vector.extract_strided_slice %0 {offsets = [0, 0], sizes = [4, 8], strides = [1, 1]} : vector<4x64xf32> to vector<4x8xf32>
    %4 = vector.extract_strided_slice %1 {offsets = [0, 0, 0], sizes = [1, 8, 32], strides = [1, 1, 1]} : vector<8x8x32xf32> to vector<1x8x32xf32>
    %5 = vector.shape_cast %4 : vector<1x8x32xf32> to vector<8x32xf32>
    %cst = arith.constant dense<0.000000e+00> : vector<4x32xf32>
    %6 = tpu.matmul %3, %5, %cst {dimension_numbers = #tpu.dot_dimension_numbers<[1], [0], [0], [1], [0, 0, 1, 1], [], []>} : vector<4x8xf32>, vector<8x32xf32>, vector<4x32xf32> -> vector<4x32xf32>
    %7 = vector.extract_strided_slice %2 {offsets = [0, 0, 0], sizes = [1, 1, 32], strides = [1, 1, 1]} : vector<8x1x32xf32> to vector<1x1x32xf32>
    %8 = vector.shape_cast %7 : vector<1x1x32xf32> to vector<1x32xf32>
    %9 = vector.broadcast %8 : vector<1x32xf32> to vector<4x32xf32>
    %10 = arith.addf %6, %9 : vector<4x32xf32>
    %11 = vector.extract_strided_slice %0 {offsets = [0, 8], sizes = [4, 8], strides = [1, 1]} : vector<4x64xf32> to vector<4x8xf32>
    %12 = vector.extract_strided_slice %1 {offsets = [1, 0, 0], sizes = [1, 8, 32], strides = [1, 1, 1]} : vector<8x8x32xf32> to vector<1x8x32xf32>
    %13 = vector.shape_cast %12 : vector<1x8x32xf32> to vector<8x32xf32>
    %cst_7 = arith.constant dense<0.000000e+00> : vector<4x32xf32>
    %14 = tpu.matmul %11, %13, %cst_7 {dimension_numbers = #tpu.dot_dimension_numbers<[1], [0], [0], [1], [0, 0, 1, 1], [], []>} : vector<4x8xf32>, vector<8x32xf32>, vector<4x32xf32> -> vector<4x32xf32>
    %15 = vector.extract_strided_slice %2 {offsets = [1, 0, 0], sizes = [1, 1, 32], strides = [1, 1, 1]} : vector<8x1x32xf32> to vector<1x1x32xf32>
    %16 = vector.shape_cast %15 : vector<1x1x32xf32> to vector<1x32xf32>
    %17 = vector.broadcast %16 : vector<1x32xf32> to vector<4x32xf32>
    %18 = arith.addf %14, %17 : vector<4x32xf32>
    %19 = vector.extract_strided_slice %0 {offsets = [0, 16], sizes = [4, 8], strides = [1, 1]} : vector<4x64xf32> to vector<4x8xf32>
    %20 = vector.extract_strided_slice %1 {offsets = [2, 0, 0], sizes = [1, 8, 32], strides = [1, 1, 1]} : vector<8x8x32xf32> to vector<1x8x32xf32>
    %21 = vector.shape_cast %20 : vector<1x8x32xf32> to vector<8x32xf32>
    %cst_8 = arith.constant dense<0.000000e+00> : vector<4x32xf32>
    %22 = tpu.matmul %19, %21, %cst_8 {dimension_numbers = #tpu.dot_dimension_numbers<[1], [0], [0], [1], [0, 0, 1, 1], [], []>} : vector<4x8xf32>, vector<8x32xf32>, vector<4x32xf32> -> vector<4x32xf32>
    %23 = vector.extract_strided_slice %2 {offsets = [2, 0, 0], sizes = [1, 1, 32], strides = [1, 1, 1]} : vector<8x1x32xf32> to vector<1x1x32xf32>
    %24 = vector.shape_cast %23 : vector<1x1x32xf32> to vector<1x32xf32>
    %25 = vector.broadcast %24 : vector<1x32xf32> to vector<4x32xf32>
    %26 = arith.addf %22, %25 : vector<4x32xf32>
    %27 = vector.extract_strided_slice %0 {offsets = [0, 24], sizes = [4, 8], strides = [1, 1]} : vector<4x64xf32> to vector<4x8xf32>
    %28 = vector.extract_strided_slice %1 {offsets = [3, 0, 0], sizes = [1, 8, 32], strides = [1, 1, 1]} : vector<8x8x32xf32> to vector<1x8x32xf32>
    %29 = vector.shape_cast %28 : vector<1x8x32xf32> to vector<8x32xf32>
    %cst_9 = arith.constant dense<0.000000e+00> : vector<4x32xf32>
    %30 = tpu.matmul %27, %29, %cst_9 {dimension_numbers = #tpu.dot_dimension_numbers<[1], [0], [0], [1], [0, 0, 1, 1], [], []>} : vector<4x8xf32>, vector<8x32xf32>, vector<4x32xf32> -> vector<4x32xf32>
    %31 = vector.extract_strided_slice %2 {offsets = [3, 0, 0], sizes = [1, 1, 32], strides = [1, 1, 1]} : vector<8x1x32xf32> to vector<1x1x32xf32>
    %32 = vector.shape_cast %31 : vector<1x1x32xf32> to vector<1x32xf32>
    %33 = vector.broadcast %32 : vector<1x32xf32> to vector<4x32xf32>
    %34 = arith.addf %30, %33 : vector<4x32xf32>
    %35 = vector.extract_strided_slice %0 {offsets = [0, 32], sizes = [4, 8], strides = [1, 1]} : vector<4x64xf32> to vector<4x8xf32>
    %36 = vector.extract_strided_slice %1 {offsets = [4, 0, 0], sizes = [1, 8, 32], strides = [1, 1, 1]} : vector<8x8x32xf32> to vector<1x8x32xf32>
    %37 = vector.shape_cast %36 : vector<1x8x32xf32> to vector<8x32xf32>
    %cst_10 = arith.constant dense<0.000000e+00> : vector<4x32xf32>
    %38 = tpu.matmul %35, %37, %cst_10 {dimension_numbers = #tpu.dot_dimension_numbers<[1], [0], [0], [1], [0, 0, 1, 1], [], []>} : vector<4x8xf32>, vector<8x32xf32>, vector<4x32xf32> -> vector<4x32xf32>
    %39 = vector.extract_strided_slice %2 {offsets = [4, 0, 0], sizes = [1, 1, 32], strides = [1, 1, 1]} : vector<8x1x32xf32> to vector<1x1x32xf32>
    %40 = vector.shape_cast %39 : vector<1x1x32xf32> to vector<1x32xf32>
    %41 = vector.broadcast %40 : vector<1x32xf32> to vector<4x32xf32>
    %42 = arith.addf %38, %41 : vector<4x32xf32>
    %43 = vector.extract_strided_slice %0 {offsets = [0, 40], sizes = [4, 8], strides = [1, 1]} : vector<4x64xf32> to vector<4x8xf32>
    %44 = vector.extract_strided_slice %1 {offsets = [5, 0, 0], sizes = [1, 8, 32], strides = [1, 1, 1]} : vector<8x8x32xf32> to vector<1x8x32xf32>
    %45 = vector.shape_cast %44 : vector<1x8x32xf32> to vector<8x32xf32>
    %cst_11 = arith.constant dense<0.000000e+00> : vector<4x32xf32>
    %46 = tpu.matmul %43, %45, %cst_11 {dimension_numbers = #tpu.dot_dimension_numbers<[1], [0], [0], [1], [0, 0, 1, 1], [], []>} : vector<4x8xf32>, vector<8x32xf32>, vector<4x32xf32> -> vector<4x32xf32>
    %47 = vector.extract_strided_slice %2 {offsets = [5, 0, 0], sizes = [1, 1, 32], strides = [1, 1, 1]} : vector<8x1x32xf32> to vector<1x1x32xf32>
    %48 = vector.shape_cast %47 : vector<1x1x32xf32> to vector<1x32xf32>
    %49 = vector.broadcast %48 : vector<1x32xf32> to vector<4x32xf32>
    %50 = arith.addf %46, %49 : vector<4x32xf32>
    %51 = vector.extract_strided_slice %0 {offsets = [0, 48], sizes = [4, 8], strides = [1, 1]} : vector<4x64xf32> to vector<4x8xf32>
    %52 = vector.extract_strided_slice %1 {offsets = [6, 0, 0], sizes = [1, 8, 32], strides = [1, 1, 1]} : vector<8x8x32xf32> to vector<1x8x32xf32>
    %53 = vector.shape_cast %52 : vector<1x8x32xf32> to vector<8x32xf32>
    %cst_12 = arith.constant dense<0.000000e+00> : vector<4x32xf32>
    %54 = tpu.matmul %51, %53, %cst_12 {dimension_numbers = #tpu.dot_dimension_numbers<[1], [0], [0], [1], [0, 0, 1, 1], [], []>} : vector<4x8xf32>, vector<8x32xf32>, vector<4x32xf32> -> vector<4x32xf32>
    %55 = vector.extract_strided_slice %2 {offsets = [6, 0, 0], sizes = [1, 1, 32], strides = [1, 1, 1]} : vector<8x1x32xf32> to vector<1x1x32xf32>
    %56 = vector.shape_cast %55 : vector<1x1x32xf32> to vector<1x32xf32>
    %57 = vector.broadcast %56 : vector<1x32xf32> to vector<4x32xf32>
    %58 = arith.addf %54, %57 : vector<4x32xf32>
    %59 = vector.extract_strided_slice %0 {offsets = [0, 56], sizes = [4, 8], strides = [1, 1]} : vector<4x64xf32> to vector<4x8xf32>
    %60 = vector.extract_strided_slice %1 {offsets = [7, 0, 0], sizes = [1, 8, 32], strides = [1, 1, 1]} : vector<8x8x32xf32> to vector<1x8x32xf32>
    %61 = vector.shape_cast %60 : vector<1x8x32xf32> to vector<8x32xf32>
    %cst_13 = arith.constant dense<0.000000e+00> : vector<4x32xf32>
    %62 = tpu.matmul %59, %61, %cst_13 {dimension_numbers = #tpu.dot_dimension_numbers<[1], [0], [0], [1], [0, 0, 1, 1], [], []>} : vector<4x8xf32>, vector<8x32xf32>, vector<4x32xf32> -> vector<4x32xf32>
    %63 = vector.extract_strided_slice %2 {offsets = [7, 0, 0], sizes = [1, 1, 32], strides = [1, 1, 1]} : vector<8x1x32xf32> to vector<1x1x32xf32>
    %64 = vector.shape_cast %63 : vector<1x1x32xf32> to vector<1x32xf32>
    %65 = vector.broadcast %64 : vector<1x32xf32> to vector<4x32xf32>
    %66 = arith.addf %62, %65 : vector<4x32xf32>
    %67 = vector.shape_cast %10 : vector<4x32xf32> to vector<4x1x32xf32>
    %68 = vector.shape_cast %18 : vector<4x32xf32> to vector<4x1x32xf32>
    %69 = vector.shape_cast %26 : vector<4x32xf32> to vector<4x1x32xf32>
    %70 = vector.shape_cast %34 : vector<4x32xf32> to vector<4x1x32xf32>
    %71 = vector.shape_cast %42 : vector<4x32xf32> to vector<4x1x32xf32>
    %72 = vector.shape_cast %50 : vector<4x32xf32> to vector<4x1x32xf32>
    %73 = vector.shape_cast %58 : vector<4x32xf32> to vector<4x1x32xf32>
    %74 = vector.shape_cast %66 : vector<4x32xf32> to vector<4x1x32xf32>
    %75 = tpu.concatenate %67, %68, %69, %70, %71, %72, %73, %74 in 1 : vector<4x1x32xf32>, vector<4x1x32xf32>, vector<4x1x32xf32>, vector<4x1x32xf32>, vector<4x1x32xf32>, vector<4x1x32xf32>, vector<4x1x32xf32>, vector<4x1x32xf32> -> vector<4x8x32xf32>
    %76 = vector.shape_cast %75 : vector<4x8x32xf32> to vector<32x32xf32>
    %c0_14 = arith.constant 0 : index
    %c0_15 = arith.constant 0 : index
    %77 = vector.load %arg3[%c0_14, %c0_15] : memref<32x96xf32, #tpu.memory_space<vmem>>, vector<32x96xf32>
    %cst_16 = arith.constant dense<0.000000e+00> : vector<32x96xf32>
    %78 = tpu.matmul %76, %77, %cst_16 {dimension_numbers = #tpu.dot_dimension_numbers<[1], [0], [0], [1], [0, 0, 1, 1], [], []>} : vector<32x32xf32>, vector<32x96xf32>, vector<32x96xf32> -> vector<32x96xf32>
    %79 = vector.extract_strided_slice %78 {offsets = [0, 0], sizes = [32, 8], strides = [1, 1]} : vector<32x96xf32> to vector<32x8xf32>
    %80 = vector.shape_cast %79 : vector<32x8xf32> to vector<4x8x8xf32>
    %81 = vector.extract_strided_slice %78 {offsets = [0, 8], sizes = [32, 8], strides = [1, 1]} : vector<32x96xf32> to vector<32x8xf32>
    %82 = vector.shape_cast %81 : vector<32x8xf32> to vector<4x8x8xf32>
    %83 = vector.extract_strided_slice %78 {offsets = [0, 16], sizes = [32, 8], strides = [1, 1]} : vector<32x96xf32> to vector<32x8xf32>
    %84 = vector.shape_cast %83 : vector<32x8xf32> to vector<4x8x8xf32>
    %85 = vector.extract_strided_slice %78 {offsets = [0, 24], sizes = [32, 8], strides = [1, 1]} : vector<32x96xf32> to vector<32x8xf32>
    %86 = vector.shape_cast %85 : vector<32x8xf32> to vector<4x8x8xf32>
    %87 = vector.shape_cast %80 : vector<4x8x8xf32> to vector<4x1x8x8xf32>
    %88 = vector.shape_cast %82 : vector<4x8x8xf32> to vector<4x1x8x8xf32>
    %89 = vector.shape_cast %84 : vector<4x8x8xf32> to vector<4x1x8x8xf32>
    %90 = vector.shape_cast %86 : vector<4x8x8xf32> to vector<4x1x8x8xf32>
    %91 = tpu.concatenate %87, %88, %89, %90 in 1 : vector<4x1x8x8xf32>, vector<4x1x8x8xf32>, vector<4x1x8x8xf32>, vector<4x1x8x8xf32> -> vector<4x4x8x8xf32>
    %92 = vector.shape_cast %91 : vector<4x4x8x8xf32> to vector<16x8x8xf32>
    %93 = vector.extract_strided_slice %78 {offsets = [0, 32], sizes = [32, 8], strides = [1, 1]} : vector<32x96xf32> to vector<32x8xf32>
    %94 = vector.shape_cast %93 : vector<32x8xf32> to vector<4x8x8xf32>
    %95 = vector.extract_strided_slice %78 {offsets = [0, 40], sizes = [32, 8], strides = [1, 1]} : vector<32x96xf32> to vector<32x8xf32>
    %96 = vector.shape_cast %95 : vector<32x8xf32> to vector<4x8x8xf32>
    %97 = vector.extract_strided_slice %78 {offsets = [0, 48], sizes = [32, 8], strides = [1, 1]} : vector<32x96xf32> to vector<32x8xf32>
    %98 = vector.shape_cast %97 : vector<32x8xf32> to vector<4x8x8xf32>
    %99 = vector.extract_strided_slice %78 {offsets = [0, 56], sizes = [32, 8], strides = [1, 1]} : vector<32x96xf32> to vector<32x8xf32>
    %100 = vector.shape_cast %99 : vector<32x8xf32> to vector<4x8x8xf32>
    %101 = vector.shape_cast %94 : vector<4x8x8xf32> to vector<4x1x8x8xf32>
    %102 = vector.shape_cast %96 : vector<4x8x8xf32> to vector<4x1x8x8xf32>
    %103 = vector.shape_cast %98 : vector<4x8x8xf32> to vector<4x1x8x8xf32>
    %104 = vector.shape_cast %100 : vector<4x8x8xf32> to vector<4x1x8x8xf32>
    %105 = tpu.concatenate %101, %102, %103, %104 in 1 : vector<4x1x8x8xf32>, vector<4x1x8x8xf32>, vector<4x1x8x8xf32>, vector<4x1x8x8xf32> -> vector<4x4x8x8xf32>
    %106 = vector.shape_cast %105 : vector<4x4x8x8xf32> to vector<16x8x8xf32>
    %107 = vector.extract_strided_slice %78 {offsets = [0, 64], sizes = [32, 8], strides = [1, 1]} : vector<32x96xf32> to vector<32x8xf32>
    %108 = vector.shape_cast %107 : vector<32x8xf32> to vector<4x8x8xf32>
    %109 = vector.extract_strided_slice %78 {offsets = [0, 72], sizes = [32, 8], strides = [1, 1]} : vector<32x96xf32> to vector<32x8xf32>
    %110 = vector.shape_cast %109 : vector<32x8xf32> to vector<4x8x8xf32>
    %111 = vector.extract_strided_slice %78 {offsets = [0, 80], sizes = [32, 8], strides = [1, 1]} : vector<32x96xf32> to vector<32x8xf32>
    %112 = vector.shape_cast %111 : vector<32x8xf32> to vector<4x8x8xf32>
    %113 = vector.extract_strided_slice %78 {offsets = [0, 88], sizes = [32, 8], strides = [1, 1]} : vector<32x96xf32> to vector<32x8xf32>
    %114 = vector.shape_cast %113 : vector<32x8xf32> to vector<4x8x8xf32>
    %115 = vector.shape_cast %108 : vector<4x8x8xf32> to vector<4x1x8x8xf32>
    %116 = vector.shape_cast %110 : vector<4x8x8xf32> to vector<4x1x8x8xf32>
    %117 = vector.shape_cast %112 : vector<4x8x8xf32> to vector<4x1x8x8xf32>
    %118 = vector.shape_cast %114 : vector<4x8x8xf32> to vector<4x1x8x8xf32>
    %119 = tpu.concatenate %115, %116, %117, %118 in 1 : vector<4x1x8x8xf32>, vector<4x1x8x8xf32>, vector<4x1x8x8xf32>, vector<4x1x8x8xf32> -> vector<4x4x8x8xf32>
    %120 = vector.shape_cast %119 : vector<4x4x8x8xf32> to vector<16x8x8xf32>
    "tpu.trace_start"() <{level = 10 : i32, message = "zqd,zkd->zqk"}> : () -> ()
    %cst_17 = arith.constant dense<0.000000e+00> : vector<16x8x8xf32>
    %121 = tpu.matmul %92, %106, %cst_17 {dimension_numbers = #tpu.dot_dimension_numbers<[2], [2], [1], [1], [0, 0, 0, 1, 1, 1], [0], [0]>} : vector<16x8x8xf32>, vector<16x8x8xf32>, vector<16x8x8xf32> -> vector<16x8x8xf32>
    "tpu.trace_stop"() : () -> ()
    %cst_18 = arith.constant 0.353553385 : f32
    %122 = vector.broadcast %cst_18 : f32 to vector<16x8x8xf32>
    %123 = arith.mulf %121, %122 : vector<16x8x8xf32>
    %cst_19 = arith.constant dense<0xFF800000> : vector<16x8xf32>
    %124 = vector.multi_reduction <maximumf>, %123, %cst_19 [2] : vector<16x8x8xf32> to vector<16x8xf32>
    %125 = vector.shape_cast %124 : vector<16x8xf32> to vector<16x8x1xf32>
    %126 = vector.broadcast %125 : vector<16x8x1xf32> to vector<16x8x8xf32>
    %127 = arith.subf %123, %126 : vector<16x8x8xf32>
    %128 = math.exp %127 : vector<16x8x8xf32>
    %cst_20 = arith.constant dense<0.000000e+00> : vector<16x8xf32>
    %129 = vector.multi_reduction <add>, %128, %cst_20 [2] : vector<16x8x8xf32> to vector<16x8xf32>
    %130 = vector.shape_cast %129 : vector<16x8xf32> to vector<16x8x1xf32>
    %131 = tpu.reciprocal %130 {approx = true} : vector<16x8x1xf32> -> vector<16x8x1xf32>
    %132 = vector.broadcast %131 : vector<16x8x1xf32> to vector<16x8x8xf32>
    %133 = arith.mulf %128, %132 : vector<16x8x8xf32>
    "tpu.trace_start"() <{level = 10 : i32, message = "zqk,zkd->zqd"}> : () -> ()
    %cst_21 = arith.constant dense<0.000000e+00> : vector<16x8x8xf32>
    %134 = tpu.matmul %133, %120, %cst_21 {dimension_numbers = #tpu.dot_dimension_numbers<[2], [1], [1], [2], [0, 0, 0, 1, 1, 2], [0], [0]>} : vector<16x8x8xf32>, vector<16x8x8xf32>, vector<16x8x8xf32> -> vector<16x8x8xf32>
    "tpu.trace_stop"() : () -> ()
    %135 = vector.shape_cast %134 : vector<16x8x8xf32> to vector<4x4x8x8xf32>
    %136 = vector.extract_strided_slice %135 {offsets = [0, 0, 0, 0], sizes = [4, 1, 8, 8], strides = [1, 1, 1, 1]} : vector<4x4x8x8xf32> to vector<4x1x8x8xf32>
    %137 = vector.shape_cast %136 : vector<4x1x8x8xf32> to vector<4x8x8xf32>
    %138 = vector.extract_strided_slice %135 {offsets = [0, 1, 0, 0], sizes = [4, 1, 8, 8], strides = [1, 1, 1, 1]} : vector<4x4x8x8xf32> to vector<4x1x8x8xf32>
    %139 = vector.shape_cast %138 : vector<4x1x8x8xf32> to vector<4x8x8xf32>
    %140 = vector.extract_strided_slice %135 {offsets = [0, 2, 0, 0], sizes = [4, 1, 8, 8], strides = [1, 1, 1, 1]} : vector<4x4x8x8xf32> to vector<4x1x8x8xf32>
    %141 = vector.shape_cast %140 : vector<4x1x8x8xf32> to vector<4x8x8xf32>
    %142 = vector.extract_strided_slice %135 {offsets = [0, 3, 0, 0], sizes = [4, 1, 8, 8], strides = [1, 1, 1, 1]} : vector<4x4x8x8xf32> to vector<4x1x8x8xf32>
    %143 = vector.shape_cast %142 : vector<4x1x8x8xf32> to vector<4x8x8xf32>
    %144 = tpu.concatenate %137, %139, %141, %143 in 2 : vector<4x8x8xf32>, vector<4x8x8xf32>, vector<4x8x8xf32>, vector<4x8x8xf32> -> vector<4x8x32xf32>
    %145 = vector.shape_cast %144 : vector<4x8x32xf32> to vector<32x32xf32>
    %c0_22 = arith.constant 0 : index
    %c0_23 = arith.constant 0 : index
    %146 = vector.load %arg4[%c0_22, %c0_23] : memref<32x32xf32, #tpu.memory_space<vmem>>, vector<32x32xf32>
    %cst_24 = arith.constant dense<0.000000e+00> : vector<32x32xf32>
    %147 = tpu.matmul %145, %146, %cst_24 {dimension_numbers = #tpu.dot_dimension_numbers<[1], [0], [0], [1], [0, 0, 1, 1], [], []>} : vector<32x32xf32>, vector<32x32xf32>, vector<32x32xf32> -> vector<32x32xf32>
    %148 = arith.addf %147, %76 : vector<32x32xf32>
    %cst_25 = arith.constant dense<0.000000e+00> : vector<32xf32>
    %149 = vector.multi_reduction <add>, %148, %cst_25 [1] : vector<32x32xf32> to vector<32xf32>
    %150 = vector.shape_cast %149 : vector<32xf32> to vector<32x1xf32>
    %cst_26 = arith.constant 3.200000e+01 : f32
    %151 = vector.broadcast %cst_26 : f32 to vector<32x1xf32>
    %152 = arith.divf %150, %151 : vector<32x1xf32>
    %153 = vector.broadcast %152 : vector<32x1xf32> to vector<32x32xf32>
    %154 = arith.subf %148, %153 : vector<32x32xf32>
    %155 = arith.mulf %154, %154 : vector<32x32xf32>
    %cst_27 = arith.constant dense<0.000000e+00> : vector<32xf32>
    %156 = vector.multi_reduction <add>, %155, %cst_27 [1] : vector<32x32xf32> to vector<32xf32>
    %157 = vector.shape_cast %156 : vector<32xf32> to vector<32x1xf32>
    %cst_28 = arith.constant 3.200000e+01 : f32
    %158 = vector.broadcast %cst_28 : f32 to vector<32x1xf32>
    %159 = arith.divf %157, %158 : vector<32x1xf32>
    %160 = vector.broadcast %152 : vector<32x1xf32> to vector<32x32xf32>
    %161 = arith.subf %148, %160 : vector<32x32xf32>
    %cst_29 = arith.constant 9.99999974E-6 : f32
    %162 = vector.broadcast %cst_29 : f32 to vector<32x1xf32>
    %163 = arith.addf %159, %162 : vector<32x1xf32>
    %164 = math.rsqrt %163 : vector<32x1xf32>
    %165 = vector.broadcast %164 : vector<32x1xf32> to vector<32x32xf32>
    %166 = arith.mulf %161, %165 : vector<32x32xf32>
    %c0_30 = arith.constant 0 : index
    %c0_31 = arith.constant 0 : index
    %167 = vector.load %arg5[%c0_30, %c0_31] : memref<1x32xf32, #tpu.memory_space<vmem>>, vector<1x32xf32>
    %168 = vector.broadcast %167 : vector<1x32xf32> to vector<32x32xf32>
    %169 = arith.mulf %166, %168 : vector<32x32xf32>
    %c0_32 = arith.constant 0 : index
    %c0_33 = arith.constant 0 : index
    %170 = vector.load %arg6[%c0_32, %c0_33] : memref<1x32xf32, #tpu.memory_space<vmem>>, vector<1x32xf32>
    %171 = vector.broadcast %170 : vector<1x32xf32> to vector<32x32xf32>
    %172 = arith.addf %169, %171 : vector<32x32xf32>
    %173 = vector.shape_cast %172 : vector<32x32xf32> to vector<4x8x32xf32>
    %c0_34 = arith.constant 0 : index
    %c0_35 = arith.constant 0 : index
    %c0_36 = arith.constant 0 : index
    %174 = vector.load %arg7[%c0_34, %c0_35, %c0_36] : memref<8x32x16xf32, #tpu.memory_space<vmem>>, vector<8x32x16xf32>
    %c0_37 = arith.constant 0 : index
    %c0_38 = arith.constant 0 : index
    %c0_39 = arith.constant 0 : index
    %175 = vector.load %arg8[%c0_37, %c0_38, %c0_39] : memref<8x1x16xf32, #tpu.memory_space<vmem>>, vector<8x1x16xf32>
    %176 = vector.extract_strided_slice %173 {offsets = [0, 0, 0], sizes = [4, 1, 32], strides = [1, 1, 1]} : vector<4x8x32xf32> to vector<4x1x32xf32>
    %177 = vector.shape_cast %176 : vector<4x1x32xf32> to vector<4x32xf32>
    %178 = vector.extract_strided_slice %174 {offsets = [0, 0, 0], sizes = [1, 32, 16], strides = [1, 1, 1]} : vector<8x32x16xf32> to vector<1x32x16xf32>
    %179 = vector.shape_cast %178 : vector<1x32x16xf32> to vector<32x16xf32>
    %cst_40 = arith.constant dense<0.000000e+00> : vector<4x16xf32>
    %180 = tpu.matmul %177, %179, %cst_40 {dimension_numbers = #tpu.dot_dimension_numbers<[1], [0], [0], [1], [0, 0, 1, 1], [], []>} : vector<4x32xf32>, vector<32x16xf32>, vector<4x16xf32> -> vector<4x16xf32>
    %181 = vector.extract_strided_slice %175 {offsets = [0, 0, 0], sizes = [1, 1, 16], strides = [1, 1, 1]} : vector<8x1x16xf32> to vector<1x1x16xf32>
    %182 = vector.shape_cast %181 : vector<1x1x16xf32> to vector<1x16xf32>
    %183 = vector.broadcast %182 : vector<1x16xf32> to vector<4x16xf32>
    %184 = arith.addf %180, %183 : vector<4x16xf32>
    %185 = vector.extract_strided_slice %173 {offsets = [0, 1, 0], sizes = [4, 1, 32], strides = [1, 1, 1]} : vector<4x8x32xf32> to vector<4x1x32xf32>
    %186 = vector.shape_cast %185 : vector<4x1x32xf32> to vector<4x32xf32>
    %187 = vector.extract_strided_slice %174 {offsets = [1, 0, 0], sizes = [1, 32, 16], strides = [1, 1, 1]} : vector<8x32x16xf32> to vector<1x32x16xf32>
    %188 = vector.shape_cast %187 : vector<1x32x16xf32> to vector<32x16xf32>
    %cst_41 = arith.constant dense<0.000000e+00> : vector<4x16xf32>
    %189 = tpu.matmul %186, %188, %cst_41 {dimension_numbers = #tpu.dot_dimension_numbers<[1], [0], [0], [1], [0, 0, 1, 1], [], []>} : vector<4x32xf32>, vector<32x16xf32>, vector<4x16xf32> -> vector<4x16xf32>
    %190 = vector.extract_strided_slice %175 {offsets = [1, 0, 0], sizes = [1, 1, 16], strides = [1, 1, 1]} : vector<8x1x16xf32> to vector<1x1x16xf32>
    %191 = vector.shape_cast %190 : vector<1x1x16xf32> to vector<1x16xf32>
    %192 = vector.broadcast %191 : vector<1x16xf32> to vector<4x16xf32>
    %193 = arith.addf %189, %192 : vector<4x16xf32>
    %194 = vector.extract_strided_slice %173 {offsets = [0, 2, 0], sizes = [4, 1, 32], strides = [1, 1, 1]} : vector<4x8x32xf32> to vector<4x1x32xf32>
    %195 = vector.shape_cast %194 : vector<4x1x32xf32> to vector<4x32xf32>
    %196 = vector.extract_strided_slice %174 {offsets = [2, 0, 0], sizes = [1, 32, 16], strides = [1, 1, 1]} : vector<8x32x16xf32> to vector<1x32x16xf32>
    %197 = vector.shape_cast %196 : vector<1x32x16xf32> to vector<32x16xf32>
    %cst_42 = arith.constant dense<0.000000e+00> : vector<4x16xf32>
    %198 = tpu.matmul %195, %197, %cst_42 {dimension_numbers = #tpu.dot_dimension_numbers<[1], [0], [0], [1], [0, 0, 1, 1], [], []>} : vector<4x32xf32>, vector<32x16xf32>, vector<4x16xf32> -> vector<4x16xf32>
    %199 = vector.extract_strided_slice %175 {offsets = [2, 0, 0], sizes = [1, 1, 16], strides = [1, 1, 1]} : vector<8x1x16xf32> to vector<1x1x16xf32>
    %200 = vector.shape_cast %199 : vector<1x1x16xf32> to vector<1x16xf32>
    %201 = vector.broadcast %200 : vector<1x16xf32> to vector<4x16xf32>
    %202 = arith.addf %198, %201 : vector<4x16xf32>
    %203 = vector.extract_strided_slice %173 {offsets = [0, 3, 0], sizes = [4, 1, 32], strides = [1, 1, 1]} : vector<4x8x32xf32> to vector<4x1x32xf32>
    %204 = vector.shape_cast %203 : vector<4x1x32xf32> to vector<4x32xf32>
    %205 = vector.extract_strided_slice %174 {offsets = [3, 0, 0], sizes = [1, 32, 16], strides = [1, 1, 1]} : vector<8x32x16xf32> to vector<1x32x16xf32>
    %206 = vector.shape_cast %205 : vector<1x32x16xf32> to vector<32x16xf32>
    %cst_43 = arith.constant dense<0.000000e+00> : vector<4x16xf32>
    %207 = tpu.matmul %204, %206, %cst_43 {dimension_numbers = #tpu.dot_dimension_numbers<[1], [0], [0], [1], [0, 0, 1, 1], [], []>} : vector<4x32xf32>, vector<32x16xf32>, vector<4x16xf32> -> vector<4x16xf32>
    %208 = vector.extract_strided_slice %175 {offsets = [3, 0, 0], sizes = [1, 1, 16], strides = [1, 1, 1]} : vector<8x1x16xf32> to vector<1x1x16xf32>
    %209 = vector.shape_cast %208 : vector<1x1x16xf32> to vector<1x16xf32>
    %210 = vector.broadcast %209 : vector<1x16xf32> to vector<4x16xf32>
    %211 = arith.addf %207, %210 : vector<4x16xf32>
    %212 = vector.extract_strided_slice %173 {offsets = [0, 4, 0], sizes = [4, 1, 32], strides = [1, 1, 1]} : vector<4x8x32xf32> to vector<4x1x32xf32>
    %213 = vector.shape_cast %212 : vector<4x1x32xf32> to vector<4x32xf32>
    %214 = vector.extract_strided_slice %174 {offsets = [4, 0, 0], sizes = [1, 32, 16], strides = [1, 1, 1]} : vector<8x32x16xf32> to vector<1x32x16xf32>
    %215 = vector.shape_cast %214 : vector<1x32x16xf32> to vector<32x16xf32>
    %cst_44 = arith.constant dense<0.000000e+00> : vector<4x16xf32>
    %216 = tpu.matmul %213, %215, %cst_44 {dimension_numbers = #tpu.dot_dimension_numbers<[1], [0], [0], [1], [0, 0, 1, 1], [], []>} : vector<4x32xf32>, vector<32x16xf32>, vector<4x16xf32> -> vector<4x16xf32>
    %217 = vector.extract_strided_slice %175 {offsets = [4, 0, 0], sizes = [1, 1, 16], strides = [1, 1, 1]} : vector<8x1x16xf32> to vector<1x1x16xf32>
    %218 = vector.shape_cast %217 : vector<1x1x16xf32> to vector<1x16xf32>
    %219 = vector.broadcast %218 : vector<1x16xf32> to vector<4x16xf32>
    %220 = arith.addf %216, %219 : vector<4x16xf32>
    %221 = vector.extract_strided_slice %173 {offsets = [0, 5, 0], sizes = [4, 1, 32], strides = [1, 1, 1]} : vector<4x8x32xf32> to vector<4x1x32xf32>
    %222 = vector.shape_cast %221 : vector<4x1x32xf32> to vector<4x32xf32>
    %223 = vector.extract_strided_slice %174 {offsets = [5, 0, 0], sizes = [1, 32, 16], strides = [1, 1, 1]} : vector<8x32x16xf32> to vector<1x32x16xf32>
    %224 = vector.shape_cast %223 : vector<1x32x16xf32> to vector<32x16xf32>
    %cst_45 = arith.constant dense<0.000000e+00> : vector<4x16xf32>
    %225 = tpu.matmul %222, %224, %cst_45 {dimension_numbers = #tpu.dot_dimension_numbers<[1], [0], [0], [1], [0, 0, 1, 1], [], []>} : vector<4x32xf32>, vector<32x16xf32>, vector<4x16xf32> -> vector<4x16xf32>
    %226 = vector.extract_strided_slice %175 {offsets = [5, 0, 0], sizes = [1, 1, 16], strides = [1, 1, 1]} : vector<8x1x16xf32> to vector<1x1x16xf32>
    %227 = vector.shape_cast %226 : vector<1x1x16xf32> to vector<1x16xf32>
    %228 = vector.broadcast %227 : vector<1x16xf32> to vector<4x16xf32>
    %229 = arith.addf %225, %228 : vector<4x16xf32>
    %230 = vector.extract_strided_slice %173 {offsets = [0, 6, 0], sizes = [4, 1, 32], strides = [1, 1, 1]} : vector<4x8x32xf32> to vector<4x1x32xf32>
    %231 = vector.shape_cast %230 : vector<4x1x32xf32> to vector<4x32xf32>
    %232 = vector.extract_strided_slice %174 {offsets = [6, 0, 0], sizes = [1, 32, 16], strides = [1, 1, 1]} : vector<8x32x16xf32> to vector<1x32x16xf32>
    %233 = vector.shape_cast %232 : vector<1x32x16xf32> to vector<32x16xf32>
    %cst_46 = arith.constant dense<0.000000e+00> : vector<4x16xf32>
    %234 = tpu.matmul %231, %233, %cst_46 {dimension_numbers = #tpu.dot_dimension_numbers<[1], [0], [0], [1], [0, 0, 1, 1], [], []>} : vector<4x32xf32>, vector<32x16xf32>, vector<4x16xf32> -> vector<4x16xf32>
    %235 = vector.extract_strided_slice %175 {offsets = [6, 0, 0], sizes = [1, 1, 16], strides = [1, 1, 1]} : vector<8x1x16xf32> to vector<1x1x16xf32>
    %236 = vector.shape_cast %235 : vector<1x1x16xf32> to vector<1x16xf32>
    %237 = vector.broadcast %236 : vector<1x16xf32> to vector<4x16xf32>
    %238 = arith.addf %234, %237 : vector<4x16xf32>
    %239 = vector.extract_strided_slice %173 {offsets = [0, 7, 0], sizes = [4, 1, 32], strides = [1, 1, 1]} : vector<4x8x32xf32> to vector<4x1x32xf32>
    %240 = vector.shape_cast %239 : vector<4x1x32xf32> to vector<4x32xf32>
    %241 = vector.extract_strided_slice %174 {offsets = [7, 0, 0], sizes = [1, 32, 16], strides = [1, 1, 1]} : vector<8x32x16xf32> to vector<1x32x16xf32>
    %242 = vector.shape_cast %241 : vector<1x32x16xf32> to vector<32x16xf32>
    %cst_47 = arith.constant dense<0.000000e+00> : vector<4x16xf32>
    %243 = tpu.matmul %240, %242, %cst_47 {dimension_numbers = #tpu.dot_dimension_numbers<[1], [0], [0], [1], [0, 0, 1, 1], [], []>} : vector<4x32xf32>, vector<32x16xf32>, vector<4x16xf32> -> vector<4x16xf32>
    %244 = vector.extract_strided_slice %175 {offsets = [7, 0, 0], sizes = [1, 1, 16], strides = [1, 1, 1]} : vector<8x1x16xf32> to vector<1x1x16xf32>
    %245 = vector.shape_cast %244 : vector<1x1x16xf32> to vector<1x16xf32>
    %246 = vector.broadcast %245 : vector<1x16xf32> to vector<4x16xf32>
    %247 = arith.addf %243, %246 : vector<4x16xf32>
    %248 = vector.shape_cast %184 : vector<4x16xf32> to vector<4x1x16xf32>
    %249 = vector.shape_cast %193 : vector<4x16xf32> to vector<4x1x16xf32>
    %250 = vector.shape_cast %202 : vector<4x16xf32> to vector<4x1x16xf32>
    %251 = vector.shape_cast %211 : vector<4x16xf32> to vector<4x1x16xf32>
    %252 = vector.shape_cast %220 : vector<4x16xf32> to vector<4x1x16xf32>
    %253 = vector.shape_cast %229 : vector<4x16xf32> to vector<4x1x16xf32>
    %254 = vector.shape_cast %238 : vector<4x16xf32> to vector<4x1x16xf32>
    %255 = vector.shape_cast %247 : vector<4x16xf32> to vector<4x1x16xf32>
    %256 = tpu.concatenate %248, %249, %250, %251, %252, %253, %254, %255 in 1 : vector<4x1x16xf32>, vector<4x1x16xf32>, vector<4x1x16xf32>, vector<4x1x16xf32>, vector<4x1x16xf32>, vector<4x1x16xf32>, vector<4x1x16xf32>, vector<4x1x16xf32> -> vector<4x8x16xf32>
    %257 = vector.shape_cast %256 : vector<4x8x16xf32> to vector<32x16xf32>
    %c0_48 = arith.constant 0 : index
    %c0_49 = arith.constant 0 : index
    %258 = vector.load %arg9[%c0_48, %c0_49] : memref<16x48xf32, #tpu.memory_space<vmem>>, vector<16x48xf32>
    %cst_50 = arith.constant dense<0.000000e+00> : vector<32x48xf32>
    %259 = tpu.matmul %257, %258, %cst_50 {dimension_numbers = #tpu.dot_dimension_numbers<[1], [0], [0], [1], [0, 0, 1, 1], [], []>} : vector<32x16xf32>, vector<16x48xf32>, vector<32x48xf32> -> vector<32x48xf32>
    %260 = vector.extract_strided_slice %259 {offsets = [0, 0], sizes = [32, 4], strides = [1, 1]} : vector<32x48xf32> to vector<32x4xf32>
    %261 = vector.shape_cast %260 : vector<32x4xf32> to vector<4x8x4xf32>
    %262 = vector.extract_strided_slice %259 {offsets = [0, 4], sizes = [32, 4], strides = [1, 1]} : vector<32x48xf32> to vector<32x4xf32>
    %263 = vector.shape_cast %262 : vector<32x4xf32> to vector<4x8x4xf32>
    %264 = vector.extract_strided_slice %259 {offsets = [0, 8], sizes = [32, 4], strides = [1, 1]} : vector<32x48xf32> to vector<32x4xf32>
    %265 = vector.shape_cast %264 : vector<32x4xf32> to vector<4x8x4xf32>
    %266 = vector.extract_strided_slice %259 {offsets = [0, 12], sizes = [32, 4], strides = [1, 1]} : vector<32x48xf32> to vector<32x4xf32>
    %267 = vector.shape_cast %266 : vector<32x4xf32> to vector<4x8x4xf32>
    %268 = vector.shape_cast %261 : vector<4x8x4xf32> to vector<4x1x8x4xf32>
    %269 = vector.shape_cast %263 : vector<4x8x4xf32> to vector<4x1x8x4xf32>
    %270 = vector.shape_cast %265 : vector<4x8x4xf32> to vector<4x1x8x4xf32>
    %271 = vector.shape_cast %267 : vector<4x8x4xf32> to vector<4x1x8x4xf32>
    %272 = tpu.concatenate %268, %269, %270, %271 in 1 : vector<4x1x8x4xf32>, vector<4x1x8x4xf32>, vector<4x1x8x4xf32>, vector<4x1x8x4xf32> -> vector<4x4x8x4xf32>
    %273 = vector.shape_cast %272 : vector<4x4x8x4xf32> to vector<16x8x4xf32>
    %274 = vector.extract_strided_slice %259 {offsets = [0, 16], sizes = [32, 4], strides = [1, 1]} : vector<32x48xf32> to vector<32x4xf32>
    %275 = vector.shape_cast %274 : vector<32x4xf32> to vector<4x8x4xf32>
    %276 = vector.extract_strided_slice %259 {offsets = [0, 20], sizes = [32, 4], strides = [1, 1]} : vector<32x48xf32> to vector<32x4xf32>
    %277 = vector.shape_cast %276 : vector<32x4xf32> to vector<4x8x4xf32>
    %278 = vector.extract_strided_slice %259 {offsets = [0, 24], sizes = [32, 4], strides = [1, 1]} : vector<32x48xf32> to vector<32x4xf32>
    %279 = vector.shape_cast %278 : vector<32x4xf32> to vector<4x8x4xf32>
    %280 = vector.extract_strided_slice %259 {offsets = [0, 28], sizes = [32, 4], strides = [1, 1]} : vector<32x48xf32> to vector<32x4xf32>
    %281 = vector.shape_cast %280 : vector<32x4xf32> to vector<4x8x4xf32>
    %282 = vector.shape_cast %275 : vector<4x8x4xf32> to vector<4x1x8x4xf32>
    %283 = vector.shape_cast %277 : vector<4x8x4xf32> to vector<4x1x8x4xf32>
    %284 = vector.shape_cast %279 : vector<4x8x4xf32> to vector<4x1x8x4xf32>
    %285 = vector.shape_cast %281 : vector<4x8x4xf32> to vector<4x1x8x4xf32>
    %286 = tpu.concatenate %282, %283, %284, %285 in 1 : vector<4x1x8x4xf32>, vector<4x1x8x4xf32>, vector<4x1x8x4xf32>, vector<4x1x8x4xf32> -> vector<4x4x8x4xf32>
    %287 = vector.shape_cast %286 : vector<4x4x8x4xf32> to vector<16x8x4xf32>
    %288 = vector.extract_strided_slice %259 {offsets = [0, 32], sizes = [32, 4], strides = [1, 1]} : vector<32x48xf32> to vector<32x4xf32>
    %289 = vector.shape_cast %288 : vector<32x4xf32> to vector<4x8x4xf32>
    %290 = vector.extract_strided_slice %259 {offsets = [0, 36], sizes = [32, 4], strides = [1, 1]} : vector<32x48xf32> to vector<32x4xf32>
    %291 = vector.shape_cast %290 : vector<32x4xf32> to vector<4x8x4xf32>
    %292 = vector.extract_strided_slice %259 {offsets = [0, 40], sizes = [32, 4], strides = [1, 1]} : vector<32x48xf32> to vector<32x4xf32>
    %293 = vector.shape_cast %292 : vector<32x4xf32> to vector<4x8x4xf32>
    %294 = vector.extract_strided_slice %259 {offsets = [0, 44], sizes = [32, 4], strides = [1, 1]} : vector<32x48xf32> to vector<32x4xf32>
    %295 = vector.shape_cast %294 : vector<32x4xf32> to vector<4x8x4xf32>
    %296 = vector.shape_cast %289 : vector<4x8x4xf32> to vector<4x1x8x4xf32>
    %297 = vector.shape_cast %291 : vector<4x8x4xf32> to vector<4x1x8x4xf32>
    %298 = vector.shape_cast %293 : vector<4x8x4xf32> to vector<4x1x8x4xf32>
    %299 = vector.shape_cast %295 : vector<4x8x4xf32> to vector<4x1x8x4xf32>
    %300 = tpu.concatenate %296, %297, %298, %299 in 1 : vector<4x1x8x4xf32>, vector<4x1x8x4xf32>, vector<4x1x8x4xf32>, vector<4x1x8x4xf32> -> vector<4x4x8x4xf32>
    %301 = vector.shape_cast %300 : vector<4x4x8x4xf32> to vector<16x8x4xf32>
    "tpu.trace_start"() <{level = 10 : i32, message = "zqd,zkd->zqk"}> : () -> ()
    %cst_51 = arith.constant dense<0.000000e+00> : vector<16x8x8xf32>
    %302 = tpu.matmul %273, %287, %cst_51 {dimension_numbers = #tpu.dot_dimension_numbers<[2], [2], [1], [1], [0, 0, 0, 1, 1, 1], [0], [0]>} : vector<16x8x4xf32>, vector<16x8x4xf32>, vector<16x8x8xf32> -> vector<16x8x8xf32>
    "tpu.trace_stop"() : () -> ()
    %cst_52 = arith.constant 5.000000e-01 : f32
    %303 = vector.broadcast %cst_52 : f32 to vector<16x8x8xf32>
    %304 = arith.mulf %302, %303 : vector<16x8x8xf32>
    %cst_53 = arith.constant dense<0xFF800000> : vector<16x8xf32>
    %305 = vector.multi_reduction <maximumf>, %304, %cst_53 [2] : vector<16x8x8xf32> to vector<16x8xf32>
    %306 = vector.shape_cast %305 : vector<16x8xf32> to vector<16x8x1xf32>
    %307 = vector.broadcast %306 : vector<16x8x1xf32> to vector<16x8x8xf32>
    %308 = arith.subf %304, %307 : vector<16x8x8xf32>
    %309 = math.exp %308 : vector<16x8x8xf32>
    %cst_54 = arith.constant dense<0.000000e+00> : vector<16x8xf32>
    %310 = vector.multi_reduction <add>, %309, %cst_54 [2] : vector<16x8x8xf32> to vector<16x8xf32>
    %311 = vector.shape_cast %310 : vector<16x8xf32> to vector<16x8x1xf32>
    %312 = tpu.reciprocal %311 {approx = true} : vector<16x8x1xf32> -> vector<16x8x1xf32>
    %313 = vector.broadcast %312 : vector<16x8x1xf32> to vector<16x8x8xf32>
    %314 = arith.mulf %309, %313 : vector<16x8x8xf32>
    "tpu.trace_start"() <{level = 10 : i32, message = "zqk,zkd->zqd"}> : () -> ()
    %cst_55 = arith.constant dense<0.000000e+00> : vector<16x8x4xf32>
    %315 = tpu.matmul %314, %301, %cst_55 {dimension_numbers = #tpu.dot_dimension_numbers<[2], [1], [1], [2], [0, 0, 0, 1, 1, 2], [0], [0]>} : vector<16x8x8xf32>, vector<16x8x4xf32>, vector<16x8x4xf32> -> vector<16x8x4xf32>
    "tpu.trace_stop"() : () -> ()
    %316 = vector.shape_cast %315 : vector<16x8x4xf32> to vector<4x4x8x4xf32>
    %317 = vector.extract_strided_slice %316 {offsets = [0, 0, 0, 0], sizes = [4, 1, 8, 4], strides = [1, 1, 1, 1]} : vector<4x4x8x4xf32> to vector<4x1x8x4xf32>
    %318 = vector.shape_cast %317 : vector<4x1x8x4xf32> to vector<4x8x4xf32>
    %319 = vector.extract_strided_slice %316 {offsets = [0, 1, 0, 0], sizes = [4, 1, 8, 4], strides = [1, 1, 1, 1]} : vector<4x4x8x4xf32> to vector<4x1x8x4xf32>
    %320 = vector.shape_cast %319 : vector<4x1x8x4xf32> to vector<4x8x4xf32>
    %321 = vector.extract_strided_slice %316 {offsets = [0, 2, 0, 0], sizes = [4, 1, 8, 4], strides = [1, 1, 1, 1]} : vector<4x4x8x4xf32> to vector<4x1x8x4xf32>
    %322 = vector.shape_cast %321 : vector<4x1x8x4xf32> to vector<4x8x4xf32>
    %323 = vector.extract_strided_slice %316 {offsets = [0, 3, 0, 0], sizes = [4, 1, 8, 4], strides = [1, 1, 1, 1]} : vector<4x4x8x4xf32> to vector<4x1x8x4xf32>
    %324 = vector.shape_cast %323 : vector<4x1x8x4xf32> to vector<4x8x4xf32>
    %325 = tpu.concatenate %318, %320, %322, %324 in 2 : vector<4x8x4xf32>, vector<4x8x4xf32>, vector<4x8x4xf32>, vector<4x8x4xf32> -> vector<4x8x16xf32>
    %326 = vector.shape_cast %325 : vector<4x8x16xf32> to vector<32x16xf32>
    %c0_56 = arith.constant 0 : index
    %c0_57 = arith.constant 0 : index
    %327 = vector.load %arg10[%c0_56, %c0_57] : memref<16x16xf32, #tpu.memory_space<vmem>>, vector<16x16xf32>
    %cst_58 = arith.constant dense<0.000000e+00> : vector<32x16xf32>
    %328 = tpu.matmul %326, %327, %cst_58 {dimension_numbers = #tpu.dot_dimension_numbers<[1], [0], [0], [1], [0, 0, 1, 1], [], []>} : vector<32x16xf32>, vector<16x16xf32>, vector<32x16xf32> -> vector<32x16xf32>
    %329 = arith.addf %328, %257 : vector<32x16xf32>
    %cst_59 = arith.constant dense<0.000000e+00> : vector<32xf32>
    %330 = vector.multi_reduction <add>, %329, %cst_59 [1] : vector<32x16xf32> to vector<32xf32>
    %331 = vector.shape_cast %330 : vector<32xf32> to vector<32x1xf32>
    %cst_60 = arith.constant 1.600000e+01 : f32
    %332 = vector.broadcast %cst_60 : f32 to vector<32x1xf32>
    %333 = arith.divf %331, %332 : vector<32x1xf32>
    %334 = vector.broadcast %333 : vector<32x1xf32> to vector<32x16xf32>
    %335 = arith.subf %329, %334 : vector<32x16xf32>
    %336 = arith.mulf %335, %335 : vector<32x16xf32>
    %cst_61 = arith.constant dense<0.000000e+00> : vector<32xf32>
    %337 = vector.multi_reduction <add>, %336, %cst_61 [1] : vector<32x16xf32> to vector<32xf32>
    %338 = vector.shape_cast %337 : vector<32xf32> to vector<32x1xf32>
    %cst_62 = arith.constant 1.600000e+01 : f32
    %339 = vector.broadcast %cst_62 : f32 to vector<32x1xf32>
    %340 = arith.divf %338, %339 : vector<32x1xf32>
    %341 = vector.broadcast %333 : vector<32x1xf32> to vector<32x16xf32>
    %342 = arith.subf %329, %341 : vector<32x16xf32>
    %cst_63 = arith.constant 9.99999974E-6 : f32
    %343 = vector.broadcast %cst_63 : f32 to vector<32x1xf32>
    %344 = arith.addf %340, %343 : vector<32x1xf32>
    %345 = math.rsqrt %344 : vector<32x1xf32>
    %346 = vector.broadcast %345 : vector<32x1xf32> to vector<32x16xf32>
    %347 = arith.mulf %342, %346 : vector<32x16xf32>
    %c0_64 = arith.constant 0 : index
    %c0_65 = arith.constant 0 : index
    %348 = vector.load %arg11[%c0_64, %c0_65] : memref<1x16xf32, #tpu.memory_space<vmem>>, vector<1x16xf32>
    %349 = vector.broadcast %348 : vector<1x16xf32> to vector<32x16xf32>
    %350 = arith.mulf %347, %349 : vector<32x16xf32>
    %c0_66 = arith.constant 0 : index
    %c0_67 = arith.constant 0 : index
    %351 = vector.load %arg12[%c0_66, %c0_67] : memref<1x16xf32, #tpu.memory_space<vmem>>, vector<1x16xf32>
    %352 = vector.broadcast %351 : vector<1x16xf32> to vector<32x16xf32>
    %353 = arith.addf %350, %352 : vector<32x16xf32>
    %354 = vector.shape_cast %353 : vector<32x16xf32> to vector<4x8x16xf32>
    %355 = vector.extract_strided_slice %354 {offsets = [0, 0, 0], sizes = [4, 1, 16], strides = [1, 1, 1]} : vector<4x8x16xf32> to vector<4x1x16xf32>
    %356 = vector.shape_cast %355 : vector<4x1x16xf32> to vector<4x16xf32>
    %357 = vector.extract_strided_slice %354 {offsets = [0, 1, 0], sizes = [4, 1, 16], strides = [1, 1, 1]} : vector<4x8x16xf32> to vector<4x1x16xf32>
    %358 = vector.shape_cast %357 : vector<4x1x16xf32> to vector<4x16xf32>
    %359 = vector.extract_strided_slice %354 {offsets = [0, 2, 0], sizes = [4, 1, 16], strides = [1, 1, 1]} : vector<4x8x16xf32> to vector<4x1x16xf32>
    %360 = vector.shape_cast %359 : vector<4x1x16xf32> to vector<4x16xf32>
    %361 = vector.extract_strided_slice %354 {offsets = [0, 3, 0], sizes = [4, 1, 16], strides = [1, 1, 1]} : vector<4x8x16xf32> to vector<4x1x16xf32>
    %362 = vector.shape_cast %361 : vector<4x1x16xf32> to vector<4x16xf32>
    %363 = vector.extract_strided_slice %354 {offsets = [0, 4, 0], sizes = [4, 1, 16], strides = [1, 1, 1]} : vector<4x8x16xf32> to vector<4x1x16xf32>
    %364 = vector.shape_cast %363 : vector<4x1x16xf32> to vector<4x16xf32>
    %365 = vector.extract_strided_slice %354 {offsets = [0, 5, 0], sizes = [4, 1, 16], strides = [1, 1, 1]} : vector<4x8x16xf32> to vector<4x1x16xf32>
    %366 = vector.shape_cast %365 : vector<4x1x16xf32> to vector<4x16xf32>
    %367 = vector.extract_strided_slice %354 {offsets = [0, 6, 0], sizes = [4, 1, 16], strides = [1, 1, 1]} : vector<4x8x16xf32> to vector<4x1x16xf32>
    %368 = vector.shape_cast %367 : vector<4x1x16xf32> to vector<4x16xf32>
    %369 = vector.extract_strided_slice %354 {offsets = [0, 7, 0], sizes = [4, 1, 16], strides = [1, 1, 1]} : vector<4x8x16xf32> to vector<4x1x16xf32>
    %370 = vector.shape_cast %369 : vector<4x1x16xf32> to vector<4x16xf32>
    %371 = tpu.concatenate %356, %358, %360, %362, %364, %366, %368, %370 in 1 : vector<4x16xf32>, vector<4x16xf32>, vector<4x16xf32>, vector<4x16xf32>, vector<4x16xf32>, vector<4x16xf32>, vector<4x16xf32>, vector<4x16xf32> -> vector<4x128xf32>
    %c0_68 = arith.constant 0 : index
    %c0_69 = arith.constant 0 : index
    %372 = vector.load %arg13[%c0_68, %c0_69] : memref<4x128xf32, #tpu.memory_space<vmem>>, vector<4x128xf32>
    tpu.vector_store %arg13[%c0_68, %c0_69], %371 {strides = array<i32>} : memref<4x128xf32, #tpu.memory_space<vmem>>, vector<4x128xf32>,
    return
  }
}

</mosaic_0001>

<llo_original>
// kernel: tpu_custom_call.1
$region0: #{tpu_custom_call.1}
  #allocation0 [shape = 'u32[]', space=smem, size = 0x4, offset = 0x4, fixed_abs, tag = 'smem constant byte address 0x4 - core index']
  #allocation1 [shape = 'u32[72,128]{1,0:T(1,128)}', space=vmem, size = 0x9000, scoped, tag = 'internal scratch']
  %s0 = inlined_call_operand.vmem [shape: f32[4,64], index: 0, kind: input, shape index: {}]
  %s1 = inlined_call_operand.vmem [shape: f32[8,8,32], index: 1, kind: input, shape index: {}]
  %s2 = inlined_call_operand.vmem [shape: f32[8,1,32], index: 2, kind: input, shape index: {}]
  %s3 = inlined_call_operand.vmem [shape: f32[32,96], index: 3, kind: input, shape index: {}]
  %s4 = inlined_call_operand.vmem [shape: f32[32,32], index: 4, kind: input, shape index: {}]
  %s5 = inlined_call_operand.vmem [shape: f32[1,32], index: 5, kind: input, shape index: {}]
  %s6 = inlined_call_operand.vmem [shape: f32[1,32], index: 6, kind: input, shape index: {}]
  %s7 = inlined_call_operand.vmem [shape: f32[8,32,16], index: 7, kind: input, shape index: {}]
  %s8 = inlined_call_operand.vmem [shape: f32[8,1,16], index: 8, kind: input, shape index: {}]
  %s9 = inlined_call_operand.vmem [shape: f32[16,48], index: 9, kind: input, shape index: {}]
  %s10 = inlined_call_operand.vmem [shape: f32[16,16], index: 10, kind: input, shape index: {}]
  %s11 = inlined_call_operand.vmem [shape: f32[1,16], index: 11, kind: input, shape index: {}]
  %s12 = inlined_call_operand.vmem [shape: f32[1,16], index: 12, kind: input, shape index: {}]
  %s13 = inlined_call_operand.hbm [shape: f32[4,128], index: 13, kind: output, shape index: {}]
  %s14 = sld [smem:[#allocation0]]
  $region62: #{tpu_custom_call.1} parent=0
    _
  %s16 = ssub.s32 1, %s14
  %s17 = scalar_select 0, %s16, %s14
  $region1: #{tpu_custom_call.1} parent=0
    #allocation2 [shape = 'u8[2048]{0}', space=vmem, size = 0x800, scoped, tag = 'output window, operand 0, single buffered']
    #allocation3 [shape = 's32[1]{0}', space=sflag, size = 0x4, scoped, tag = 'scoped memory for tpu_custom_call.1']
    %18 = vsyncpa [#allocation3], 0
    // Predicated region
    $region2: #{tpu_custom_call.1} parent=1 // pred_check
      _
    $region3: #{tpu_custom_call.1} parent=1 // pred_check_branch
      %20 = sbr.rel (0) target = $region5
    $region4: #{tpu_custom_call.1} parent=1 // pred_region
      _
    $region5: #{tpu_custom_call.1} parent=1 // pred_fallthru
      _
    // Predicated region
    $region6: #{tpu_custom_call.1} parent=1 // pred_check
      _
    $region7: #{tpu_custom_call.1} parent=1 // pred_check_branch
      %22 = sbr.rel (0) target = $region9
    $region8: #{tpu_custom_call.1} parent=1 // pred_region
      _
    $region9: #{tpu_custom_call.1} parent=1 // pred_fallthru
      _
    // Predicated region
    $region10: #{tpu_custom_call.1} parent=1 // pred_check
      _
    $region11: #{tpu_custom_call.1} parent=1 // pred_check_branch
      %24 = sbr.rel (0) target = $region13
    $region12: #{tpu_custom_call.1} parent=1 // pred_region
      _
    $region13: #{tpu_custom_call.1} parent=1 // pred_fallthru
      _
    // Predicated region
    $region14: #{tpu_custom_call.1} parent=1 // pred_check
      _
    $region15: #{tpu_custom_call.1} parent=1 // pred_check_branch
      %26 = sbr.rel (0) target = $region17
    $region16: #{tpu_custom_call.1} parent=1 // pred_region
      _
    $region17: #{tpu_custom_call.1} parent=1 // pred_fallthru
      _
    // Predicated region
    $region18: #{tpu_custom_call.1} parent=1 // pred_check
      _
    $region19: #{tpu_custom_call.1} parent=1 // pred_check_branch
      %28 = sbr.rel (0) target = $region21
    $region20: #{tpu_custom_call.1} parent=1 // pred_region
      _
    $region21: #{tpu_custom_call.1} parent=1 // pred_fallthru
      _
    // Predicated region
    $region22: #{tpu_custom_call.1} parent=1 // pred_check
      _
    $region23: #{tpu_custom_call.1} parent=1 // pred_check_branch
      %30 = sbr.rel (0) target = $region25
    $region24: #{tpu_custom_call.1} parent=1 // pred_region
      _
    $region25: #{tpu_custom_call.1} parent=1 // pred_fallthru
      _
    // Predicated region
    $region26: #{tpu_custom_call.1} parent=1 // pred_check
      _
    $region27: #{tpu_custom_call.1} parent=1 // pred_check_branch
      %32 = sbr.rel (0) target = $region29
    $region28: #{tpu_custom_call.1} parent=1 // pred_region
      _
    $region29: #{tpu_custom_call.1} parent=1 // pred_fallthru
      _
    // Predicated region
    $region30: #{tpu_custom_call.1} parent=1 // pred_check
      _
    $region31: #{tpu_custom_call.1} parent=1 // pred_check_branch
      %34 = sbr.rel (0) target = $region33
    $region32: #{tpu_custom_call.1} parent=1 // pred_region
      _
    $region33: #{tpu_custom_call.1} parent=1 // pred_fallthru
      _
    // Predicated region
    $region34: #{tpu_custom_call.1} parent=1 // pred_check
      _
    $region35: #{tpu_custom_call.1} parent=1 // pred_check_branch
      %36 = sbr.rel (0) target = $region37
    $region36: #{tpu_custom_call.1} parent=1 // pred_region
      _
    $region37: #{tpu_custom_call.1} parent=1 // pred_fallthru
      _
    // Predicated region
    $region38: #{tpu_custom_call.1} parent=1 // pred_check
      _
    $region39: #{tpu_custom_call.1} parent=1 // pred_check_branch
      %38 = sbr.rel (0) target = $region41
    $region40: #{tpu_custom_call.1} parent=1 // pred_region
      _
    $region41: #{tpu_custom_call.1} parent=1 // pred_fallthru
      _
    // Predicated region
    $region42: #{tpu_custom_call.1} parent=1 // pred_check
      _
    $region43: #{tpu_custom_call.1} parent=1 // pred_check_branch
      %40 = sbr.rel (0) target = $region45
    $region44: #{tpu_custom_call.1} parent=1 // pred_region
      _
    $region45: #{tpu_custom_call.1} parent=1 // pred_fallthru
      _
    // Predicated region
    $region46: #{tpu_custom_call.1} parent=1 // pred_check
      _
    $region47: #{tpu_custom_call.1} parent=1 // pred_check_branch
      %42 = sbr.rel (0) target = $region49
    $region48: #{tpu_custom_call.1} parent=1 // pred_region
      _
    $region49: #{tpu_custom_call.1} parent=1 // pred_fallthru
      _
    // Predicated region
    $region50: #{tpu_custom_call.1} parent=1 // pred_check
      _
    $region51: #{tpu_custom_call.1} parent=1 // pred_check_branch
      %44 = sbr.rel (0) target = $region53
    $region52: #{tpu_custom_call.1} parent=1 // pred_region
      _
    $region53: #{tpu_custom_call.1} parent=1 // pred_fallthru
      _
    %v45 = vld [vmem:[%s0] sm:$0xf]
    %v46 = vld [vmem:[%s1] sm:$0xff]
    %v47 = vld [vmem:[%s1 + $0x8] sm:$0xff]
    %v48 = vld [vmem:[%s1 + $0x10] sm:$0xff]
    %v49 = vld [vmem:[%s1 + $0x18] sm:$0xff]
    %v50 = vld [vmem:[%s1 + $0x20] sm:$0xff]
    %v51 = vld [vmem:[%s1 + $0x28] sm:$0xff]
    %v52 = vld [vmem:[%s1 + $0x30] sm:$0xff]
    %v53 = vld [vmem:[%s1 + $0x38] sm:$0xff]
    %v54 = vld [vmem:[%s2] sm:$0x1]
    %v55 = vld [vmem:[%s2 + $0x1] sm:$0x1]
    %v56 = vld [vmem:[%s2 + $0x2] sm:$0x1]
    %v57 = vld [vmem:[%s2 + $0x3] sm:$0x1]
    %v58 = vld [vmem:[%s2 + $0x4] sm:$0x1]
    %v59 = vld [vmem:[%s2 + $0x5] sm:$0x1]
    %v60 = vld [vmem:[%s2 + $0x6] sm:$0x1]
    %v61 = vld [vmem:[%s2 + $0x7] sm:$0x1]
    %v63 = vperm.slane %v54, 0
    %vm65 = vcmask 64512
    %v67 = vsel %vm65, %v45, 0
    %69 = vmatpush.msra.mxu0 0.0
    %70 = vmatpush.msra.mxu0 0.0
    %71 = vmatpush.msra.mxu0 0.0
    %72 = vmatpush.msra.mxu0 0.0
    %73 = vmatpush.msra.mxu0 0.0
    %74 = vmatpush.msra.mxu0 0.0
    %75 = vmatpush.msra.mxu0 0.0
    %76 = vmatpush.msra.mxu0 0.0
    %77 = vmatpush.msra.mxu0 0.0
    %78 = vmatpush.msra.mxu0 0.0
    %79 = vmatpush.msra.mxu0 0.0
    %80 = vmatpush.msra.mxu0 0.0
    %81 = vmatpush.msra.mxu0 0.0
    %82 = vmatpush.msra.mxu0 0.0
    %83 = vmatpush.msra.mxu0 0.0
    %84 = vmatpush.msra.mxu0 %v46
    %85 = vmatmul.f32.gmra.mxu0 %v67
    %v86 = vpop.f32.mrf.mxu0
    %v87 = vadd.f32 %v63, %v86
    %88 = vdwg.mxu0
    %v90 = vperm.slane %v55, 0
    %92 = vrot.lane.b32.xlu0 %v45, 120
    %v93 = vpop.permute.xlu0 %92
    %v94 = vsel %vm65, %v93, 0
    %96 = vmatpush.msra.mxu0 0.0
    %97 = vmatpush.msra.mxu0 0.0
    %98 = vmatpush.msra.mxu0 0.0
    %99 = vmatpush.msra.mxu0 0.0
    %100 = vmatpush.msra.mxu0 0.0
    %101 = vmatpush.msra.mxu0 0.0
    %102 = vmatpush.msra.mxu0 0.0
    %103 = vmatpush.msra.mxu0 0.0
    %104 = vmatpush.msra.mxu0 0.0
    %105 = vmatpush.msra.mxu0 0.0
    %106 = vmatpush.msra.mxu0 0.0
    %107 = vmatpush.msra.mxu0 0.0
    %108 = vmatpush.msra.mxu0 0.0
    %109 = vmatpush.msra.mxu0 0.0
    %110 = vmatpush.msra.mxu0 0.0
    %111 = vmatpush.msra.mxu0 %v47
    %112 = vmatmul.f32.gmra.mxu0 %v94
    %v113 = vpop.f32.mrf.mxu0
    %v114 = vadd.f32 %v90, %v113
    %115 = vdwg.mxu0
    %v117 = vperm.slane %v56, 0
    %119 = vrot.lane.b32.xlu0 %v45, 112
    %v120 = vpop.permute.xlu0 %119
    %v121 = vsel %vm65, %v120, 0
    %123 = vmatpush.msra.mxu0 0.0
    %124 = vmatpush.msra.mxu0 0.0
    %125 = vmatpush.msra.mxu0 0.0
    %126 = vmatpush.msra.mxu0 0.0
    %127 = vmatpush.msra.mxu0 0.0
    %128 = vmatpush.msra.mxu0 0.0
    %129 = vmatpush.msra.mxu0 0.0
    %130 = vmatpush.msra.mxu0 0.0
    %131 = vmatpush.msra.mxu0 0.0
    %132 = vmatpush.msra.mxu0 0.0
    %133 = vmatpush.msra.mxu0 0.0
    %134 = vmatpush.msra.mxu0 0.0
    %135 = vmatpush.msra.mxu0 0.0
    %136 = vmatpush.msra.mxu0 0.0
    %137 = vmatpush.msra.mxu0 0.0
    %138 = vmatpush.msra.mxu0 %v48
    %139 = vmatmul.f32.gmra.mxu0 %v121
    %v140 = vpop.f32.mrf.mxu0
    %v141 = vadd.f32 %v117, %v140
    %142 = vdwg.mxu0
    %v144 = vperm.slane %v57, 0
    %146 = vrot.lane.b32.xlu0 %v45, 104
    %v147 = vpop.permute.xlu0 %146
    %v148 = vsel %vm65, %v147, 0
    %150 = vmatpush.msra.mxu0 0.0
    %151 = vmatpush.msra.mxu0 0.0
    %152 = vmatpush.msra.mxu0 0.0
    %153 = vmatpush.msra.mxu0 0.0
    %154 = vmatpush.msra.mxu0 0.0
    %155 = vmatpush.msra.mxu0 0.0
    %156 = vmatpush.msra.mxu0 0.0
    %157 = vmatpush.msra.mxu0 0.0
    %158 = vmatpush.msra.mxu0 0.0
    %159 = vmatpush.msra.mxu0 0.0
    %160 = vmatpush.msra.mxu0 0.0
    %161 = vmatpush.msra.mxu0 0.0
    %162 = vmatpush.msra.mxu0 0.0
    %163 = vmatpush.msra.mxu0 0.0
    %164 = vmatpush.msra.mxu0 0.0
    %165 = vmatpush.msra.mxu0 %v49
    %166 = vmatmul.f32.gmra.mxu0 %v148
    %v167 = vpop.f32.mrf.mxu0
    %v168 = vadd.f32 %v144, %v167
    %169 = vdwg.mxu0
    %v171 = vperm.slane %v58, 0
    %173 = vrot.lane.b32.xlu0 %v45, 96
    %v174 = vpop.permute.xlu0 %173
    %v175 = vsel %vm65, %v174, 0
    %177 = vmatpush.msra.mxu0 0.0
    %178 = vmatpush.msra.mxu0 0.0
    %179 = vmatpush.msra.mxu0 0.0
    %180 = vmatpush.msra.mxu0 0.0
    %181 = vmatpush.msra.mxu0 0.0
    %182 = vmatpush.msra.mxu0 0.0
    %183 = vmatpush.msra.mxu0 0.0
    %184 = vmatpush.msra.mxu0 0.0
    %185 = vmatpush.msra.mxu0 0.0
    %186 = vmatpush.msra.mxu0 0.0
    %187 = vmatpush.msra.mxu0 0.0
    %188 = vmatpush.msra.mxu0 0.0
    %189 = vmatpush.msra.mxu0 0.0
    %190 = vmatpush.msra.mxu0 0.0
    %191 = vmatpush.msra.mxu0 0.0
    %192 = vmatpush.msra.mxu0 %v50
    %193 = vmatmul.f32.gmra.mxu0 %v175
    %v194 = vpop.f32.mrf.mxu0
    %v195 = vadd.f32 %v171, %v194
    %196 = vdwg.mxu0
    %v198 = vperm.slane %v59, 0
    %200 = vrot.lane.b32.xlu0 %v45, 88
    %v201 = vpop.permute.xlu0 %200
    %v202 = vsel %vm65, %v201, 0
    %204 = vmatpush.msra.mxu0 0.0
    %205 = vmatpush.msra.mxu0 0.0
    %206 = vmatpush.msra.mxu0 0.0
    %207 = vmatpush.msra.mxu0 0.0
    %208 = vmatpush.msra.mxu0 0.0
    %209 = vmatpush.msra.mxu0 0.0
    %210 = vmatpush.msra.mxu0 0.0
    %211 = vmatpush.msra.mxu0 0.0
    %212 = vmatpush.msra.mxu0 0.0
    %213 = vmatpush.msra.mxu0 0.0
    %214 = vmatpush.msra.mxu0 0.0
    %215 = vmatpush.msra.mxu0 0.0
    %216 = vmatpush.msra.mxu0 0.0
    %217 = vmatpush.msra.mxu0 0.0
    %218 = vmatpush.msra.mxu0 0.0
    %219 = vmatpush.msra.mxu0 %v51
    %220 = vmatmul.f32.gmra.mxu0 %v202
    %v221 = vpop.f32.mrf.mxu0
    %v222 = vadd.f32 %v198, %v221
    %223 = vdwg.mxu0
    %v225 = vperm.slane %v60, 0
    %227 = vrot.lane.b32.xlu0 %v45, 80
    %v228 = vpop.permute.xlu0 %227
    %v229 = vsel %vm65, %v228, 0
    %231 = vmatpush.msra.mxu0 0.0
    %232 = vmatpush.msra.mxu0 0.0
    %233 = vmatpush.msra.mxu0 0.0
    %234 = vmatpush.msra.mxu0 0.0
    %235 = vmatpush.msra.mxu0 0.0
    %236 = vmatpush.msra.mxu0 0.0
    %237 = vmatpush.msra.mxu0 0.0
    %238 = vmatpush.msra.mxu0 0.0
    %239 = vmatpush.msra.mxu0 0.0
    %240 = vmatpush.msra.mxu0 0.0
    %241 = vmatpush.msra.mxu0 0.0
    %242 = vmatpush.msra.mxu0 0.0
    %243 = vmatpush.msra.mxu0 0.0
    %244 = vmatpush.msra.mxu0 0.0
    %245 = vmatpush.msra.mxu0 0.0
    %246 = vmatpush.msra.mxu0 %v52
    %247 = vmatmul.f32.gmra.mxu0 %v229
    %v248 = vpop.f32.mrf.mxu0
    %v249 = vadd.f32 %v225, %v248
    %250 = vdwg.mxu0
    %v252 = vperm.slane %v61, 0
    %254 = vrot.lane.b32.xlu0 %v45, 72
    %v255 = vpop.permute.xlu0 %254
    %v256 = vsel %vm65, %v255, 0
    %258 = vmatpush.msra.mxu0 0.0
    %259 = vmatpush.msra.mxu0 0.0
    %260 = vmatpush.msra.mxu0 0.0
    %261 = vmatpush.msra.mxu0 0.0
    %262 = vmatpush.msra.mxu0 0.0
    %263 = vmatpush.msra.mxu0 0.0
    %264 = vmatpush.msra.mxu0 0.0
    %265 = vmatpush.msra.mxu0 0.0
    %266 = vmatpush.msra.mxu0 0.0
    %267 = vmatpush.msra.mxu0 0.0
    %268 = vmatpush.msra.mxu0 0.0
    %269 = vmatpush.msra.mxu0 0.0
    %270 = vmatpush.msra.mxu0 0.0
    %271 = vmatpush.msra.mxu0 0.0
    %272 = vmatpush.msra.mxu0 0.0
    %273 = vmatpush.msra.mxu0 %v53
    %274 = vmatmul.f32.gmra.mxu0 %v256
    %v275 = vpop.f32.mrf.mxu0
    %v276 = vadd.f32 %v252, %v275
    %277 = vdwg.mxu0
    %v279 = vrot.slane %v87, 1
    %v280 = vrot.slane %v87, 2
    %v281 = vrot.slane %v87, 3
    %v286 = vrot.slane %v114, 1
    %v287 = vrot.slane %v114, 2
    %v288 = vrot.slane %v114, 3
    %v290 = vrot.slane %v141, 1
    %v291 = vrot.slane %v141, 2
    %v292 = vrot.slane %v141, 3
    %v294 = vrot.slane %v168, 1
    %v295 = vrot.slane %v168, 2
    %v296 = vrot.slane %v168, 3
    %v298 = vrot.slane %v195, 1
    %v299 = vrot.slane %v195, 2
    %v300 = vrot.slane %v195, 3
    %v302 = vrot.slane %v222, 1
    %v303 = vrot.slane %v222, 2
    %v304 = vrot.slane %v222, 3
    %v306 = vrot.slane %v249, 1
    %v307 = vrot.slane %v249, 2
    %v308 = vrot.slane %v249, 3
    %v310 = vrot.slane %v276, 1
    %v311 = vrot.slane %v276, 2
    %v312 = vrot.slane %v276, 3
    %v313 = vperm.slane %v114, 0
    %v314 = vperm.slane %v286, 0
    %v315 = vperm.slane %v287, 0
    %v316 = vperm.slane %v288, 0
    %v321 = vperm.slane %v141, 0
    %v322 = vperm.slane %v290, 0
    %v323 = vperm.slane %v291, 0
    %v324 = vperm.slane %v292, 0
    %v329 = vperm.slane %v168, 0
    %v330 = vperm.slane %v294, 0
    %v331 = vperm.slane %v295, 0
    %v332 = vperm.slane %v296, 0
    %v337 = vperm.slane %v195, 0
    %v338 = vperm.slane %v298, 0
    %v339 = vperm.slane %v299, 0
    %v340 = vperm.slane %v300, 0
    %v345 = vperm.slane %v222, 0
    %v346 = vperm.slane %v302, 0
    %v347 = vperm.slane %v303, 0
    %v348 = vperm.slane %v304, 0
    %v353 = vperm.slane %v249, 0
    %v354 = vperm.slane %v306, 0
    %v355 = vperm.slane %v307, 0
    %v356 = vperm.slane %v308, 0
    %v361 = vperm.slane %v276, 0
    %v362 = vperm.slane %v310, 0
    %v363 = vperm.slane %v311, 0
    %v364 = vperm.slane %v312, 0
    %vm369 = vcmask 1040384
    %v370 = vsel %vm369, %v87, %v313
    %v371 = vsel %vm369, %v279, %v314
    %v372 = vsel %vm369, %v280, %v315
    %v373 = vsel %vm369, %v281, %v316
    %vm374 = vcmask 1041408
    %v375 = vsel %vm374, %v370, %v321
    %v376 = vsel %vm374, %v371, %v322
    %v377 = vsel %vm374, %v372, %v323
    %v378 = vsel %vm374, %v373, %v324
    %vm379 = vcmask 1042432
    %v380 = vsel %vm379, %v375, %v329
    %v381 = vsel %vm379, %v376, %v330
    %v382 = vsel %vm379, %v377, %v331
    %v383 = vsel %vm379, %v378, %v332
    %vm384 = vcmask 1043456
    %v385 = vsel %vm384, %v380, %v337
    %v386 = vsel %vm384, %v381, %v338
    %v387 = vsel %vm384, %v382, %v339
    %v388 = vsel %vm384, %v383, %v340
    %vm389 = vcmask 1044480
    %v390 = vsel %vm389, %v385, %v345
    %v391 = vsel %vm389, %v386, %v346
    %v392 = vsel %vm389, %v387, %v347
    %v393 = vsel %vm389, %v388, %v348
    %vm394 = vcmask 1045504
    %v395 = vsel %vm394, %v390, %v353
    %v396 = vsel %vm394, %v391, %v354
    %v397 = vsel %vm394, %v392, %v355
    %v398 = vsel %vm394, %v393, %v356
    %vm399 = vcmask 1046528
    %v400 = vsel %vm399, %v395, %v361
    %v401 = vsel %vm399, %v396, %v362
    %v402 = vsel %vm399, %v397, %v363
    %v403 = vsel %vm399, %v398, %v364
    %v404 = vld [vmem:[%s3] sm:$0xff]
    %v405 = vld [vmem:[%s3 + $0x8] sm:$0xff]
    %v406 = vld [vmem:[%s3 + $0x10] sm:$0xff]
    %v407 = vld [vmem:[%s3 + $0x18] sm:$0xff]
    %vm408 = vcmask 261120
    %v410 = vsel %vm408, %v400, 0
    %v413 = vsel %vm408, %v401, 0
    %v416 = vsel %vm408, %v402, 0
    %v419 = vsel %vm408, %v403, 0
    %421 = vmatpush.msra.mxu0 0.0
    %422 = vmatpush.msra.mxu0 0.0
    %423 = vmatpush.msra.mxu0 0.0
    %424 = vmatpush.msra.mxu0 0.0
    %425 = vmatpush.msra.mxu0 0.0
    %426 = vmatpush.msra.mxu0 0.0
    %427 = vmatpush.msra.mxu0 0.0
    %428 = vmatpush.msra.mxu0 0.0
    %429 = vmatpush.msra.mxu0 0.0
    %430 = vmatpush.msra.mxu0 0.0
    %431 = vmatpush.msra.mxu0 0.0
    %432 = vmatpush.msra.mxu0 0.0
    %433 = vmatpush.msra.mxu0 %v407
    %434 = vmatpush.msra.mxu0 %v406
    %435 = vmatpush.msra.mxu0 %v405
    %436 = vmatpush.msra.mxu0 %v404
    %437 = vmatmul.f32.gmra.mxu0 %v410
    %v438 = vpop.f32.mrf.mxu0
    %v439 = vadd.f32 0.0, %v438
    %440 = vmatmul.f32.gmra.mxu0 %v413
    %v441 = vpop.f32.mrf.mxu0
    %v442 = vadd.f32 0.0, %v441
    %443 = vmatmul.f32.gmra.mxu0 %v416
    %v444 = vpop.f32.mrf.mxu0
    %v445 = vadd.f32 0.0, %v444
    %446 = vmatmul.f32.gmra.mxu0 %v419
    %v447 = vpop.f32.mrf.mxu0
    %v448 = vadd.f32 0.0, %v447
    %449 = vdwg.mxu0
    %454 = vrot.lane.b32.xlu0 %v439, 120
    %v455 = vpop.permute.xlu0 %454
    %456 = vrot.lane.b32.xlu0 %v442, 120
    %v457 = vpop.permute.xlu0 %456
    %458 = vrot.lane.b32.xlu0 %v445, 120
    %v459 = vpop.permute.xlu0 %458
    %460 = vrot.lane.b32.xlu0 %v448, 120
    %v461 = vpop.permute.xlu0 %460
    %462 = vrot.lane.b32.xlu0 %v439, 112
    %v463 = vpop.permute.xlu0 %462
    %464 = vrot.lane.b32.xlu0 %v442, 112
    %v465 = vpop.permute.xlu0 %464
    %466 = vrot.lane.b32.xlu0 %v445, 112
    %v467 = vpop.permute.xlu0 %466
    %468 = vrot.lane.b32.xlu0 %v448, 112
    %v469 = vpop.permute.xlu0 %468
    %470 = vrot.lane.b32.xlu0 %v439, 104
    %v471 = vpop.permute.xlu0 %470
    %472 = vrot.lane.b32.xlu0 %v442, 104
    %v473 = vpop.permute.xlu0 %472
    %474 = vrot.lane.b32.xlu0 %v445, 104
    %v475 = vpop.permute.xlu0 %474
    %476 = vrot.lane.b32.xlu0 %v448, 104
    %v477 = vpop.permute.xlu0 %476
    %478 = vrot.lane.b32.xlu0 %v439, 96
    %v479 = vpop.permute.xlu0 %478
    %v480 = vsel %vm65, %v439, 0
    %v482 = vsel %vm65, %v479, 0
    %484 = vmatpush.xpose.msra.mxu0 0.0
    %485 = vmatpush.xpose.msra.mxu0 0.0
    %486 = vmatpush.xpose.msra.mxu0 0.0
    %487 = vmatpush.xpose.msra.mxu0 0.0
    %488 = vmatpush.xpose.msra.mxu0 0.0
    %489 = vmatpush.xpose.msra.mxu0 0.0
    %490 = vmatpush.xpose.msra.mxu0 0.0
    %491 = vmatpush.xpose.msra.mxu0 0.0
    %492 = vmatpush.xpose.msra.mxu0 0.0
    %493 = vmatpush.xpose.msra.mxu0 0.0
    %494 = vmatpush.xpose.msra.mxu0 0.0
    %495 = vmatpush.xpose.msra.mxu0 0.0
    %496 = vmatpush.xpose.msra.mxu0 0.0
    %497 = vmatpush.xpose.msra.mxu0 0.0
    %498 = vmatpush.xpose.msra.mxu0 0.0
    %499 = vmatpush.xpose.msra.mxu0 %v482
    %500 = vmatmul.f32.gmra.mxu0 %v480
    %v501 = vpop.f32.mrf.mxu0
    %v502 = vadd.f32 0.0, %v501
    %503 = vdwg.mxu0
    %504 = vrot.lane.b32.xlu0 %v455, 96
    %v505 = vpop.permute.xlu0 %504
    %v506 = vsel %vm65, %v455, 0
    %v508 = vsel %vm65, %v505, 0
    %510 = vmatpush.xpose.msra.mxu0 0.0
    %511 = vmatpush.xpose.msra.mxu0 0.0
    %512 = vmatpush.xpose.msra.mxu0 0.0
    %513 = vmatpush.xpose.msra.mxu0 0.0
    %514 = vmatpush.xpose.msra.mxu0 0.0
    %515 = vmatpush.xpose.msra.mxu0 0.0
    %516 = vmatpush.xpose.msra.mxu0 0.0
    %517 = vmatpush.xpose.msra.mxu0 0.0
    %518 = vmatpush.xpose.msra.mxu0 0.0
    %519 = vmatpush.xpose.msra.mxu0 0.0
    %520 = vmatpush.xpose.msra.mxu0 0.0
    %521 = vmatpush.xpose.msra.mxu0 0.0
    %522 = vmatpush.xpose.msra.mxu0 0.0
    %523 = vmatpush.xpose.msra.mxu0 0.0
    %524 = vmatpush.xpose.msra.mxu0 0.0
    %525 = vmatpush.xpose.msra.mxu0 %v508
    %526 = vmatmul.f32.gmra.mxu0 %v506
    %v527 = vpop.f32.mrf.mxu0
    %v528 = vadd.f32 0.0, %v527
    %529 = vdwg.mxu0
    %530 = vrot.lane.b32.xlu0 %v463, 96
    %v531 = vpop.permute.xlu0 %530
    %v532 = vsel %vm65, %v463, 0
    %v534 = vsel %vm65, %v531, 0
    %536 = vmatpush.xpose.msra.mxu0 0.0
    %537 = vmatpush.xpose.msra.mxu0 0.0
    %538 = vmatpush.xpose.msra.mxu0 0.0
    %539 = vmatpush.xpose.msra.mxu0 0.0
    %540 = vmatpush.xpose.msra.mxu0 0.0
    %541 = vmatpush.xpose.msra.mxu0 0.0
    %542 = vmatpush.xpose.msra.mxu0 0.0
    %543 = vmatpush.xpose.msra.mxu0 0.0
    %544 = vmatpush.xpose.msra.mxu0 0.0
    %545 = vmatpush.xpose.msra.mxu0 0.0
    %546 = vmatpush.xpose.msra.mxu0 0.0
    %547 = vmatpush.xpose.msra.mxu0 0.0
    %548 = vmatpush.xpose.msra.mxu0 0.0
    %549 = vmatpush.xpose.msra.mxu0 0.0
    %550 = vmatpush.xpose.msra.mxu0 0.0
    %551 = vmatpush.xpose.msra.mxu0 %v534
    %552 = vmatmul.f32.gmra.mxu0 %v532
    %v553 = vpop.f32.mrf.mxu0
    %v554 = vadd.f32 0.0, %v553
    %555 = vdwg.mxu0
    %556 = vrot.lane.b32.xlu0 %v471, 96
    %v557 = vpop.permute.xlu0 %556
    %v558 = vsel %vm65, %v471, 0
    %v560 = vsel %vm65, %v557, 0
    %562 = vmatpush.xpose.msra.mxu0 0.0
    %563 = vmatpush.xpose.msra.mxu0 0.0
    %564 = vmatpush.xpose.msra.mxu0 0.0
    %565 = vmatpush.xpose.msra.mxu0 0.0
    %566 = vmatpush.xpose.msra.mxu0 0.0
    %567 = vmatpush.xpose.msra.mxu0 0.0
    %568 = vmatpush.xpose.msra.mxu0 0.0
    %569 = vmatpush.xpose.msra.mxu0 0.0
    %570 = vmatpush.xpose.msra.mxu0 0.0
    %571 = vmatpush.xpose.msra.mxu0 0.0
    %572 = vmatpush.xpose.msra.mxu0 0.0
    %573 = vmatpush.xpose.msra.mxu0 0.0
    %574 = vmatpush.xpose.msra.mxu0 0.0
    %575 = vmatpush.xpose.msra.mxu0 0.0
    %576 = vmatpush.xpose.msra.mxu0 0.0
    %577 = vmatpush.xpose.msra.mxu0 %v560
    %578 = vmatmul.f32.gmra.mxu0 %v558
    %v579 = vpop.f32.mrf.mxu0
    %v580 = vadd.f32 0.0, %v579
    %581 = vdwg.mxu0
    %582 = vrot.lane.b32.xlu0 %v442, 96
    %v583 = vpop.permute.xlu0 %582
    %v584 = vsel %vm65, %v442, 0
    %v586 = vsel %vm65, %v583, 0
    %588 = vmatpush.xpose.msra.mxu0 0.0
    %589 = vmatpush.xpose.msra.mxu0 0.0
    %590 = vmatpush.xpose.msra.mxu0 0.0
    %591 = vmatpush.xpose.msra.mxu0 0.0
    %592 = vmatpush.xpose.msra.mxu0 0.0
    %593 = vmatpush.xpose.msra.mxu0 0.0
    %594 = vmatpush.xpose.msra.mxu0 0.0
    %595 = vmatpush.xpose.msra.mxu0 0.0
    %596 = vmatpush.xpose.msra.mxu0 0.0
    %597 = vmatpush.xpose.msra.mxu0 0.0
    %598 = vmatpush.xpose.msra.mxu0 0.0
    %599 = vmatpush.xpose.msra.mxu0 0.0
    %600 = vmatpush.xpose.msra.mxu0 0.0
    %601 = vmatpush.xpose.msra.mxu0 0.0
    %602 = vmatpush.xpose.msra.mxu0 0.0
    %603 = vmatpush.xpose.msra.mxu0 %v586
    %604 = vmatmul.f32.gmra.mxu0 %v584
    %v605 = vpop.f32.mrf.mxu0
    %v606 = vadd.f32 0.0, %v605
    %607 = vdwg.mxu0
    %608 = vrot.lane.b32.xlu0 %v457, 96
    %v609 = vpop.permute.xlu0 %608
    %v610 = vsel %vm65, %v457, 0
    %v612 = vsel %vm65, %v609, 0
    %614 = vmatpush.xpose.msra.mxu0 0.0
    %615 = vmatpush.xpose.msra.mxu0 0.0
    %616 = vmatpush.xpose.msra.mxu0 0.0
    %617 = vmatpush.xpose.msra.mxu0 0.0
    %618 = vmatpush.xpose.msra.mxu0 0.0
    %619 = vmatpush.xpose.msra.mxu0 0.0
    %620 = vmatpush.xpose.msra.mxu0 0.0
    %621 = vmatpush.xpose.msra.mxu0 0.0
    %622 = vmatpush.xpose.msra.mxu0 0.0
    %623 = vmatpush.xpose.msra.mxu0 0.0
    %624 = vmatpush.xpose.msra.mxu0 0.0
    %625 = vmatpush.xpose.msra.mxu0 0.0
    %626 = vmatpush.xpose.msra.mxu0 0.0
    %627 = vmatpush.xpose.msra.mxu0 0.0
    %628 = vmatpush.xpose.msra.mxu0 0.0
    %629 = vmatpush.xpose.msra.mxu0 %v612
    %630 = vmatmul.f32.gmra.mxu0 %v610
    %v631 = vpop.f32.mrf.mxu0
    %v632 = vadd.f32 0.0, %v631
    %633 = vdwg.mxu0
    %634 = vrot.lane.b32.xlu0 %v465, 96
    %v635 = vpop.permute.xlu0 %634
    %v636 = vsel %vm65, %v465, 0
    %v638 = vsel %vm65, %v635, 0
    %640 = vmatpush.xpose.msra.mxu0 0.0
    %641 = vmatpush.xpose.msra.mxu0 0.0
    %642 = vmatpush.xpose.msra.mxu0 0.0
    %643 = vmatpush.xpose.msra.mxu0 0.0
    %644 = vmatpush.xpose.msra.mxu0 0.0
    %645 = vmatpush.xpose.msra.mxu0 0.0
    %646 = vmatpush.xpose.msra.mxu0 0.0
    %647 = vmatpush.xpose.msra.mxu0 0.0
    %648 = vmatpush.xpose.msra.mxu0 0.0
    %649 = vmatpush.xpose.msra.mxu0 0.0
    %650 = vmatpush.xpose.msra.mxu0 0.0
    %651 = vmatpush.xpose.msra.mxu0 0.0
    %652 = vmatpush.xpose.msra.mxu0 0.0
    %653 = vmatpush.xpose.msra.mxu0 0.0
    %654 = vmatpush.xpose.msra.mxu0 0.0
    %655 = vmatpush.xpose.msra.mxu0 %v638
    %656 = vmatmul.f32.gmra.mxu0 %v636
    %v657 = vpop.f32.mrf.mxu0
    %v658 = vadd.f32 0.0, %v657
    %659 = vdwg.mxu0
    %660 = vrot.lane.b32.xlu0 %v473, 96
    %v661 = vpop.permute.xlu0 %660
    %v662 = vsel %vm65, %v473, 0
    %v664 = vsel %vm65, %v661, 0
    %666 = vmatpush.xpose.msra.mxu0 0.0
    %667 = vmatpush.xpose.msra.mxu0 0.0
    %668 = vmatpush.xpose.msra.mxu0 0.0
    %669 = vmatpush.xpose.msra.mxu0 0.0
    %670 = vmatpush.xpose.msra.mxu0 0.0
    %671 = vmatpush.xpose.msra.mxu0 0.0
    %672 = vmatpush.xpose.msra.mxu0 0.0
    %673 = vmatpush.xpose.msra.mxu0 0.0
    %674 = vmatpush.xpose.msra.mxu0 0.0
    %675 = vmatpush.xpose.msra.mxu0 0.0
    %676 = vmatpush.xpose.msra.mxu0 0.0
    %677 = vmatpush.xpose.msra.mxu0 0.0
    %678 = vmatpush.xpose.msra.mxu0 0.0
    %679 = vmatpush.xpose.msra.mxu0 0.0
    %680 = vmatpush.xpose.msra.mxu0 0.0
    %681 = vmatpush.xpose.msra.mxu0 %v664
    %682 = vmatmul.f32.gmra.mxu0 %v662
    %v683 = vpop.f32.mrf.mxu0
    %v684 = vadd.f32 0.0, %v683
    %685 = vdwg.mxu0
    %686 = vrot.lane.b32.xlu0 %v445, 96
    %v687 = vpop.permute.xlu0 %686
    %v688 = vsel %vm65, %v445, 0
    %v690 = vsel %vm65, %v687, 0
    %692 = vmatpush.xpose.msra.mxu0 0.0
    %693 = vmatpush.xpose.msra.mxu0 0.0
    %694 = vmatpush.xpose.msra.mxu0 0.0
    %695 = vmatpush.xpose.msra.mxu0 0.0
    %696 = vmatpush.xpose.msra.mxu0 0.0
    %697 = vmatpush.xpose.msra.mxu0 0.0
    %698 = vmatpush.xpose.msra.mxu0 0.0
    %699 = vmatpush.xpose.msra.mxu0 0.0
    %700 = vmatpush.xpose.msra.mxu0 0.0
    %701 = vmatpush.xpose.msra.mxu0 0.0
    %702 = vmatpush.xpose.msra.mxu0 0.0
    %703 = vmatpush.xpose.msra.mxu0 0.0
    %704 = vmatpush.xpose.msra.mxu0 0.0
    %705 = vmatpush.xpose.msra.mxu0 0.0
    %706 = vmatpush.xpose.msra.mxu0 0.0
    %707 = vmatpush.xpose.msra.mxu0 %v690
    %708 = vmatmul.f32.gmra.mxu0 %v688
    %v709 = vpop.f32.mrf.mxu0
    %v710 = vadd.f32 0.0, %v709
    %711 = vdwg.mxu0
    %712 = vrot.lane.b32.xlu0 %v459, 96
    %v713 = vpop.permute.xlu0 %712
    %v714 = vsel %vm65, %v459, 0
    %v716 = vsel %vm65, %v713, 0
    %718 = vmatpush.xpose.msra.mxu0 0.0
    %719 = vmatpush.xpose.msra.mxu0 0.0
    %720 = vmatpush.xpose.msra.mxu0 0.0
    %721 = vmatpush.xpose.msra.mxu0 0.0
    %722 = vmatpush.xpose.msra.mxu0 0.0
    %723 = vmatpush.xpose.msra.mxu0 0.0
    %724 = vmatpush.xpose.msra.mxu0 0.0
    %725 = vmatpush.xpose.msra.mxu0 0.0
    %726 = vmatpush.xpose.msra.mxu0 0.0
    %727 = vmatpush.xpose.msra.mxu0 0.0
    %728 = vmatpush.xpose.msra.mxu0 0.0
    %729 = vmatpush.xpose.msra.mxu0 0.0
    %730 = vmatpush.xpose.msra.mxu0 0.0
    %731 = vmatpush.xpose.msra.mxu0 0.0
    %732 = vmatpush.xpose.msra.mxu0 0.0
    %733 = vmatpush.xpose.msra.mxu0 %v716
    %734 = vmatmul.f32.gmra.mxu0 %v714
    %v735 = vpop.f32.mrf.mxu0
    %v736 = vadd.f32 0.0, %v735
    %737 = vdwg.mxu0
    %738 = vrot.lane.b32.xlu0 %v467, 96
    %v739 = vpop.permute.xlu0 %738
    %v740 = vsel %vm65, %v467, 0
    %v742 = vsel %vm65, %v739, 0
    %744 = vmatpush.xpose.msra.mxu0 0.0
    %745 = vmatpush.xpose.msra.mxu0 0.0
    %746 = vmatpush.xpose.msra.mxu0 0.0
    %747 = vmatpush.xpose.msra.mxu0 0.0
    %748 = vmatpush.xpose.msra.mxu0 0.0
    %749 = vmatpush.xpose.msra.mxu0 0.0
    %750 = vmatpush.xpose.msra.mxu0 0.0
    %751 = vmatpush.xpose.msra.mxu0 0.0
    %752 = vmatpush.xpose.msra.mxu0 0.0
    %753 = vmatpush.xpose.msra.mxu0 0.0
    %754 = vmatpush.xpose.msra.mxu0 0.0
    %755 = vmatpush.xpose.msra.mxu0 0.0
    %756 = vmatpush.xpose.msra.mxu0 0.0
    %757 = vmatpush.xpose.msra.mxu0 0.0
    %758 = vmatpush.xpose.msra.mxu0 0.0
    %759 = vmatpush.xpose.msra.mxu0 %v742
    %760 = vmatmul.f32.gmra.mxu0 %v740
    %v761 = vpop.f32.mrf.mxu0
    %v762 = vadd.f32 0.0, %v761
    %763 = vdwg.mxu0
    %764 = vrot.lane.b32.xlu0 %v475, 96
    %v765 = vpop.permute.xlu0 %764
    %v766 = vsel %vm65, %v475, 0
    %v768 = vsel %vm65, %v765, 0
    %770 = vmatpush.xpose.msra.mxu0 0.0
    %771 = vmatpush.xpose.msra.mxu0 0.0
    %772 = vmatpush.xpose.msra.mxu0 0.0
    %773 = vmatpush.xpose.msra.mxu0 0.0
    %774 = vmatpush.xpose.msra.mxu0 0.0
    %775 = vmatpush.xpose.msra.mxu0 0.0
    %776 = vmatpush.xpose.msra.mxu0 0.0
    %777 = vmatpush.xpose.msra.mxu0 0.0
    %778 = vmatpush.xpose.msra.mxu0 0.0
    %779 = vmatpush.xpose.msra.mxu0 0.0
    %780 = vmatpush.xpose.msra.mxu0 0.0
    %781 = vmatpush.xpose.msra.mxu0 0.0
    %782 = vmatpush.xpose.msra.mxu0 0.0
    %783 = vmatpush.xpose.msra.mxu0 0.0
    %784 = vmatpush.xpose.msra.mxu0 0.0
    %785 = vmatpush.xpose.msra.mxu0 %v768
    %786 = vmatmul.f32.gmra.mxu0 %v766
    %v787 = vpop.f32.mrf.mxu0
    %v788 = vadd.f32 0.0, %v787
    %789 = vdwg.mxu0
    %790 = vrot.lane.b32.xlu0 %v448, 96
    %v791 = vpop.permute.xlu0 %790
    %v792 = vsel %vm65, %v448, 0
    %v794 = vsel %vm65, %v791, 0
    %796 = vmatpush.xpose.msra.mxu0 0.0
    %797 = vmatpush.xpose.msra.mxu0 0.0
    %798 = vmatpush.xpose.msra.mxu0 0.0
    %799 = vmatpush.xpose.msra.mxu0 0.0
    %800 = vmatpush.xpose.msra.mxu0 0.0
    %801 = vmatpush.xpose.msra.mxu0 0.0
    %802 = vmatpush.xpose.msra.mxu0 0.0
    %803 = vmatpush.xpose.msra.mxu0 0.0
    %804 = vmatpush.xpose.msra.mxu0 0.0
    %805 = vmatpush.xpose.msra.mxu0 0.0
    %806 = vmatpush.xpose.msra.mxu0 0.0
    %807 = vmatpush.xpose.msra.mxu0 0.0
    %808 = vmatpush.xpose.msra.mxu0 0.0
    %809 = vmatpush.xpose.msra.mxu0 0.0
    %810 = vmatpush.xpose.msra.mxu0 0.0
    %811 = vmatpush.xpose.msra.mxu0 %v794
    %812 = vmatmul.f32.gmra.mxu0 %v792
    %v813 = vpop.f32.mrf.mxu0
    %v814 = vadd.f32 0.0, %v813
    %815 = vdwg.mxu0
    %816 = vrot.lane.b32.xlu0 %v461, 96
    %v817 = vpop.permute.xlu0 %816
    %v818 = vsel %vm65, %v461, 0
    %v820 = vsel %vm65, %v817, 0
    %822 = vmatpush.xpose.msra.mxu0 0.0
    %823 = vmatpush.xpose.msra.mxu0 0.0
    %824 = vmatpush.xpose.msra.mxu0 0.0
    %825 = vmatpush.xpose.msra.mxu0 0.0
    %826 = vmatpush.xpose.msra.mxu0 0.0
    %827 = vmatpush.xpose.msra.mxu0 0.0
    %828 = vmatpush.xpose.msra.mxu0 0.0
    %829 = vmatpush.xpose.msra.mxu0 0.0
    %830 = vmatpush.xpose.msra.mxu0 0.0
    %831 = vmatpush.xpose.msra.mxu0 0.0
    %832 = vmatpush.xpose.msra.mxu0 0.0
    %833 = vmatpush.xpose.msra.mxu0 0.0
    %834 = vmatpush.xpose.msra.mxu0 0.0
    %835 = vmatpush.xpose.msra.mxu0 0.0
    %836 = vmatpush.xpose.msra.mxu0 0.0
    %837 = vmatpush.xpose.msra.mxu0 %v820
    %838 = vmatmul.f32.gmra.mxu0 %v818
    %v839 = vpop.f32.mrf.mxu0
    %v840 = vadd.f32 0.0, %v839
    %841 = vdwg.mxu0
    %842 = vrot.lane.b32.xlu0 %v469, 96
    %v843 = vpop.permute.xlu0 %842
    %v844 = vsel %vm65, %v469, 0
    %v846 = vsel %vm65, %v843, 0
    %848 = vmatpush.xpose.msra.mxu0 0.0
    %849 = vmatpush.xpose.msra.mxu0 0.0
    %850 = vmatpush.xpose.msra.mxu0 0.0
    %851 = vmatpush.xpose.msra.mxu0 0.0
    %852 = vmatpush.xpose.msra.mxu0 0.0
    %853 = vmatpush.xpose.msra.mxu0 0.0
    %854 = vmatpush.xpose.msra.mxu0 0.0
    %855 = vmatpush.xpose.msra.mxu0 0.0
    %856 = vmatpush.xpose.msra.mxu0 0.0
    %857 = vmatpush.xpose.msra.mxu0 0.0
    %858 = vmatpush.xpose.msra.mxu0 0.0
    %859 = vmatpush.xpose.msra.mxu0 0.0
    %860 = vmatpush.xpose.msra.mxu0 0.0
    %861 = vmatpush.xpose.msra.mxu0 0.0
    %862 = vmatpush.xpose.msra.mxu0 0.0
    %863 = vmatpush.xpose.msra.mxu0 %v846
    %864 = vmatmul.f32.gmra.mxu0 %v844
    %v865 = vpop.f32.mrf.mxu0
    %v866 = vadd.f32 0.0, %v865
    %867 = vdwg.mxu0
    %868 = vrot.lane.b32.xlu0 %v477, 96
    %v869 = vpop.permute.xlu0 %868
    %v870 = vsel %vm65, %v477, 0
    %v872 = vsel %vm65, %v869, 0
    %874 = vmatpush.xpose.msra.mxu0 0.0
    %875 = vmatpush.xpose.msra.mxu0 0.0
    %876 = vmatpush.xpose.msra.mxu0 0.0
    %877 = vmatpush.xpose.msra.mxu0 0.0
    %878 = vmatpush.xpose.msra.mxu0 0.0
    %879 = vmatpush.xpose.msra.mxu0 0.0
    %880 = vmatpush.xpose.msra.mxu0 0.0
    %881 = vmatpush.xpose.msra.mxu0 0.0
    %882 = vmatpush.xpose.msra.mxu0 0.0
    %883 = vmatpush.xpose.msra.mxu0 0.0
    %884 = vmatpush.xpose.msra.mxu0 0.0
    %885 = vmatpush.xpose.msra.mxu0 0.0
    %886 = vmatpush.xpose.msra.mxu0 0.0
    %887 = vmatpush.xpose.msra.mxu0 0.0
    %888 = vmatpush.xpose.msra.mxu0 0.0
    %889 = vmatpush.xpose.msra.mxu0 %v872
    %890 = vmatmul.f32.gmra.mxu0 %v870
    %v891 = vpop.f32.mrf.mxu0
    %v892 = vadd.f32 0.0, %v891
    %893 = vdwg.mxu0
    %v894 = vmul.f32 %v502, 0.35355338
    %v895 = vmul.f32 %v528, 0.35355338
    %v896 = vmul.f32 %v554, 0.35355338
    %v897 = vmul.f32 %v580, 0.35355338
    %v898 = vmul.f32 %v606, 0.35355338
    %v899 = vmul.f32 %v632, 0.35355338
    %v900 = vmul.f32 %v658, 0.35355338
    %v901 = vmul.f32 %v684, 0.35355338
    %v902 = vmul.f32 %v710, 0.35355338
    %v903 = vmul.f32 %v736, 0.35355338
    %v904 = vmul.f32 %v762, 0.35355338
    %v905 = vmul.f32 %v788, 0.35355338
    %v906 = vmul.f32 %v814, 0.35355338
    %v907 = vmul.f32 %v840, 0.35355338
    %v908 = vmul.f32 %v866, 0.35355338
    %v909 = vmul.f32 %v892, 0.35355338
    %v910 = vsel %vm65, %v894, -inf
    %911 = vmax.xlane.f32.xlu0 %v910
    %v912 = vpop.xlane.xlu0 %911
    %v913 = vsel %vm65, %v895, -inf
    %914 = vmax.xlane.f32.xlu0 %v913
    %v915 = vpop.xlane.xlu0 %914
    %v916 = vsel %vm65, %v896, -inf
    %917 = vmax.xlane.f32.xlu0 %v916
    %v918 = vpop.xlane.xlu0 %917
    %v919 = vsel %vm65, %v897, -inf
    %920 = vmax.xlane.f32.xlu0 %v919
    %v921 = vpop.xlane.xlu0 %920
    %v922 = vsel %vm65, %v898, -inf
    %923 = vmax.xlane.f32.xlu0 %v922
    %v924 = vpop.xlane.xlu0 %923
    %v925 = vsel %vm65, %v899, -inf
    %926 = vmax.xlane.f32.xlu0 %v925
    %v927 = vpop.xlane.xlu0 %926
    %v928 = vsel %vm65, %v900, -inf
    %929 = vmax.xlane.f32.xlu0 %v928
    %v930 = vpop.xlane.xlu0 %929
    %v931 = vsel %vm65, %v901, -inf
    %932 = vmax.xlane.f32.xlu0 %v931
    %v933 = vpop.xlane.xlu0 %932
    %v934 = vsel %vm65, %v902, -inf
    %935 = vmax.xlane.f32.xlu0 %v934
    %v936 = vpop.xlane.xlu0 %935
    %v937 = vsel %vm65, %v903, -inf
    %938 = vmax.xlane.f32.xlu0 %v937
    %v939 = vpop.xlane.xlu0 %938
    %v940 = vsel %vm65, %v904, -inf
    %941 = vmax.xlane.f32.xlu0 %v940
    %v942 = vpop.xlane.xlu0 %941
    %v943 = vsel %vm65, %v905, -inf
    %944 = vmax.xlane.f32.xlu0 %v943
    %v945 = vpop.xlane.xlu0 %944
    %v946 = vsel %vm65, %v906, -inf
    %947 = vmax.xlane.f32.xlu0 %v946
    %v948 = vpop.xlane.xlu0 %947
    %v949 = vsel %vm65, %v907, -inf
    %950 = vmax.xlane.f32.xlu0 %v949
    %v951 = vpop.xlane.xlu0 %950
    %v952 = vsel %vm65, %v908, -inf
    %953 = vmax.xlane.f32.xlu0 %v952
    %v954 = vpop.xlane.xlu0 %953
    %v955 = vsel %vm65, %v909, -inf
    %956 = vmax.xlane.f32.xlu0 %v955
    %v957 = vpop.xlane.xlu0 %956
    %v958 = vsub.f32 %v894, %v912
    %v959 = vsub.f32 %v895, %v915
    %v960 = vsub.f32 %v896, %v918
    %v961 = vsub.f32 %v897, %v921
    %v962 = vsub.f32 %v898, %v924
    %v963 = vsub.f32 %v899, %v927
    %v964 = vsub.f32 %v900, %v930
    %v965 = vsub.f32 %v901, %v933
    %v966 = vsub.f32 %v902, %v936
    %v967 = vsub.f32 %v903, %v939
    %v968 = vsub.f32 %v904, %v942
    %v969 = vsub.f32 %v905, %v945
    %v970 = vsub.f32 %v906, %v948
    %v971 = vsub.f32 %v907, %v951
    %v972 = vsub.f32 %v908, %v954
    %v973 = vsub.f32 %v909, %v957
    %v974 = vmul.f32 %v958, 1.442695
    %v975 = vpow.pop %v974
    %v976 = vmul.f32 %v959, 1.442695
    %v977 = vpow.pop %v976
    %v978 = vmul.f32 %v960, 1.442695
    %v979 = vpow.pop %v978
    %v980 = vmul.f32 %v961, 1.442695
    %v981 = vpow.pop %v980
    %v982 = vmul.f32 %v962, 1.442695
    %v983 = vpow.pop %v982
    %v984 = vmul.f32 %v963, 1.442695
    %v985 = vpow.pop %v984
    %v986 = vmul.f32 %v964, 1.442695
    %v987 = vpow.pop %v986
    %v988 = vmul.f32 %v965, 1.442695
    %v989 = vpow.pop %v988
    %v990 = vmul.f32 %v966, 1.442695
    %v991 = vpow.pop %v990
    %v992 = vmul.f32 %v967, 1.442695
    %v993 = vpow.pop %v992
    %v994 = vmul.f32 %v968, 1.442695
    %v995 = vpow.pop %v994
    %v996 = vmul.f32 %v969, 1.442695
    %v997 = vpow.pop %v996
    %v998 = vmul.f32 %v970, 1.442695
    %v999 = vpow.pop %v998
    %v1000 = vmul.f32 %v971, 1.442695
    %v1001 = vpow.pop %v1000
    %v1002 = vmul.f32 %v972, 1.442695
    %v1003 = vpow.pop %v1002
    %v1004 = vmul.f32 %v973, 1.442695
    %v1005 = vpow.pop %v1004
    %v1006 = vsel %vm65, %v975, 0.0
    %1007 = vadd.xlane.f32.xlu0 %v1006
    %v1008 = vpop.xlane.xlu0 %1007
    %v1009 = vsel %vm65, %v977, 0.0
    %1010 = vadd.xlane.f32.xlu0 %v1009
    %v1011 = vpop.xlane.xlu0 %1010
    %v1012 = vsel %vm65, %v979, 0.0
    %1013 = vadd.xlane.f32.xlu0 %v1012
    %v1014 = vpop.xlane.xlu0 %1013
    %v1015 = vsel %vm65, %v981, 0.0
    %1016 = vadd.xlane.f32.xlu0 %v1015
    %v1017 = vpop.xlane.xlu0 %1016
    %v1018 = vsel %vm65, %v983, 0.0
    %1019 = vadd.xlane.f32.xlu0 %v1018
    %v1020 = vpop.xlane.xlu0 %1019
    %v1021 = vsel %vm65, %v985, 0.0
    %1022 = vadd.xlane.f32.xlu0 %v1021
    %v1023 = vpop.xlane.xlu0 %1022
    %v1024 = vsel %vm65, %v987, 0.0
    %1025 = vadd.xlane.f32.xlu0 %v1024
    %v1026 = vpop.xlane.xlu0 %1025
    %v1027 = vsel %vm65, %v989, 0.0
    %1028 = vadd.xlane.f32.xlu0 %v1027
    %v1029 = vpop.xlane.xlu0 %1028
    %v1030 = vsel %vm65, %v991, 0.0
    %1031 = vadd.xlane.f32.xlu0 %v1030
    %v1032 = vpop.xlane.xlu0 %1031
    %v1033 = vsel %vm65, %v993, 0.0
    %1034 = vadd.xlane.f32.xlu0 %v1033
    %v1035 = vpop.xlane.xlu0 %1034
    %v1036 = vsel %vm65, %v995, 0.0
    %1037 = vadd.xlane.f32.xlu0 %v1036
    %v1038 = vpop.xlane.xlu0 %1037
    %v1039 = vsel %vm65, %v997, 0.0
    %1040 = vadd.xlane.f32.xlu0 %v1039
    %v1041 = vpop.xlane.xlu0 %1040
    %v1042 = vsel %vm65, %v999, 0.0
    %1043 = vadd.xlane.f32.xlu0 %v1042
    %v1044 = vpop.xlane.xlu0 %1043
    %v1045 = vsel %vm65, %v1001, 0.0
    %1046 = vadd.xlane.f32.xlu0 %v1045
    %v1047 = vpop.xlane.xlu0 %1046
    %v1048 = vsel %vm65, %v1003, 0.0
    %1049 = vadd.xlane.f32.xlu0 %v1048
    %v1050 = vpop.xlane.xlu0 %1049
    %v1051 = vsel %vm65, %v1005, 0.0
    %1052 = vadd.xlane.f32.xlu0 %v1051
    %v1053 = vpop.xlane.xlu0 %1052
    %v1054 = vrcp.pop %v1008
    %v1055 = vrcp.pop %v1011
    %v1056 = vrcp.pop %v1014
    %v1057 = vrcp.pop %v1017
    %v1058 = vrcp.pop %v1020
    %v1059 = vrcp.pop %v1023
    %v1060 = vrcp.pop %v1026
    %v1061 = vrcp.pop %v1029
    %v1062 = vrcp.pop %v1032
    %v1063 = vrcp.pop %v1035
    %v1064 = vrcp.pop %v1038
    %v1065 = vrcp.pop %v1041
    %v1066 = vrcp.pop %v1044
    %v1067 = vrcp.pop %v1047
    %v1068 = vrcp.pop %v1050
    %v1069 = vrcp.pop %v1053
    %v1070 = vmul.f32 %v975, %v1054
    %v1071 = vmul.f32 %v977, %v1055
    %v1072 = vmul.f32 %v979, %v1056
    %v1073 = vmul.f32 %v981, %v1057
    %v1074 = vmul.f32 %v983, %v1058
    %v1075 = vmul.f32 %v985, %v1059
    %v1076 = vmul.f32 %v987, %v1060
    %v1077 = vmul.f32 %v989, %v1061
    %v1078 = vmul.f32 %v991, %v1062
    %v1079 = vmul.f32 %v993, %v1063
    %v1080 = vmul.f32 %v995, %v1064
    %v1081 = vmul.f32 %v997, %v1065
    %v1082 = vmul.f32 %v999, %v1066
    %v1083 = vmul.f32 %v1001, %v1067
    %v1084 = vmul.f32 %v1003, %v1068
    %v1085 = vmul.f32 %v1005, %v1069
    %1086 = vrot.lane.b32.xlu0 %v439, 64
    %v1087 = vpop.permute.xlu0 %1086
    %v1090 = vsel %vm65, %v1070, 0
    %1092 = vmatpush.msra.mxu0 0.0
    %1093 = vmatpush.msra.mxu0 0.0
    %1094 = vmatpush.msra.mxu0 0.0
    %1095 = vmatpush.msra.mxu0 0.0
    %1096 = vmatpush.msra.mxu0 0.0
    %1097 = vmatpush.msra.mxu0 0.0
    %1098 = vmatpush.msra.mxu0 0.0
    %1099 = vmatpush.msra.mxu0 0.0
    %1100 = vmatpush.msra.mxu0 0.0
    %1101 = vmatpush.msra.mxu0 0.0
    %1102 = vmatpush.msra.mxu0 0.0
    %1103 = vmatpush.msra.mxu0 0.0
    %1104 = vmatpush.msra.mxu0 0.0
    %1105 = vmatpush.msra.mxu0 0.0
    %1106 = vmatpush.msra.mxu0 0.0
    %1107 = vmatpush.msra.mxu0 %v1087
    %1108 = vmatmul.f32.gmra.mxu0 %v1090
    %v1109 = vpop.f32.mrf.mxu0
    %v1110 = vadd.f32 0.0, %v1109
    %1111 = vdwg.mxu0
    %1112 = vrot.lane.b32.xlu0 %v455, 64
    %v1113 = vpop.permute.xlu0 %1112
    %v1116 = vsel %vm65, %v1071, 0
    %1118 = vmatpush.msra.mxu0 0.0
    %1119 = vmatpush.msra.mxu0 0.0
    %1120 = vmatpush.msra.mxu0 0.0
    %1121 = vmatpush.msra.mxu0 0.0
    %1122 = vmatpush.msra.mxu0 0.0
    %1123 = vmatpush.msra.mxu0 0.0
    %1124 = vmatpush.msra.mxu0 0.0
    %1125 = vmatpush.msra.mxu0 0.0
    %1126 = vmatpush.msra.mxu0 0.0
    %1127 = vmatpush.msra.mxu0 0.0
    %1128 = vmatpush.msra.mxu0 0.0
    %1129 = vmatpush.msra.mxu0 0.0
    %1130 = vmatpush.msra.mxu0 0.0
    %1131 = vmatpush.msra.mxu0 0.0
    %1132 = vmatpush.msra.mxu0 0.0
    %1133 = vmatpush.msra.mxu0 %v1113
    %1134 = vmatmul.f32.gmra.mxu0 %v1116
    %v1135 = vpop.f32.mrf.mxu0
    %v1136 = vadd.f32 0.0, %v1135
    %1137 = vdwg.mxu0
    %1138 = vrot.lane.b32.xlu0 %v463, 64
    %v1139 = vpop.permute.xlu0 %1138
    %v1142 = vsel %vm65, %v1072, 0
    %1144 = vmatpush.msra.mxu0 0.0
    %1145 = vmatpush.msra.mxu0 0.0
    %1146 = vmatpush.msra.mxu0 0.0
    %1147 = vmatpush.msra.mxu0 0.0
    %1148 = vmatpush.msra.mxu0 0.0
    %1149 = vmatpush.msra.mxu0 0.0
    %1150 = vmatpush.msra.mxu0 0.0
    %1151 = vmatpush.msra.mxu0 0.0
    %1152 = vmatpush.msra.mxu0 0.0
    %1153 = vmatpush.msra.mxu0 0.0
    %1154 = vmatpush.msra.mxu0 0.0
    %1155 = vmatpush.msra.mxu0 0.0
    %1156 = vmatpush.msra.mxu0 0.0
    %1157 = vmatpush.msra.mxu0 0.0
    %1158 = vmatpush.msra.mxu0 0.0
    %1159 = vmatpush.msra.mxu0 %v1139
    %1160 = vmatmul.f32.gmra.mxu0 %v1142
    %v1161 = vpop.f32.mrf.mxu0
    %v1162 = vadd.f32 0.0, %v1161
    %1163 = vdwg.mxu0
    %1164 = vrot.lane.b32.xlu0 %v471, 64
    %v1165 = vpop.permute.xlu0 %1164
    %v1168 = vsel %vm65, %v1073, 0
    %1170 = vmatpush.msra.mxu0 0.0
    %1171 = vmatpush.msra.mxu0 0.0
    %1172 = vmatpush.msra.mxu0 0.0
    %1173 = vmatpush.msra.mxu0 0.0
    %1174 = vmatpush.msra.mxu0 0.0
    %1175 = vmatpush.msra.mxu0 0.0
    %1176 = vmatpush.msra.mxu0 0.0
    %1177 = vmatpush.msra.mxu0 0.0
    %1178 = vmatpush.msra.mxu0 0.0
    %1179 = vmatpush.msra.mxu0 0.0
    %1180 = vmatpush.msra.mxu0 0.0
    %1181 = vmatpush.msra.mxu0 0.0
    %1182 = vmatpush.msra.mxu0 0.0
    %1183 = vmatpush.msra.mxu0 0.0
    %1184 = vmatpush.msra.mxu0 0.0
    %1185 = vmatpush.msra.mxu0 %v1165
    %1186 = vmatmul.f32.gmra.mxu0 %v1168
    %v1187 = vpop.f32.mrf.mxu0
    %v1188 = vadd.f32 0.0, %v1187
    %1189 = vdwg.mxu0
    %1190 = vrot.lane.b32.xlu0 %v442, 64
    %v1191 = vpop.permute.xlu0 %1190
    %v1194 = vsel %vm65, %v1074, 0
    %1196 = vmatpush.msra.mxu0 0.0
    %1197 = vmatpush.msra.mxu0 0.0
    %1198 = vmatpush.msra.mxu0 0.0
    %1199 = vmatpush.msra.mxu0 0.0
    %1200 = vmatpush.msra.mxu0 0.0
    %1201 = vmatpush.msra.mxu0 0.0
    %1202 = vmatpush.msra.mxu0 0.0
    %1203 = vmatpush.msra.mxu0 0.0
    %1204 = vmatpush.msra.mxu0 0.0
    %1205 = vmatpush.msra.mxu0 0.0
    %1206 = vmatpush.msra.mxu0 0.0
    %1207 = vmatpush.msra.mxu0 0.0
    %1208 = vmatpush.msra.mxu0 0.0
    %1209 = vmatpush.msra.mxu0 0.0
    %1210 = vmatpush.msra.mxu0 0.0
    %1211 = vmatpush.msra.mxu0 %v1191
    %1212 = vmatmul.f32.gmra.mxu0 %v1194
    %v1213 = vpop.f32.mrf.mxu0
    %v1214 = vadd.f32 0.0, %v1213
    %1215 = vdwg.mxu0
    %1216 = vrot.lane.b32.xlu0 %v457, 64
    %v1217 = vpop.permute.xlu0 %1216
    %v1220 = vsel %vm65, %v1075, 0
    %1222 = vmatpush.msra.mxu0 0.0
    %1223 = vmatpush.msra.mxu0 0.0
    %1224 = vmatpush.msra.mxu0 0.0
    %1225 = vmatpush.msra.mxu0 0.0
    %1226 = vmatpush.msra.mxu0 0.0
    %1227 = vmatpush.msra.mxu0 0.0
    %1228 = vmatpush.msra.mxu0 0.0
    %1229 = vmatpush.msra.mxu0 0.0
    %1230 = vmatpush.msra.mxu0 0.0
    %1231 = vmatpush.msra.mxu0 0.0
    %1232 = vmatpush.msra.mxu0 0.0
    %1233 = vmatpush.msra.mxu0 0.0
    %1234 = vmatpush.msra.mxu0 0.0
    %1235 = vmatpush.msra.mxu0 0.0
    %1236 = vmatpush.msra.mxu0 0.0
    %1237 = vmatpush.msra.mxu0 %v1217
    %1238 = vmatmul.f32.gmra.mxu0 %v1220
    %v1239 = vpop.f32.mrf.mxu0
    %v1240 = vadd.f32 0.0, %v1239
    %1241 = vdwg.mxu0
    %1242 = vrot.lane.b32.xlu0 %v465, 64
    %v1243 = vpop.permute.xlu0 %1242
    %v1246 = vsel %vm65, %v1076, 0
    %1248 = vmatpush.msra.mxu0 0.0
    %1249 = vmatpush.msra.mxu0 0.0
    %1250 = vmatpush.msra.mxu0 0.0
    %1251 = vmatpush.msra.mxu0 0.0
    %1252 = vmatpush.msra.mxu0 0.0
    %1253 = vmatpush.msra.mxu0 0.0
    %1254 = vmatpush.msra.mxu0 0.0
    %1255 = vmatpush.msra.mxu0 0.0
    %1256 = vmatpush.msra.mxu0 0.0
    %1257 = vmatpush.msra.mxu0 0.0
    %1258 = vmatpush.msra.mxu0 0.0
    %1259 = vmatpush.msra.mxu0 0.0
    %1260 = vmatpush.msra.mxu0 0.0
    %1261 = vmatpush.msra.mxu0 0.0
    %1262 = vmatpush.msra.mxu0 0.0
    %1263 = vmatpush.msra.mxu0 %v1243
    %1264 = vmatmul.f32.gmra.mxu0 %v1246
    %v1265 = vpop.f32.mrf.mxu0
    %v1266 = vadd.f32 0.0, %v1265
    %1267 = vdwg.mxu0
    %1268 = vrot.lane.b32.xlu0 %v473, 64
    %v1269 = vpop.permute.xlu0 %1268
    %v1272 = vsel %vm65, %v1077, 0
    %1274 = vmatpush.msra.mxu0 0.0
    %1275 = vmatpush.msra.mxu0 0.0
    %1276 = vmatpush.msra.mxu0 0.0
    %1277 = vmatpush.msra.mxu0 0.0
    %1278 = vmatpush.msra.mxu0 0.0
    %1279 = vmatpush.msra.mxu0 0.0
    %1280 = vmatpush.msra.mxu0 0.0
    %1281 = vmatpush.msra.mxu0 0.0
    %1282 = vmatpush.msra.mxu0 0.0
    %1283 = vmatpush.msra.mxu0 0.0
    %1284 = vmatpush.msra.mxu0 0.0
    %1285 = vmatpush.msra.mxu0 0.0
    %1286 = vmatpush.msra.mxu0 0.0
    %1287 = vmatpush.msra.mxu0 0.0
    %1288 = vmatpush.msra.mxu0 0.0
    %1289 = vmatpush.msra.mxu0 %v1269
    %1290 = vmatmul.f32.gmra.mxu0 %v1272
    %v1291 = vpop.f32.mrf.mxu0
    %v1292 = vadd.f32 0.0, %v1291
    %1293 = vdwg.mxu0
    %1294 = vrot.lane.b32.xlu0 %v445, 64
    %v1295 = vpop.permute.xlu0 %1294
    %v1298 = vsel %vm65, %v1078, 0
    %1300 = vmatpush.msra.mxu0 0.0
    %1301 = vmatpush.msra.mxu0 0.0
    %1302 = vmatpush.msra.mxu0 0.0
    %1303 = vmatpush.msra.mxu0 0.0
    %1304 = vmatpush.msra.mxu0 0.0
    %1305 = vmatpush.msra.mxu0 0.0
    %1306 = vmatpush.msra.mxu0 0.0
    %1307 = vmatpush.msra.mxu0 0.0
    %1308 = vmatpush.msra.mxu0 0.0
    %1309 = vmatpush.msra.mxu0 0.0
    %1310 = vmatpush.msra.mxu0 0.0
    %1311 = vmatpush.msra.mxu0 0.0
    %1312 = vmatpush.msra.mxu0 0.0
    %1313 = vmatpush.msra.mxu0 0.0
    %1314 = vmatpush.msra.mxu0 0.0
    %1315 = vmatpush.msra.mxu0 %v1295
    %1316 = vmatmul.f32.gmra.mxu0 %v1298
    %v1317 = vpop.f32.mrf.mxu0
    %v1318 = vadd.f32 0.0, %v1317
    %1319 = vdwg.mxu0
    %1320 = vrot.lane.b32.xlu0 %v459, 64
    %v1321 = vpop.permute.xlu0 %1320
    %v1324 = vsel %vm65, %v1079, 0
    %1326 = vmatpush.msra.mxu0 0.0
    %1327 = vmatpush.msra.mxu0 0.0
    %1328 = vmatpush.msra.mxu0 0.0
    %1329 = vmatpush.msra.mxu0 0.0
    %1330 = vmatpush.msra.mxu0 0.0
    %1331 = vmatpush.msra.mxu0 0.0
    %1332 = vmatpush.msra.mxu0 0.0
    %1333 = vmatpush.msra.mxu0 0.0
    %1334 = vmatpush.msra.mxu0 0.0
    %1335 = vmatpush.msra.mxu0 0.0
    %1336 = vmatpush.msra.mxu0 0.0
    %1337 = vmatpush.msra.mxu0 0.0
    %1338 = vmatpush.msra.mxu0 0.0
    %1339 = vmatpush.msra.mxu0 0.0
    %1340 = vmatpush.msra.mxu0 0.0
    %1341 = vmatpush.msra.mxu0 %v1321
    %1342 = vmatmul.f32.gmra.mxu0 %v1324
    %v1343 = vpop.f32.mrf.mxu0
    %v1344 = vadd.f32 0.0, %v1343
    %1345 = vdwg.mxu0
    %1346 = vrot.lane.b32.xlu0 %v467, 64
    %v1347 = vpop.permute.xlu0 %1346
    %v1350 = vsel %vm65, %v1080, 0
    %1352 = vmatpush.msra.mxu0 0.0
    %1353 = vmatpush.msra.mxu0 0.0
    %1354 = vmatpush.msra.mxu0 0.0
    %1355 = vmatpush.msra.mxu0 0.0
    %1356 = vmatpush.msra.mxu0 0.0
    %1357 = vmatpush.msra.mxu0 0.0
    %1358 = vmatpush.msra.mxu0 0.0
    %1359 = vmatpush.msra.mxu0 0.0
    %1360 = vmatpush.msra.mxu0 0.0
    %1361 = vmatpush.msra.mxu0 0.0
    %1362 = vmatpush.msra.mxu0 0.0
    %1363 = vmatpush.msra.mxu0 0.0
    %1364 = vmatpush.msra.mxu0 0.0
    %1365 = vmatpush.msra.mxu0 0.0
    %1366 = vmatpush.msra.mxu0 0.0
    %1367 = vmatpush.msra.mxu0 %v1347
    %1368 = vmatmul.f32.gmra.mxu0 %v1350
    %v1369 = vpop.f32.mrf.mxu0
    %v1370 = vadd.f32 0.0, %v1369
    %1371 = vdwg.mxu0
    %1372 = vrot.lane.b32.xlu0 %v475, 64
    %v1373 = vpop.permute.xlu0 %1372
    %v1376 = vsel %vm65, %v1081, 0
    %1378 = vmatpush.msra.mxu0 0.0
    %1379 = vmatpush.msra.mxu0 0.0
    %1380 = vmatpush.msra.mxu0 0.0
    %1381 = vmatpush.msra.mxu0 0.0
    %1382 = vmatpush.msra.mxu0 0.0
    %1383 = vmatpush.msra.mxu0 0.0
    %1384 = vmatpush.msra.mxu0 0.0
    %1385 = vmatpush.msra.mxu0 0.0
    %1386 = vmatpush.msra.mxu0 0.0
    %1387 = vmatpush.msra.mxu0 0.0
    %1388 = vmatpush.msra.mxu0 0.0
    %1389 = vmatpush.msra.mxu0 0.0
    %1390 = vmatpush.msra.mxu0 0.0
    %1391 = vmatpush.msra.mxu0 0.0
    %1392 = vmatpush.msra.mxu0 0.0
    %1393 = vmatpush.msra.mxu0 %v1373
    %1394 = vmatmul.f32.gmra.mxu0 %v1376
    %v1395 = vpop.f32.mrf.mxu0
    %v1396 = vadd.f32 0.0, %v1395
    %1397 = vdwg.mxu0
    %1398 = vrot.lane.b32.xlu0 %v448, 64
    %v1399 = vpop.permute.xlu0 %1398
    %v1402 = vsel %vm65, %v1082, 0
    %1404 = vmatpush.msra.mxu0 0.0
    %1405 = vmatpush.msra.mxu0 0.0
    %1406 = vmatpush.msra.mxu0 0.0
    %1407 = vmatpush.msra.mxu0 0.0
    %1408 = vmatpush.msra.mxu0 0.0
    %1409 = vmatpush.msra.mxu0 0.0
    %1410 = vmatpush.msra.mxu0 0.0
    %1411 = vmatpush.msra.mxu0 0.0
    %1412 = vmatpush.msra.mxu0 0.0
    %1413 = vmatpush.msra.mxu0 0.0
    %1414 = vmatpush.msra.mxu0 0.0
    %1415 = vmatpush.msra.mxu0 0.0
    %1416 = vmatpush.msra.mxu0 0.0
    %1417 = vmatpush.msra.mxu0 0.0
    %1418 = vmatpush.msra.mxu0 0.0
    %1419 = vmatpush.msra.mxu0 %v1399
    %1420 = vmatmul.f32.gmra.mxu0 %v1402
    %v1421 = vpop.f32.mrf.mxu0
    %v1422 = vadd.f32 0.0, %v1421
    %1423 = vdwg.mxu0
    %1424 = vrot.lane.b32.xlu0 %v461, 64
    %v1425 = vpop.permute.xlu0 %1424
    %v1428 = vsel %vm65, %v1083, 0
    %1430 = vmatpush.msra.mxu0 0.0
    %1431 = vmatpush.msra.mxu0 0.0
    %1432 = vmatpush.msra.mxu0 0.0
    %1433 = vmatpush.msra.mxu0 0.0
    %1434 = vmatpush.msra.mxu0 0.0
    %1435 = vmatpush.msra.mxu0 0.0
    %1436 = vmatpush.msra.mxu0 0.0
    %1437 = vmatpush.msra.mxu0 0.0
    %1438 = vmatpush.msra.mxu0 0.0
    %1439 = vmatpush.msra.mxu0 0.0
    %1440 = vmatpush.msra.mxu0 0.0
    %1441 = vmatpush.msra.mxu0 0.0
    %1442 = vmatpush.msra.mxu0 0.0
    %1443 = vmatpush.msra.mxu0 0.0
    %1444 = vmatpush.msra.mxu0 0.0
    %1445 = vmatpush.msra.mxu0 %v1425
    %1446 = vmatmul.f32.gmra.mxu0 %v1428
    %v1447 = vpop.f32.mrf.mxu0
    %v1448 = vadd.f32 0.0, %v1447
    %1449 = vdwg.mxu0
    %1450 = vrot.lane.b32.xlu0 %v469, 64
    %v1451 = vpop.permute.xlu0 %1450
    %v1454 = vsel %vm65, %v1084, 0
    %1456 = vmatpush.msra.mxu0 0.0
    %1457 = vmatpush.msra.mxu0 0.0
    %1458 = vmatpush.msra.mxu0 0.0
    %1459 = vmatpush.msra.mxu0 0.0
    %1460 = vmatpush.msra.mxu0 0.0
    %1461 = vmatpush.msra.mxu0 0.0
    %1462 = vmatpush.msra.mxu0 0.0
    %1463 = vmatpush.msra.mxu0 0.0
    %1464 = vmatpush.msra.mxu0 0.0
    %1465 = vmatpush.msra.mxu0 0.0
    %1466 = vmatpush.msra.mxu0 0.0
    %1467 = vmatpush.msra.mxu0 0.0
    %1468 = vmatpush.msra.mxu0 0.0
    %1469 = vmatpush.msra.mxu0 0.0
    %1470 = vmatpush.msra.mxu0 0.0
    %1471 = vmatpush.msra.mxu0 %v1451
    %1472 = vmatmul.f32.gmra.mxu0 %v1454
    %v1473 = vpop.f32.mrf.mxu0
    %v1474 = vadd.f32 0.0, %v1473
    %1475 = vdwg.mxu0
    %1476 = vrot.lane.b32.xlu0 %v477, 64
    %v1477 = vpop.permute.xlu0 %1476
    %v1480 = vsel %vm65, %v1085, 0
    %1482 = vmatpush.msra.mxu0 0.0
    %1483 = vmatpush.msra.mxu0 0.0
    %1484 = vmatpush.msra.mxu0 0.0
    %1485 = vmatpush.msra.mxu0 0.0
    %1486 = vmatpush.msra.mxu0 0.0
    %1487 = vmatpush.msra.mxu0 0.0
    %1488 = vmatpush.msra.mxu0 0.0
    %1489 = vmatpush.msra.mxu0 0.0
    %1490 = vmatpush.msra.mxu0 0.0
    %1491 = vmatpush.msra.mxu0 0.0
    %1492 = vmatpush.msra.mxu0 0.0
    %1493 = vmatpush.msra.mxu0 0.0
    %1494 = vmatpush.msra.mxu0 0.0
    %1495 = vmatpush.msra.mxu0 0.0
    %1496 = vmatpush.msra.mxu0 0.0
    %1497 = vmatpush.msra.mxu0 %v1477
    %1498 = vmatmul.f32.gmra.mxu0 %v1480
    %v1499 = vpop.f32.mrf.mxu0
    %v1500 = vadd.f32 0.0, %v1499
    %1501 = vdwg.mxu0
    %1506 = vrot.lane.b32.xlu0 %v1136, 8
    %v1507 = vpop.permute.xlu0 %1506
    %1508 = vrot.lane.b32.xlu0 %v1240, 8
    %v1509 = vpop.permute.xlu0 %1508
    %1510 = vrot.lane.b32.xlu0 %v1344, 8
    %v1511 = vpop.permute.xlu0 %1510
    %1512 = vrot.lane.b32.xlu0 %v1448, 8
    %v1513 = vpop.permute.xlu0 %1512
    %1522 = vrot.lane.b32.xlu0 %v1162, 16
    %v1523 = vpop.permute.xlu0 %1522
    %1524 = vrot.lane.b32.xlu0 %v1266, 16
    %v1525 = vpop.permute.xlu0 %1524
    %1526 = vrot.lane.b32.xlu0 %v1370, 16
    %v1527 = vpop.permute.xlu0 %1526
    %1528 = vrot.lane.b32.xlu0 %v1474, 16
    %v1529 = vpop.permute.xlu0 %1528
    %1538 = vrot.lane.b32.xlu0 %v1188, 24
    %v1539 = vpop.permute.xlu0 %1538
    %1540 = vrot.lane.b32.xlu0 %v1292, 24
    %v1541 = vpop.permute.xlu0 %1540
    %1542 = vrot.lane.b32.xlu0 %v1396, 24
    %v1543 = vpop.permute.xlu0 %1542
    %1544 = vrot.lane.b32.xlu0 %v1500, 24
    %v1545 = vpop.permute.xlu0 %1544
    %v1550 = vsel %vm65, %v1110, %v1507
    %v1551 = vsel %vm65, %v1214, %v1509
    %v1552 = vsel %vm65, %v1318, %v1511
    %v1553 = vsel %vm65, %v1422, %v1513
    %vm1554 = vcmask 130048
    %v1555 = vsel %vm1554, %v1550, %v1523
    %v1556 = vsel %vm1554, %v1551, %v1525
    %v1557 = vsel %vm1554, %v1552, %v1527
    %v1558 = vsel %vm1554, %v1553, %v1529
    %vm1559 = vcmask 195584
    %v1560 = vsel %vm1559, %v1555, %v1539
    %v1561 = vsel %vm1559, %v1556, %v1541
    %v1562 = vsel %vm1559, %v1557, %v1543
    %v1563 = vsel %vm1559, %v1558, %v1545
    %v1564 = vld [vmem:[%s4] sm:$0xff]
    %v1565 = vld [vmem:[%s4 + $0x8] sm:$0xff]
    %v1566 = vld [vmem:[%s4 + $0x10] sm:$0xff]
    %v1567 = vld [vmem:[%s4 + $0x18] sm:$0xff]
    %v1569 = vsel %vm408, %v1560, 0
    %v1572 = vsel %vm408, %v1561, 0
    %v1575 = vsel %vm408, %v1562, 0
    %v1578 = vsel %vm408, %v1563, 0
    %1580 = vmatpush.msra.mxu0 0.0
    %1581 = vmatpush.msra.mxu0 0.0
    %1582 = vmatpush.msra.mxu0 0.0
    %1583 = vmatpush.msra.mxu0 0.0
    %1584 = vmatpush.msra.mxu0 0.0
    %1585 = vmatpush.msra.mxu0 0.0
    %1586 = vmatpush.msra.mxu0 0.0
    %1587 = vmatpush.msra.mxu0 0.0
    %1588 = vmatpush.msra.mxu0 0.0
    %1589 = vmatpush.msra.mxu0 0.0
    %1590 = vmatpush.msra.mxu0 0.0
    %1591 = vmatpush.msra.mxu0 0.0
    %1592 = vmatpush.msra.mxu0 %v1567
    %1593 = vmatpush.msra.mxu0 %v1566
    %1594 = vmatpush.msra.mxu0 %v1565
    %1595 = vmatpush.msra.mxu0 %v1564
    %1596 = vmatmul.f32.gmra.mxu0 %v1569
    %v1597 = vpop.f32.mrf.mxu0
    %v1598 = vadd.f32 %v400, %v1597
    %1599 = vmatmul.f32.gmra.mxu0 %v1572
    %v1600 = vpop.f32.mrf.mxu0
    %v1601 = vadd.f32 %v401, %v1600
    %1602 = vmatmul.f32.gmra.mxu0 %v1575
    %v1603 = vpop.f32.mrf.mxu0
    %v1604 = vadd.f32 %v402, %v1603
    %1605 = vmatmul.f32.gmra.mxu0 %v1578
    %v1606 = vpop.f32.mrf.mxu0
    %v1607 = vadd.f32 %v403, %v1606
    %1608 = vdwg.mxu0
    %v1609 = vsel %vm408, %v1598, 0.0
    %1610 = vadd.xlane.f32.xlu0 %v1609
    %v1611 = vpop.xlane.xlu0 %1610
    %v1612 = vsel %vm408, %v1601, 0.0
    %1613 = vadd.xlane.f32.xlu0 %v1612
    %v1614 = vpop.xlane.xlu0 %1613
    %v1615 = vsel %vm408, %v1604, 0.0
    %1616 = vadd.xlane.f32.xlu0 %v1615
    %v1617 = vpop.xlane.xlu0 %1616
    %v1618 = vsel %vm408, %v1607, 0.0
    %1619 = vadd.xlane.f32.xlu0 %v1618
    %v1620 = vpop.xlane.xlu0 %1619
    %v1621 = vrcp.pop 32.0
    %v1622 = vmul.f32 32.0, %v1621
    %v1623 = vsub.f32 1.0, %v1622
    %v1624 = vmul.f32 %v1621, %v1623
    %v1625 = vadd.f32 %v1621, %v1624
    %vm1626 = vweird.f32 %v1621
    %v1627 = vsel %vm1626, %v1621, %v1625
    %v1628 = vmul.f32 %v1611, %v1627
    %v1629 = vmul.f32 %v1614, %v1627
    %v1630 = vmul.f32 %v1617, %v1627
    %v1631 = vmul.f32 %v1620, %v1627
    %v1632 = vsub.f32 %v1598, %v1628
    %v1633 = vsub.f32 %v1601, %v1629
    %v1634 = vsub.f32 %v1604, %v1630
    %v1635 = vsub.f32 %v1607, %v1631
    %v1636 = vmul.f32 %v1632, %v1632
    %v1637 = vmul.f32 %v1633, %v1633
    %v1638 = vmul.f32 %v1634, %v1634
    %v1639 = vmul.f32 %v1635, %v1635
    %v1640 = vsel %vm408, %v1636, 0.0
    %1641 = vadd.xlane.f32.xlu0 %v1640
    %v1642 = vpop.xlane.xlu0 %1641
    %v1643 = vsel %vm408, %v1637, 0.0
    %1644 = vadd.xlane.f32.xlu0 %v1643
    %v1645 = vpop.xlane.xlu0 %1644
    %v1646 = vsel %vm408, %v1638, 0.0
    %1647 = vadd.xlane.f32.xlu0 %v1646
    %v1648 = vpop.xlane.xlu0 %1647
    %v1649 = vsel %vm408, %v1639, 0.0
    %1650 = vadd.xlane.f32.xlu0 %v1649
    %v1651 = vpop.xlane.xlu0 %1650
    %v1652 = vmul.f32 %v1642, %v1627
    %v1653 = vmul.f32 %v1645, %v1627
    %v1654 = vmul.f32 %v1648, %v1627
    %v1655 = vmul.f32 %v1651, %v1627
    %v1656 = vadd.f32 %v1652, 1e-05
    %v1657 = vadd.f32 %v1653, 1e-05
    %v1658 = vadd.f32 %v1654, 1e-05
    %v1659 = vadd.f32 %v1655, 1e-05
    %v1660 = vrsqrt.pop %v1656
    %v1661 = vmul.f32 %v1660, %v1656
    %v1662 = vmul.f32 %v1661, %v1660
    %v1663 = vmul.f32 0.5, %v1662
    %v1664 = vsub.f32 1.5, %v1663
    %v1665 = vmul.f32 %v1660, %v1664
    %vm1666 = vweird.f32 %v1656
    %vm1667 = vweird.f32 %v1660
    %vm1668 = vmor %vm1666, %vm1667
    %v1669 = vsel %vm1668, %v1660, %v1665
    %v1670 = vrsqrt.pop %v1657
    %v1671 = vmul.f32 %v1670, %v1657
    %v1672 = vmul.f32 %v1671, %v1670
    %v1673 = vmul.f32 0.5, %v1672
    %v1674 = vsub.f32 1.5, %v1673
    %v1675 = vmul.f32 %v1670, %v1674
    %vm1676 = vweird.f32 %v1657
    %vm1677 = vweird.f32 %v1670
    %vm1678 = vmor %vm1676, %vm1677
    %v1679 = vsel %vm1678, %v1670, %v1675
    %v1680 = vrsqrt.pop %v1658
    %v1681 = vmul.f32 %v1680, %v1658
    %v1682 = vmul.f32 %v1681, %v1680
    %v1683 = vmul.f32 0.5, %v1682
    %v1684 = vsub.f32 1.5, %v1683
    %v1685 = vmul.f32 %v1680, %v1684
    %vm1686 = vweird.f32 %v1658
    %vm1687 = vweird.f32 %v1680
    %vm1688 = vmor %vm1686, %vm1687
    %v1689 = vsel %vm1688, %v1680, %v1685
    %v1690 = vrsqrt.pop %v1659
    %v1691 = vmul.f32 %v1690, %v1659
    %v1692 = vmul.f32 %v1691, %v1690
    %v1693 = vmul.f32 0.5, %v1692
    %v1694 = vsub.f32 1.5, %v1693
    %v1695 = vmul.f32 %v1690, %v1694
    %vm1696 = vweird.f32 %v1659
    %vm1697 = vweird.f32 %v1690
    %vm1698 = vmor %vm1696, %vm1697
    %v1699 = vsel %vm1698, %v1690, %v1695
    %v1700 = vmul.f32 %v1632, %v1669
    %v1701 = vmul.f32 %v1633, %v1679
    %v1702 = vmul.f32 %v1634, %v1689
    %v1703 = vmul.f32 %v1635, %v1699
    %v1704 = vld [vmem:[%s5] sm:$0x1]
    %v1706 = vperm.slane %v1704, 0
    %v1708 = vmul.f32 %v1700, %v1706
    %v1709 = vmul.f32 %v1701, %v1706
    %v1710 = vmul.f32 %v1702, %v1706
    %v1711 = vmul.f32 %v1703, %v1706
    %v1712 = vld [vmem:[%s6] sm:$0x1]
    %v1714 = vperm.slane %v1712, 0
    %v1716 = vadd.f32 %v1708, %v1714
    %v1717 = vadd.f32 %v1709, %v1714
    %v1718 = vadd.f32 %v1710, %v1714
    %v1719 = vadd.f32 %v1711, %v1714
    %v1720 = vld [vmem:[%s7] sm:$0xff]
    %v1721 = vld [vmem:[%s7 + $0x8] sm:$0xff]
    %v1722 = vld [vmem:[%s7 + $0x10] sm:$0xff]
    %v1723 = vld [vmem:[%s7 + $0x18] sm:$0xff]
    %v1724 = vld [vmem:[%s7 + $0x20] sm:$0xff]
    %v1725 = vld [vmem:[%s7 + $0x28] sm:$0xff]
    %v1726 = vld [vmem:[%s7 + $0x30] sm:$0xff]
    %v1727 = vld [vmem:[%s7 + $0x38] sm:$0xff]
    %v1728 = vld [vmem:[%s7 + $0x40] sm:$0xff]
    %v1729 = vld [vmem:[%s7 + $0x48] sm:$0xff]
    %v1730 = vld [vmem:[%s7 + $0x50] sm:$0xff]
    %v1731 = vld [vmem:[%s7 + $0x58] sm:$0xff]
    %v1732 = vld [vmem:[%s7 + $0x60] sm:$0xff]
    %v1733 = vld [vmem:[%s7 + $0x68] sm:$0xff]
    %v1734 = vld [vmem:[%s7 + $0x70] sm:$0xff]
    %v1735 = vld [vmem:[%s7 + $0x78] sm:$0xff]
    %v1736 = vld [vmem:[%s7 + $0x80] sm:$0xff]
    %v1737 = vld [vmem:[%s7 + $0x88] sm:$0xff]
    %v1738 = vld [vmem:[%s7 + $0x90] sm:$0xff]
    %v1739 = vld [vmem:[%s7 + $0x98] sm:$0xff]
    %v1740 = vld [vmem:[%s7 + $0xa0] sm:$0xff]
    %v1741 = vld [vmem:[%s7 + $0xa8] sm:$0xff]
    %v1742 = vld [vmem:[%s7 + $0xb0] sm:$0xff]
    %v1743 = vld [vmem:[%s7 + $0xb8] sm:$0xff]
    %v1744 = vld [vmem:[%s7 + $0xc0] sm:$0xff]
    %v1745 = vld [vmem:[%s7 + $0xc8] sm:$0xff]
    %v1746 = vld [vmem:[%s7 + $0xd0] sm:$0xff]
    %v1747 = vld [vmem:[%s7 + $0xd8] sm:$0xff]
    %v1748 = vld [vmem:[%s7 + $0xe0] sm:$0xff]
    %v1749 = vld [vmem:[%s7 + $0xe8] sm:$0xff]
    %v1750 = vld [vmem:[%s7 + $0xf0] sm:$0xff]
    %v1751 = vld [vmem:[%s7 + $0xf8] sm:$0xff]
    %v1752 = vld [vmem:[%s8] sm:$0x1]
    %v1753 = vld [vmem:[%s8 + $0x1] sm:$0x1]
    %v1754 = vld [vmem:[%s8 + $0x2] sm:$0x1]
    %v1755 = vld [vmem:[%s8 + $0x3] sm:$0x1]
    %v1756 = vld [vmem:[%s8 + $0x4] sm:$0x1]
    %v1757 = vld [vmem:[%s8 + $0x5] sm:$0x1]
    %v1758 = vld [vmem:[%s8 + $0x6] sm:$0x1]
    %v1759 = vld [vmem:[%s8 + $0x7] sm:$0x1]
    %v1761 = vperm.slane %v1752, 0
    %v1767 = vrot.slane %v1717, 7
    %vm1768 = vcmask 1041409
    %v1769 = vsel %vm1768, %v1767, %v1716
    %v1770 = vrot.slane %v1718, 6
    %vm1771 = vcmask 1042434
    %v1772 = vsel %vm1771, %v1770, %v1769
    %v1773 = vrot.slane %v1719, 5
    %vm1774 = vcmask 1043459
    %v1775 = vsel %vm1774, %v1773, %v1772
    %v1776 = vsel %vm408, %v1775, 0
    %1778 = vmatpush.msra.mxu0 0.0
    %1779 = vmatpush.msra.mxu0 0.0
    %1780 = vmatpush.msra.mxu0 0.0
    %1781 = vmatpush.msra.mxu0 0.0
    %1782 = vmatpush.msra.mxu0 0.0
    %1783 = vmatpush.msra.mxu0 0.0
    %1784 = vmatpush.msra.mxu0 0.0
    %1785 = vmatpush.msra.mxu0 0.0
    %1786 = vmatpush.msra.mxu0 0.0
    %1787 = vmatpush.msra.mxu0 0.0
    %1788 = vmatpush.msra.mxu0 0.0
    %1789 = vmatpush.msra.mxu0 0.0
    %1790 = vmatpush.msra.mxu0 %v1723
    %1791 = vmatpush.msra.mxu0 %v1722
    %1792 = vmatpush.msra.mxu0 %v1721
    %1793 = vmatpush.msra.mxu0 %v1720
    %1794 = vmatmul.f32.gmra.mxu0 %v1776
    %v1795 = vpop.f32.mrf.mxu0
    %v1796 = vadd.f32 %v1761, %v1795
    %1797 = vdwg.mxu0
    %v1799 = vperm.slane %v1753, 0
    %v1801 = vrot.slane %v1716, 1
    %v1802 = vsel %vm1768, %v1717, %v1801
    %v1803 = vrot.slane %v1718, 7
    %v1804 = vsel %vm1771, %v1803, %v1802
    %v1805 = vrot.slane %v1719, 6
    %v1806 = vsel %vm1774, %v1805, %v1804
    %v1807 = vsel %vm408, %v1806, 0
    %1809 = vmatpush.msra.mxu0 0.0
    %1810 = vmatpush.msra.mxu0 0.0
    %1811 = vmatpush.msra.mxu0 0.0
    %1812 = vmatpush.msra.mxu0 0.0
    %1813 = vmatpush.msra.mxu0 0.0
    %1814 = vmatpush.msra.mxu0 0.0
    %1815 = vmatpush.msra.mxu0 0.0
    %1816 = vmatpush.msra.mxu0 0.0
    %1817 = vmatpush.msra.mxu0 0.0
    %1818 = vmatpush.msra.mxu0 0.0
    %1819 = vmatpush.msra.mxu0 0.0
    %1820 = vmatpush.msra.mxu0 0.0
    %1821 = vmatpush.msra.mxu0 %v1727
    %1822 = vmatpush.msra.mxu0 %v1726
    %1823 = vmatpush.msra.mxu0 %v1725
    %1824 = vmatpush.msra.mxu0 %v1724
    %1825 = vmatmul.f32.gmra.mxu0 %v1807
    %v1826 = vpop.f32.mrf.mxu0
    %v1827 = vadd.f32 %v1799, %v1826
    %1828 = vdwg.mxu0
    %v1830 = vperm.slane %v1754, 0
    %v1832 = vrot.slane %v1716, 2
    %v1833 = vrot.slane %v1717, 1
    %v1834 = vsel %vm1768, %v1833, %v1832
    %v1835 = vsel %vm1771, %v1718, %v1834
    %v1836 = vrot.slane %v1719, 7
    %v1837 = vsel %vm1774, %v1836, %v1835
    %v1838 = vsel %vm408, %v1837, 0
    %1840 = vmatpush.msra.mxu0 0.0
    %1841 = vmatpush.msra.mxu0 0.0
    %1842 = vmatpush.msra.mxu0 0.0
    %1843 = vmatpush.msra.mxu0 0.0
    %1844 = vmatpush.msra.mxu0 0.0
    %1845 = vmatpush.msra.mxu0 0.0
    %1846 = vmatpush.msra.mxu0 0.0
    %1847 = vmatpush.msra.mxu0 0.0
    %1848 = vmatpush.msra.mxu0 0.0
    %1849 = vmatpush.msra.mxu0 0.0
    %1850 = vmatpush.msra.mxu0 0.0
    %1851 = vmatpush.msra.mxu0 0.0
    %1852 = vmatpush.msra.mxu0 %v1731
    %1853 = vmatpush.msra.mxu0 %v1730
    %1854 = vmatpush.msra.mxu0 %v1729
    %1855 = vmatpush.msra.mxu0 %v1728
    %1856 = vmatmul.f32.gmra.mxu0 %v1838
    %v1857 = vpop.f32.mrf.mxu0
    %v1858 = vadd.f32 %v1830, %v1857
    %1859 = vdwg.mxu0
    %v1861 = vperm.slane %v1755, 0
    %v1863 = vrot.slane %v1716, 3
    %v1864 = vrot.slane %v1717, 2
    %v1865 = vsel %vm1768, %v1864, %v1863
    %v1866 = vrot.slane %v1718, 1
    %v1867 = vsel %vm1771, %v1866, %v1865
    %v1868 = vsel %vm1774, %v1719, %v1867
    %v1869 = vsel %vm408, %v1868, 0
    %1871 = vmatpush.msra.mxu0 0.0
    %1872 = vmatpush.msra.mxu0 0.0
    %1873 = vmatpush.msra.mxu0 0.0
    %1874 = vmatpush.msra.mxu0 0.0
    %1875 = vmatpush.msra.mxu0 0.0
    %1876 = vmatpush.msra.mxu0 0.0
    %1877 = vmatpush.msra.mxu0 0.0
    %1878 = vmatpush.msra.mxu0 0.0
    %1879 = vmatpush.msra.mxu0 0.0
    %1880 = vmatpush.msra.mxu0 0.0
    %1881 = vmatpush.msra.mxu0 0.0
    %1882 = vmatpush.msra.mxu0 0.0
    %1883 = vmatpush.msra.mxu0 %v1735
    %1884 = vmatpush.msra.mxu0 %v1734
    %1885 = vmatpush.msra.mxu0 %v1733
    %1886 = vmatpush.msra.mxu0 %v1732
    %1887 = vmatmul.f32.gmra.mxu0 %v1869
    %v1888 = vpop.f32.mrf.mxu0
    %v1889 = vadd.f32 %v1861, %v1888
    %1890 = vdwg.mxu0
    %v1892 = vperm.slane %v1756, 0
    %v1894 = vrot.slane %v1716, 4
    %v1895 = vrot.slane %v1717, 3
    %v1896 = vsel %vm1768, %v1895, %v1894
    %v1897 = vrot.slane %v1718, 2
    %v1898 = vsel %vm1771, %v1897, %v1896
    %v1899 = vrot.slane %v1719, 1
    %v1900 = vsel %vm1774, %v1899, %v1898
    %v1901 = vsel %vm408, %v1900, 0
    %1903 = vmatpush.msra.mxu0 0.0
    %1904 = vmatpush.msra.mxu0 0.0
    %1905 = vmatpush.msra.mxu0 0.0
    %1906 = vmatpush.msra.mxu0 0.0
    %1907 = vmatpush.msra.mxu0 0.0
    %1908 = vmatpush.msra.mxu0 0.0
    %1909 = vmatpush.msra.mxu0 0.0
    %1910 = vmatpush.msra.mxu0 0.0
    %1911 = vmatpush.msra.mxu0 0.0
    %1912 = vmatpush.msra.mxu0 0.0
    %1913 = vmatpush.msra.mxu0 0.0
    %1914 = vmatpush.msra.mxu0 0.0
    %1915 = vmatpush.msra.mxu0 %v1739
    %1916 = vmatpush.msra.mxu0 %v1738
    %1917 = vmatpush.msra.mxu0 %v1737
    %1918 = vmatpush.msra.mxu0 %v1736
    %1919 = vmatmul.f32.gmra.mxu0 %v1901
    %v1920 = vpop.f32.mrf.mxu0
    %v1921 = vadd.f32 %v1892, %v1920
    %1922 = vdwg.mxu0
    %v1924 = vperm.slane %v1757, 0
    %v1926 = vrot.slane %v1716, 5
    %v1927 = vrot.slane %v1717, 4
    %v1928 = vsel %vm1768, %v1927, %v1926
    %v1929 = vrot.slane %v1718, 3
    %v1930 = vsel %vm1771, %v1929, %v1928
    %v1931 = vrot.slane %v1719, 2
    %v1932 = vsel %vm1774, %v1931, %v1930
    %v1933 = vsel %vm408, %v1932, 0
    %1935 = vmatpush.msra.mxu0 0.0
    %1936 = vmatpush.msra.mxu0 0.0
    %1937 = vmatpush.msra.mxu0 0.0
    %1938 = vmatpush.msra.mxu0 0.0
    %1939 = vmatpush.msra.mxu0 0.0
    %1940 = vmatpush.msra.mxu0 0.0
    %1941 = vmatpush.msra.mxu0 0.0
    %1942 = vmatpush.msra.mxu0 0.0
    %1943 = vmatpush.msra.mxu0 0.0
    %1944 = vmatpush.msra.mxu0 0.0
    %1945 = vmatpush.msra.mxu0 0.0
    %1946 = vmatpush.msra.mxu0 0.0
    %1947 = vmatpush.msra.mxu0 %v1743
    %1948 = vmatpush.msra.mxu0 %v1742
    %1949 = vmatpush.msra.mxu0 %v1741
    %1950 = vmatpush.msra.mxu0 %v1740
    %1951 = vmatmul.f32.gmra.mxu0 %v1933
    %v1952 = vpop.f32.mrf.mxu0
    %v1953 = vadd.f32 %v1924, %v1952
    %1954 = vdwg.mxu0
    %v1956 = vperm.slane %v1758, 0
    %v1958 = vrot.slane %v1716, 6
    %v1959 = vrot.slane %v1717, 5
    %v1960 = vsel %vm1768, %v1959, %v1958
    %v1961 = vrot.slane %v1718, 4
    %v1962 = vsel %vm1771, %v1961, %v1960
    %v1963 = vrot.slane %v1719, 3
    %v1964 = vsel %vm1774, %v1963, %v1962
    %v1965 = vsel %vm408, %v1964, 0
    %1967 = vmatpush.msra.mxu0 0.0
    %1968 = vmatpush.msra.mxu0 0.0
    %1969 = vmatpush.msra.mxu0 0.0
    %1970 = vmatpush.msra.mxu0 0.0
    %1971 = vmatpush.msra.mxu0 0.0
    %1972 = vmatpush.msra.mxu0 0.0
    %1973 = vmatpush.msra.mxu0 0.0
    %1974 = vmatpush.msra.mxu0 0.0
    %1975 = vmatpush.msra.mxu0 0.0
    %1976 = vmatpush.msra.mxu0 0.0
    %1977 = vmatpush.msra.mxu0 0.0
    %1978 = vmatpush.msra.mxu0 0.0
    %1979 = vmatpush.msra.mxu0 %v1747
    %1980 = vmatpush.msra.mxu0 %v1746
    %1981 = vmatpush.msra.mxu0 %v1745
    %1982 = vmatpush.msra.mxu0 %v1744
    %1983 = vmatmul.f32.gmra.mxu0 %v1965
    %v1984 = vpop.f32.mrf.mxu0
    %v1985 = vadd.f32 %v1956, %v1984
    %1986 = vdwg.mxu0
    %v1988 = vperm.slane %v1759, 0
    %v1990 = vrot.slane %v1716, 7
    %v1991 = vrot.slane %v1717, 6
    %v1992 = vsel %vm1768, %v1991, %v1990
    %v1993 = vrot.slane %v1718, 5
    %v1994 = vsel %vm1771, %v1993, %v1992
    %v1995 = vrot.slane %v1719, 4
    %v1996 = vsel %vm1774, %v1995, %v1994
    %v1997 = vsel %vm408, %v1996, 0
    %1999 = vmatpush.msra.mxu0 0.0
    %2000 = vmatpush.msra.mxu0 0.0
    %2001 = vmatpush.msra.mxu0 0.0
    %2002 = vmatpush.msra.mxu0 0.0
    %2003 = vmatpush.msra.mxu0 0.0
    %2004 = vmatpush.msra.mxu0 0.0
    %2005 = vmatpush.msra.mxu0 0.0
    %2006 = vmatpush.msra.mxu0 0.0
    %2007 = vmatpush.msra.mxu0 0.0
    %2008 = vmatpush.msra.mxu0 0.0
    %2009 = vmatpush.msra.mxu0 0.0
    %2010 = vmatpush.msra.mxu0 0.0
    %2011 = vmatpush.msra.mxu0 %v1751
    %2012 = vmatpush.msra.mxu0 %v1750
    %2013 = vmatpush.msra.mxu0 %v1749
    %2014 = vmatpush.msra.mxu0 %v1748
    %2015 = vmatmul.f32.gmra.mxu0 %v1997
    %v2016 = vpop.f32.mrf.mxu0
    %v2017 = vadd.f32 %v1988, %v2016
    %2018 = vdwg.mxu0
    %v2020 = vrot.slane %v1796, 1
    %v2021 = vrot.slane %v1796, 2
    %v2022 = vrot.slane %v1796, 3
    %v2027 = vrot.slane %v1827, 1
    %v2028 = vrot.slane %v1827, 2
    %v2029 = vrot.slane %v1827, 3
    %v2031 = vrot.slane %v1858, 1
    %v2032 = vrot.slane %v1858, 2
    %v2033 = vrot.slane %v1858, 3
    %v2035 = vrot.slane %v1889, 1
    %v2036 = vrot.slane %v1889, 2
    %v2037 = vrot.slane %v1889, 3
    %v2039 = vrot.slane %v1921, 1
    %v2040 = vrot.slane %v1921, 2
    %v2041 = vrot.slane %v1921, 3
    %v2043 = vrot.slane %v1953, 1
    %v2044 = vrot.slane %v1953, 2
    %v2045 = vrot.slane %v1953, 3
    %v2047 = vrot.slane %v1985, 1
    %v2048 = vrot.slane %v1985, 2
    %v2049 = vrot.slane %v1985, 3
    %v2051 = vrot.slane %v2017, 1
    %v2052 = vrot.slane %v2017, 2
    %v2053 = vrot.slane %v2017, 3
    %v2054 = vperm.slane %v1827, 0
    %v2055 = vperm.slane %v2027, 0
    %v2056 = vperm.slane %v2028, 0
    %v2057 = vperm.slane %v2029, 0
    %v2062 = vperm.slane %v1858, 0
    %v2063 = vperm.slane %v2031, 0
    %v2064 = vperm.slane %v2032, 0
    %v2065 = vperm.slane %v2033, 0
    %v2070 = vperm.slane %v1889, 0
    %v2071 = vperm.slane %v2035, 0
    %v2072 = vperm.slane %v2036, 0
    %v2073 = vperm.slane %v2037, 0
    %v2078 = vperm.slane %v1921, 0
    %v2079 = vperm.slane %v2039, 0
    %v2080 = vperm.slane %v2040, 0
    %v2081 = vperm.slane %v2041, 0
    %v2086 = vperm.slane %v1953, 0
    %v2087 = vperm.slane %v2043, 0
    %v2088 = vperm.slane %v2044, 0
    %v2089 = vperm.slane %v2045, 0
    %v2094 = vperm.slane %v1985, 0
    %v2095 = vperm.slane %v2047, 0
    %v2096 = vperm.slane %v2048, 0
    %v2097 = vperm.slane %v2049, 0
    %v2102 = vperm.slane %v2017, 0
    %v2103 = vperm.slane %v2051, 0
    %v2104 = vperm.slane %v2052, 0
    %v2105 = vperm.slane %v2053, 0
    %v2110 = vsel %vm369, %v1796, %v2054
    %v2111 = vsel %vm369, %v2020, %v2055
    %v2112 = vsel %vm369, %v2021, %v2056
    %v2113 = vsel %vm369, %v2022, %v2057
    %v2114 = vsel %vm374, %v2110, %v2062
    %v2115 = vsel %vm374, %v2111, %v2063
    %v2116 = vsel %vm374, %v2112, %v2064
    %v2117 = vsel %vm374, %v2113, %v2065
    %v2118 = vsel %vm379, %v2114, %v2070
    %v2119 = vsel %vm379, %v2115, %v2071
    %v2120 = vsel %vm379, %v2116, %v2072
    %v2121 = vsel %vm379, %v2117, %v2073
    %v2122 = vsel %vm384, %v2118, %v2078
    %v2123 = vsel %vm384, %v2119, %v2079
    %v2124 = vsel %vm384, %v2120, %v2080
    %v2125 = vsel %vm384, %v2121, %v2081
    %v2126 = vsel %vm389, %v2122, %v2086
    %v2127 = vsel %vm389, %v2123, %v2087
    %v2128 = vsel %vm389, %v2124, %v2088
    %v2129 = vsel %vm389, %v2125, %v2089
    %v2130 = vsel %vm394, %v2126, %v2094
    %v2131 = vsel %vm394, %v2127, %v2095
    %v2132 = vsel %vm394, %v2128, %v2096
    %v2133 = vsel %vm394, %v2129, %v2097
    %v2134 = vsel %vm399, %v2130, %v2102
    %v2135 = vsel %vm399, %v2131, %v2103
    %v2136 = vsel %vm399, %v2132, %v2104
    %v2137 = vsel %vm399, %v2133, %v2105
    %v2138 = vld [vmem:[%s9] sm:$0xff]
    %v2139 = vld [vmem:[%s9 + $0x8] sm:$0xff]
    %v2141 = vsel %vm1554, %v2134, 0
    %v2144 = vsel %vm1554, %v2135, 0
    %v2147 = vsel %vm1554, %v2136, 0
    %v2150 = vsel %vm1554, %v2137, 0
    %2152 = vmatpush.msra.mxu0 0.0
    %2153 = vmatpush.msra.mxu0 0.0
    %2154 = vmatpush.msra.mxu0 0.0
    %2155 = vmatpush.msra.mxu0 0.0
    %2156 = vmatpush.msra.mxu0 0.0
    %2157 = vmatpush.msra.mxu0 0.0
    %2158 = vmatpush.msra.mxu0 0.0
    %2159 = vmatpush.msra.mxu0 0.0
    %2160 = vmatpush.msra.mxu0 0.0
    %2161 = vmatpush.msra.mxu0 0.0
    %2162 = vmatpush.msra.mxu0 0.0
    %2163 = vmatpush.msra.mxu0 0.0
    %2164 = vmatpush.msra.mxu0 0.0
    %2165 = vmatpush.msra.mxu0 0.0
    %2166 = vmatpush.msra.mxu0 %v2139
    %2167 = vmatpush.msra.mxu0 %v2138
    %2168 = vmatmul.f32.gmra.mxu0 %v2141
    %v2169 = vpop.f32.mrf.mxu0
    %v2170 = vadd.f32 0.0, %v2169
    %2171 = vmatmul.f32.gmra.mxu0 %v2144
    %v2172 = vpop.f32.mrf.mxu0
    %v2173 = vadd.f32 0.0, %v2172
    %2174 = vmatmul.f32.gmra.mxu0 %v2147
    %v2175 = vpop.f32.mrf.mxu0
    %v2176 = vadd.f32 0.0, %v2175
    %2177 = vmatmul.f32.gmra.mxu0 %v2150
    %v2178 = vpop.f32.mrf.mxu0
    %v2179 = vadd.f32 0.0, %v2178
    %2180 = vdwg.mxu0
    %2185 = vrot.lane.b32.xlu0 %v2170, 124
    %v2186 = vpop.permute.xlu0 %2185
    %2187 = vrot.lane.b32.xlu0 %v2173, 124
    %v2188 = vpop.permute.xlu0 %2187
    %2189 = vrot.lane.b32.xlu0 %v2176, 124
    %v2190 = vpop.permute.xlu0 %2189
    %2191 = vrot.lane.b32.xlu0 %v2179, 124
    %v2192 = vpop.permute.xlu0 %2191
    %2193 = vrot.lane.b32.xlu0 %v2170, 120
    %v2194 = vpop.permute.xlu0 %2193
    %2195 = vrot.lane.b32.xlu0 %v2173, 120
    %v2196 = vpop.permute.xlu0 %2195
    %2197 = vrot.lane.b32.xlu0 %v2176, 120
    %v2198 = vpop.permute.xlu0 %2197
    %2199 = vrot.lane.b32.xlu0 %v2179, 120
    %v2200 = vpop.permute.xlu0 %2199
    %2201 = vrot.lane.b32.xlu0 %v2170, 116
    %v2202 = vpop.permute.xlu0 %2201
    %2203 = vrot.lane.b32.xlu0 %v2173, 116
    %v2204 = vpop.permute.xlu0 %2203
    %2205 = vrot.lane.b32.xlu0 %v2176, 116
    %v2206 = vpop.permute.xlu0 %2205
    %2207 = vrot.lane.b32.xlu0 %v2179, 116
    %v2208 = vpop.permute.xlu0 %2207
    %2209 = vrot.lane.b32.xlu0 %v2170, 112
    %v2210 = vpop.permute.xlu0 %2209
    %vm2211 = vcmask 31744
    %v2212 = vsel %vm2211, %v2170, 0
    %v2214 = vsel %vm2211, %v2210, 0
    %2216 = vmatpush.xpose.msra.mxu0 0.0
    %2217 = vmatpush.xpose.msra.mxu0 0.0
    %2218 = vmatpush.xpose.msra.mxu0 0.0
    %2219 = vmatpush.xpose.msra.mxu0 0.0
    %2220 = vmatpush.xpose.msra.mxu0 0.0
    %2221 = vmatpush.xpose.msra.mxu0 0.0
    %2222 = vmatpush.xpose.msra.mxu0 0.0
    %2223 = vmatpush.xpose.msra.mxu0 0.0
    %2224 = vmatpush.xpose.msra.mxu0 0.0
    %2225 = vmatpush.xpose.msra.mxu0 0.0
    %2226 = vmatpush.xpose.msra.mxu0 0.0
    %2227 = vmatpush.xpose.msra.mxu0 0.0
    %2228 = vmatpush.xpose.msra.mxu0 0.0
    %2229 = vmatpush.xpose.msra.mxu0 0.0
    %2230 = vmatpush.xpose.msra.mxu0 0.0
    %2231 = vmatpush.xpose.msra.mxu0 %v2214
    %2232 = vmatmul.f32.gmra.mxu0 %v2212
    %v2233 = vpop.f32.mrf.mxu0
    %v2234 = vadd.f32 0.0, %v2233
    %2235 = vdwg.mxu0
    %2236 = vrot.lane.b32.xlu0 %v2186, 112
    %v2237 = vpop.permute.xlu0 %2236
    %v2238 = vsel %vm2211, %v2186, 0
    %v2240 = vsel %vm2211, %v2237, 0
    %2242 = vmatpush.xpose.msra.mxu0 0.0
    %2243 = vmatpush.xpose.msra.mxu0 0.0
    %2244 = vmatpush.xpose.msra.mxu0 0.0
    %2245 = vmatpush.xpose.msra.mxu0 0.0
    %2246 = vmatpush.xpose.msra.mxu0 0.0
    %2247 = vmatpush.xpose.msra.mxu0 0.0
    %2248 = vmatpush.xpose.msra.mxu0 0.0
    %2249 = vmatpush.xpose.msra.mxu0 0.0
    %2250 = vmatpush.xpose.msra.mxu0 0.0
    %2251 = vmatpush.xpose.msra.mxu0 0.0
    %2252 = vmatpush.xpose.msra.mxu0 0.0
    %2253 = vmatpush.xpose.msra.mxu0 0.0
    %2254 = vmatpush.xpose.msra.mxu0 0.0
    %2255 = vmatpush.xpose.msra.mxu0 0.0
    %2256 = vmatpush.xpose.msra.mxu0 0.0
    %2257 = vmatpush.xpose.msra.mxu0 %v2240
    %2258 = vmatmul.f32.gmra.mxu0 %v2238
    %v2259 = vpop.f32.mrf.mxu0
    %v2260 = vadd.f32 0.0, %v2259
    %2261 = vdwg.mxu0
    %2262 = vrot.lane.b32.xlu0 %v2194, 112
    %v2263 = vpop.permute.xlu0 %2262
    %v2264 = vsel %vm2211, %v2194, 0
    %v2266 = vsel %vm2211, %v2263, 0
    %2268 = vmatpush.xpose.msra.mxu0 0.0
    %2269 = vmatpush.xpose.msra.mxu0 0.0
    %2270 = vmatpush.xpose.msra.mxu0 0.0
    %2271 = vmatpush.xpose.msra.mxu0 0.0
    %2272 = vmatpush.xpose.msra.mxu0 0.0
    %2273 = vmatpush.xpose.msra.mxu0 0.0
    %2274 = vmatpush.xpose.msra.mxu0 0.0
    %2275 = vmatpush.xpose.msra.mxu0 0.0
    %2276 = vmatpush.xpose.msra.mxu0 0.0
    %2277 = vmatpush.xpose.msra.mxu0 0.0
    %2278 = vmatpush.xpose.msra.mxu0 0.0
    %2279 = vmatpush.xpose.msra.mxu0 0.0
    %2280 = vmatpush.xpose.msra.mxu0 0.0
    %2281 = vmatpush.xpose.msra.mxu0 0.0
    %2282 = vmatpush.xpose.msra.mxu0 0.0
    %2283 = vmatpush.xpose.msra.mxu0 %v2266
    %2284 = vmatmul.f32.gmra.mxu0 %v2264
    %v2285 = vpop.f32.mrf.mxu0
    %v2286 = vadd.f32 0.0, %v2285
    %2287 = vdwg.mxu0
    %2288 = vrot.lane.b32.xlu0 %v2202, 112
    %v2289 = vpop.permute.xlu0 %2288
    %v2290 = vsel %vm2211, %v2202, 0
    %v2292 = vsel %vm2211, %v2289, 0
    %2294 = vmatpush.xpose.msra.mxu0 0.0
    %2295 = vmatpush.xpose.msra.mxu0 0.0
    %2296 = vmatpush.xpose.msra.mxu0 0.0
    %2297 = vmatpush.xpose.msra.mxu0 0.0
    %2298 = vmatpush.xpose.msra.mxu0 0.0
    %2299 = vmatpush.xpose.msra.mxu0 0.0
    %2300 = vmatpush.xpose.msra.mxu0 0.0
    %2301 = vmatpush.xpose.msra.mxu0 0.0
    %2302 = vmatpush.xpose.msra.mxu0 0.0
    %2303 = vmatpush.xpose.msra.mxu0 0.0
    %2304 = vmatpush.xpose.msra.mxu0 0.0
    %2305 = vmatpush.xpose.msra.mxu0 0.0
    %2306 = vmatpush.xpose.msra.mxu0 0.0
    %2307 = vmatpush.xpose.msra.mxu0 0.0
    %2308 = vmatpush.xpose.msra.mxu0 0.0
    %2309 = vmatpush.xpose.msra.mxu0 %v2292
    %2310 = vmatmul.f32.gmra.mxu0 %v2290
    %v2311 = vpop.f32.mrf.mxu0
    %v2312 = vadd.f32 0.0, %v2311
    %2313 = vdwg.mxu0
    %2314 = vrot.lane.b32.xlu0 %v2173, 112
    %v2315 = vpop.permute.xlu0 %2314
    %v2316 = vsel %vm2211, %v2173, 0
    %v2318 = vsel %vm2211, %v2315, 0
    %2320 = vmatpush.xpose.msra.mxu0 0.0
    %2321 = vmatpush.xpose.msra.mxu0 0.0
    %2322 = vmatpush.xpose.msra.mxu0 0.0
    %2323 = vmatpush.xpose.msra.mxu0 0.0
    %2324 = vmatpush.xpose.msra.mxu0 0.0
    %2325 = vmatpush.xpose.msra.mxu0 0.0
    %2326 = vmatpush.xpose.msra.mxu0 0.0
    %2327 = vmatpush.xpose.msra.mxu0 0.0
    %2328 = vmatpush.xpose.msra.mxu0 0.0
    %2329 = vmatpush.xpose.msra.mxu0 0.0
    %2330 = vmatpush.xpose.msra.mxu0 0.0
    %2331 = vmatpush.xpose.msra.mxu0 0.0
    %2332 = vmatpush.xpose.msra.mxu0 0.0
    %2333 = vmatpush.xpose.msra.mxu0 0.0
    %2334 = vmatpush.xpose.msra.mxu0 0.0
    %2335 = vmatpush.xpose.msra.mxu0 %v2318
    %2336 = vmatmul.f32.gmra.mxu0 %v2316
    %v2337 = vpop.f32.mrf.mxu0
    %v2338 = vadd.f32 0.0, %v2337
    %2339 = vdwg.mxu0
    %2340 = vrot.lane.b32.xlu0 %v2188, 112
    %v2341 = vpop.permute.xlu0 %2340
    %v2342 = vsel %vm2211, %v2188, 0
    %v2344 = vsel %vm2211, %v2341, 0
    %2346 = vmatpush.xpose.msra.mxu0 0.0
    %2347 = vmatpush.xpose.msra.mxu0 0.0
    %2348 = vmatpush.xpose.msra.mxu0 0.0
    %2349 = vmatpush.xpose.msra.mxu0 0.0
    %2350 = vmatpush.xpose.msra.mxu0 0.0
    %2351 = vmatpush.xpose.msra.mxu0 0.0
    %2352 = vmatpush.xpose.msra.mxu0 0.0
    %2353 = vmatpush.xpose.msra.mxu0 0.0
    %2354 = vmatpush.xpose.msra.mxu0 0.0
    %2355 = vmatpush.xpose.msra.mxu0 0.0
    %2356 = vmatpush.xpose.msra.mxu0 0.0
    %2357 = vmatpush.xpose.msra.mxu0 0.0
    %2358 = vmatpush.xpose.msra.mxu0 0.0
    %2359 = vmatpush.xpose.msra.mxu0 0.0
    %2360 = vmatpush.xpose.msra.mxu0 0.0
    %2361 = vmatpush.xpose.msra.mxu0 %v2344
    %2362 = vmatmul.f32.gmra.mxu0 %v2342
    %v2363 = vpop.f32.mrf.mxu0
    %v2364 = vadd.f32 0.0, %v2363
    %2365 = vdwg.mxu0
    %2366 = vrot.lane.b32.xlu0 %v2196, 112
    %v2367 = vpop.permute.xlu0 %2366
    %v2368 = vsel %vm2211, %v2196, 0
    %v2370 = vsel %vm2211, %v2367, 0
    %2372 = vmatpush.xpose.msra.mxu0 0.0
    %2373 = vmatpush.xpose.msra.mxu0 0.0
    %2374 = vmatpush.xpose.msra.mxu0 0.0
    %2375 = vmatpush.xpose.msra.mxu0 0.0
    %2376 = vmatpush.xpose.msra.mxu0 0.0
    %2377 = vmatpush.xpose.msra.mxu0 0.0
    %2378 = vmatpush.xpose.msra.mxu0 0.0
    %2379 = vmatpush.xpose.msra.mxu0 0.0
    %2380 = vmatpush.xpose.msra.mxu0 0.0
    %2381 = vmatpush.xpose.msra.mxu0 0.0
    %2382 = vmatpush.xpose.msra.mxu0 0.0
    %2383 = vmatpush.xpose.msra.mxu0 0.0
    %2384 = vmatpush.xpose.msra.mxu0 0.0
    %2385 = vmatpush.xpose.msra.mxu0 0.0
    %2386 = vmatpush.xpose.msra.mxu0 0.0
    %2387 = vmatpush.xpose.msra.mxu0 %v2370
    %2388 = vmatmul.f32.gmra.mxu0 %v2368
    %v2389 = vpop.f32.mrf.mxu0
    %v2390 = vadd.f32 0.0, %v2389
    %2391 = vdwg.mxu0
    %2392 = vrot.lane.b32.xlu0 %v2204, 112
    %v2393 = vpop.permute.xlu0 %2392
    %v2394 = vsel %vm2211, %v2204, 0
    %v2396 = vsel %vm2211, %v2393, 0
    %2398 = vmatpush.xpose.msra.mxu0 0.0
    %2399 = vmatpush.xpose.msra.mxu0 0.0
    %2400 = vmatpush.xpose.msra.mxu0 0.0
    %2401 = vmatpush.xpose.msra.mxu0 0.0
    %2402 = vmatpush.xpose.msra.mxu0 0.0
    %2403 = vmatpush.xpose.msra.mxu0 0.0
    %2404 = vmatpush.xpose.msra.mxu0 0.0
    %2405 = vmatpush.xpose.msra.mxu0 0.0
    %2406 = vmatpush.xpose.msra.mxu0 0.0
    %2407 = vmatpush.xpose.msra.mxu0 0.0
    %2408 = vmatpush.xpose.msra.mxu0 0.0
    %2409 = vmatpush.xpose.msra.mxu0 0.0
    %2410 = vmatpush.xpose.msra.mxu0 0.0
    %2411 = vmatpush.xpose.msra.mxu0 0.0
    %2412 = vmatpush.xpose.msra.mxu0 0.0
    %2413 = vmatpush.xpose.msra.mxu0 %v2396
    %2414 = vmatmul.f32.gmra.mxu0 %v2394
    %v2415 = vpop.f32.mrf.mxu0
    %v2416 = vadd.f32 0.0, %v2415
    %2417 = vdwg.mxu0
    %2418 = vrot.lane.b32.xlu0 %v2176, 112
    %v2419 = vpop.permute.xlu0 %2418
    %v2420 = vsel %vm2211, %v2176, 0
    %v2422 = vsel %vm2211, %v2419, 0
    %2424 = vmatpush.xpose.msra.mxu0 0.0
    %2425 = vmatpush.xpose.msra.mxu0 0.0
    %2426 = vmatpush.xpose.msra.mxu0 0.0
    %2427 = vmatpush.xpose.msra.mxu0 0.0
    %2428 = vmatpush.xpose.msra.mxu0 0.0
    %2429 = vmatpush.xpose.msra.mxu0 0.0
    %2430 = vmatpush.xpose.msra.mxu0 0.0
    %2431 = vmatpush.xpose.msra.mxu0 0.0
    %2432 = vmatpush.xpose.msra.mxu0 0.0
    %2433 = vmatpush.xpose.msra.mxu0 0.0
    %2434 = vmatpush.xpose.msra.mxu0 0.0
    %2435 = vmatpush.xpose.msra.mxu0 0.0
    %2436 = vmatpush.xpose.msra.mxu0 0.0
    %2437 = vmatpush.xpose.msra.mxu0 0.0
    %2438 = vmatpush.xpose.msra.mxu0 0.0
    %2439 = vmatpush.xpose.msra.mxu0 %v2422
    %2440 = vmatmul.f32.gmra.mxu0 %v2420
    %v2441 = vpop.f32.mrf.mxu0
    %v2442 = vadd.f32 0.0, %v2441
    %2443 = vdwg.mxu0
    %2444 = vrot.lane.b32.xlu0 %v2190, 112
    %v2445 = vpop.permute.xlu0 %2444
    %v2446 = vsel %vm2211, %v2190, 0
    %v2448 = vsel %vm2211, %v2445, 0
    %2450 = vmatpush.xpose.msra.mxu0 0.0
    %2451 = vmatpush.xpose.msra.mxu0 0.0
    %2452 = vmatpush.xpose.msra.mxu0 0.0
    %2453 = vmatpush.xpose.msra.mxu0 0.0
    %2454 = vmatpush.xpose.msra.mxu0 0.0
    %2455 = vmatpush.xpose.msra.mxu0 0.0
    %2456 = vmatpush.xpose.msra.mxu0 0.0
    %2457 = vmatpush.xpose.msra.mxu0 0.0
    %2458 = vmatpush.xpose.msra.mxu0 0.0
    %2459 = vmatpush.xpose.msra.mxu0 0.0
    %2460 = vmatpush.xpose.msra.mxu0 0.0
    %2461 = vmatpush.xpose.msra.mxu0 0.0
    %2462 = vmatpush.xpose.msra.mxu0 0.0
    %2463 = vmatpush.xpose.msra.mxu0 0.0
    %2464 = vmatpush.xpose.msra.mxu0 0.0
    %2465 = vmatpush.xpose.msra.mxu0 %v2448
    %2466 = vmatmul.f32.gmra.mxu0 %v2446
    %v2467 = vpop.f32.mrf.mxu0
    %v2468 = vadd.f32 0.0, %v2467
    %2469 = vdwg.mxu0
    %2470 = vrot.lane.b32.xlu0 %v2198, 112
    %v2471 = vpop.permute.xlu0 %2470
    %v2472 = vsel %vm2211, %v2198, 0
    %v2474 = vsel %vm2211, %v2471, 0
    %2476 = vmatpush.xpose.msra.mxu0 0.0
    %2477 = vmatpush.xpose.msra.mxu0 0.0
    %2478 = vmatpush.xpose.msra.mxu0 0.0
    %2479 = vmatpush.xpose.msra.mxu0 0.0
    %2480 = vmatpush.xpose.msra.mxu0 0.0
    %2481 = vmatpush.xpose.msra.mxu0 0.0
    %2482 = vmatpush.xpose.msra.mxu0 0.0
    %2483 = vmatpush.xpose.msra.mxu0 0.0
    %2484 = vmatpush.xpose.msra.mxu0 0.0
    %2485 = vmatpush.xpose.msra.mxu0 0.0
    %2486 = vmatpush.xpose.msra.mxu0 0.0
    %2487 = vmatpush.xpose.msra.mxu0 0.0
    %2488 = vmatpush.xpose.msra.mxu0 0.0
    %2489 = vmatpush.xpose.msra.mxu0 0.0
    %2490 = vmatpush.xpose.msra.mxu0 0.0
    %2491 = vmatpush.xpose.msra.mxu0 %v2474
    %2492 = vmatmul.f32.gmra.mxu0 %v2472
    %v2493 = vpop.f32.mrf.mxu0
    %v2494 = vadd.f32 0.0, %v2493
    %2495 = vdwg.mxu0
    %2496 = vrot.lane.b32.xlu0 %v2206, 112
    %v2497 = vpop.permute.xlu0 %2496
    %v2498 = vsel %vm2211, %v2206, 0
    %v2500 = vsel %vm2211, %v2497, 0
    %2502 = vmatpush.xpose.msra.mxu0 0.0
    %2503 = vmatpush.xpose.msra.mxu0 0.0
    %2504 = vmatpush.xpose.msra.mxu0 0.0
    %2505 = vmatpush.xpose.msra.mxu0 0.0
    %2506 = vmatpush.xpose.msra.mxu0 0.0
    %2507 = vmatpush.xpose.msra.mxu0 0.0
    %2508 = vmatpush.xpose.msra.mxu0 0.0
    %2509 = vmatpush.xpose.msra.mxu0 0.0
    %2510 = vmatpush.xpose.msra.mxu0 0.0
    %2511 = vmatpush.xpose.msra.mxu0 0.0
    %2512 = vmatpush.xpose.msra.mxu0 0.0
    %2513 = vmatpush.xpose.msra.mxu0 0.0
    %2514 = vmatpush.xpose.msra.mxu0 0.0
    %2515 = vmatpush.xpose.msra.mxu0 0.0
    %2516 = vmatpush.xpose.msra.mxu0 0.0
    %2517 = vmatpush.xpose.msra.mxu0 %v2500
    %2518 = vmatmul.f32.gmra.mxu0 %v2498
    %v2519 = vpop.f32.mrf.mxu0
    %v2520 = vadd.f32 0.0, %v2519
    %2521 = vdwg.mxu0
    %2522 = vrot.lane.b32.xlu0 %v2179, 112
    %v2523 = vpop.permute.xlu0 %2522
    %v2524 = vsel %vm2211, %v2179, 0
    %v2526 = vsel %vm2211, %v2523, 0
    %2528 = vmatpush.xpose.msra.mxu0 0.0
    %2529 = vmatpush.xpose.msra.mxu0 0.0
    %2530 = vmatpush.xpose.msra.mxu0 0.0
    %2531 = vmatpush.xpose.msra.mxu0 0.0
    %2532 = vmatpush.xpose.msra.mxu0 0.0
    %2533 = vmatpush.xpose.msra.mxu0 0.0
    %2534 = vmatpush.xpose.msra.mxu0 0.0
    %2535 = vmatpush.xpose.msra.mxu0 0.0
    %2536 = vmatpush.xpose.msra.mxu0 0.0
    %2537 = vmatpush.xpose.msra.mxu0 0.0
    %2538 = vmatpush.xpose.msra.mxu0 0.0
    %2539 = vmatpush.xpose.msra.mxu0 0.0
    %2540 = vmatpush.xpose.msra.mxu0 0.0
    %2541 = vmatpush.xpose.msra.mxu0 0.0
    %2542 = vmatpush.xpose.msra.mxu0 0.0
    %2543 = vmatpush.xpose.msra.mxu0 %v2526
    %2544 = vmatmul.f32.gmra.mxu0 %v2524
    %v2545 = vpop.f32.mrf.mxu0
    %v2546 = vadd.f32 0.0, %v2545
    %2547 = vdwg.mxu0
    %2548 = vrot.lane.b32.xlu0 %v2192, 112
    %v2549 = vpop.permute.xlu0 %2548
    %v2550 = vsel %vm2211, %v2192, 0
    %v2552 = vsel %vm2211, %v2549, 0
    %2554 = vmatpush.xpose.msra.mxu0 0.0
    %2555 = vmatpush.xpose.msra.mxu0 0.0
    %2556 = vmatpush.xpose.msra.mxu0 0.0
    %2557 = vmatpush.xpose.msra.mxu0 0.0
    %2558 = vmatpush.xpose.msra.mxu0 0.0
    %2559 = vmatpush.xpose.msra.mxu0 0.0
    %2560 = vmatpush.xpose.msra.mxu0 0.0
    %2561 = vmatpush.xpose.msra.mxu0 0.0
    %2562 = vmatpush.xpose.msra.mxu0 0.0
    %2563 = vmatpush.xpose.msra.mxu0 0.0
    %2564 = vmatpush.xpose.msra.mxu0 0.0
    %2565 = vmatpush.xpose.msra.mxu0 0.0
    %2566 = vmatpush.xpose.msra.mxu0 0.0
    %2567 = vmatpush.xpose.msra.mxu0 0.0
    %2568 = vmatpush.xpose.msra.mxu0 0.0
    %2569 = vmatpush.xpose.msra.mxu0 %v2552
    %2570 = vmatmul.f32.gmra.mxu0 %v2550
    %v2571 = vpop.f32.mrf.mxu0
    %v2572 = vadd.f32 0.0, %v2571
    %2573 = vdwg.mxu0
    %2574 = vrot.lane.b32.xlu0 %v2200, 112
    %v2575 = vpop.permute.xlu0 %2574
    %v2576 = vsel %vm2211, %v2200, 0
    %v2578 = vsel %vm2211, %v2575, 0
    %2580 = vmatpush.xpose.msra.mxu0 0.0
    %2581 = vmatpush.xpose.msra.mxu0 0.0
    %2582 = vmatpush.xpose.msra.mxu0 0.0
    %2583 = vmatpush.xpose.msra.mxu0 0.0
    %2584 = vmatpush.xpose.msra.mxu0 0.0
    %2585 = vmatpush.xpose.msra.mxu0 0.0
    %2586 = vmatpush.xpose.msra.mxu0 0.0
    %2587 = vmatpush.xpose.msra.mxu0 0.0
    %2588 = vmatpush.xpose.msra.mxu0 0.0
    %2589 = vmatpush.xpose.msra.mxu0 0.0
    %2590 = vmatpush.xpose.msra.mxu0 0.0
    %2591 = vmatpush.xpose.msra.mxu0 0.0
    %2592 = vmatpush.xpose.msra.mxu0 0.0
    %2593 = vmatpush.xpose.msra.mxu0 0.0
    %2594 = vmatpush.xpose.msra.mxu0 0.0
    %2595 = vmatpush.xpose.msra.mxu0 %v2578
    %2596 = vmatmul.f32.gmra.mxu0 %v2576
    %v2597 = vpop.f32.mrf.mxu0
    %v2598 = vadd.f32 0.0, %v2597
    %2599 = vdwg.mxu0
    %2600 = vrot.lane.b32.xlu0 %v2208, 112
    %v2601 = vpop.permute.xlu0 %2600
    %v2602 = vsel %vm2211, %v2208, 0
    %v2604 = vsel %vm2211, %v2601, 0
    %2606 = vmatpush.xpose.msra.mxu0 0.0
    %2607 = vmatpush.xpose.msra.mxu0 0.0
    %2608 = vmatpush.xpose.msra.mxu0 0.0
    %2609 = vmatpush.xpose.msra.mxu0 0.0
    %2610 = vmatpush.xpose.msra.mxu0 0.0
    %2611 = vmatpush.xpose.msra.mxu0 0.0
    %2612 = vmatpush.xpose.msra.mxu0 0.0
    %2613 = vmatpush.xpose.msra.mxu0 0.0
    %2614 = vmatpush.xpose.msra.mxu0 0.0
    %2615 = vmatpush.xpose.msra.mxu0 0.0
    %2616 = vmatpush.xpose.msra.mxu0 0.0
    %2617 = vmatpush.xpose.msra.mxu0 0.0
    %2618 = vmatpush.xpose.msra.mxu0 0.0
    %2619 = vmatpush.xpose.msra.mxu0 0.0
    %2620 = vmatpush.xpose.msra.mxu0 0.0
    %2621 = vmatpush.xpose.msra.mxu0 %v2604
    %2622 = vmatmul.f32.gmra.mxu0 %v2602
    %v2623 = vpop.f32.mrf.mxu0
    %v2624 = vadd.f32 0.0, %v2623
    %2625 = vdwg.mxu0
    %v2626 = vmul.f32 %v2234, 0.5
    %v2627 = vmul.f32 %v2260, 0.5
    %v2628 = vmul.f32 %v2286, 0.5
    %v2629 = vmul.f32 %v2312, 0.5
    %v2630 = vmul.f32 %v2338, 0.5
    %v2631 = vmul.f32 %v2364, 0.5
    %v2632 = vmul.f32 %v2390, 0.5
    %v2633 = vmul.f32 %v2416, 0.5
    %v2634 = vmul.f32 %v2442, 0.5
    %v2635 = vmul.f32 %v2468, 0.5
    %v2636 = vmul.f32 %v2494, 0.5
    %v2637 = vmul.f32 %v2520, 0.5
    %v2638 = vmul.f32 %v2546, 0.5
    %v2639 = vmul.f32 %v2572, 0.5
    %v2640 = vmul.f32 %v2598, 0.5
    %v2641 = vmul.f32 %v2624, 0.5
    %v2642 = vsel %vm65, %v2626, -inf
    %2643 = vmax.xlane.f32.xlu0 %v2642
    %v2644 = vpop.xlane.xlu0 %2643
    %v2645 = vsel %vm65, %v2627, -inf
    %2646 = vmax.xlane.f32.xlu0 %v2645
    %v2647 = vpop.xlane.xlu0 %2646
    %v2648 = vsel %vm65, %v2628, -inf
    %2649 = vmax.xlane.f32.xlu0 %v2648
    %v2650 = vpop.xlane.xlu0 %2649
    %v2651 = vsel %vm65, %v2629, -inf
    %2652 = vmax.xlane.f32.xlu0 %v2651
    %v2653 = vpop.xlane.xlu0 %2652
    %v2654 = vsel %vm65, %v2630, -inf
    %2655 = vmax.xlane.f32.xlu0 %v2654
    %v2656 = vpop.xlane.xlu0 %2655
    %v2657 = vsel %vm65, %v2631, -inf
    %2658 = vmax.xlane.f32.xlu0 %v2657
    %v2659 = vpop.xlane.xlu0 %2658
    %v2660 = vsel %vm65, %v2632, -inf
    %2661 = vmax.xlane.f32.xlu0 %v2660
    %v2662 = vpop.xlane.xlu0 %2661
    %v2663 = vsel %vm65, %v2633, -inf
    %2664 = vmax.xlane.f32.xlu0 %v2663
    %v2665 = vpop.xlane.xlu0 %2664
    %v2666 = vsel %vm65, %v2634, -inf
    %2667 = vmax.xlane.f32.xlu0 %v2666
    %v2668 = vpop.xlane.xlu0 %2667
    %v2669 = vsel %vm65, %v2635, -inf
    %2670 = vmax.xlane.f32.xlu0 %v2669
    %v2671 = vpop.xlane.xlu0 %2670
    %v2672 = vsel %vm65, %v2636, -inf
    %2673 = vmax.xlane.f32.xlu0 %v2672
    %v2674 = vpop.xlane.xlu0 %2673
    %v2675 = vsel %vm65, %v2637, -inf
    %2676 = vmax.xlane.f32.xlu0 %v2675
    %v2677 = vpop.xlane.xlu0 %2676
    %v2678 = vsel %vm65, %v2638, -inf
    %2679 = vmax.xlane.f32.xlu0 %v2678
    %v2680 = vpop.xlane.xlu0 %2679
    %v2681 = vsel %vm65, %v2639, -inf
    %2682 = vmax.xlane.f32.xlu0 %v2681
    %v2683 = vpop.xlane.xlu0 %2682
    %v2684 = vsel %vm65, %v2640, -inf
    %2685 = vmax.xlane.f32.xlu0 %v2684
    %v2686 = vpop.xlane.xlu0 %2685
    %v2687 = vsel %vm65, %v2641, -inf
    %2688 = vmax.xlane.f32.xlu0 %v2687
    %v2689 = vpop.xlane.xlu0 %2688
    %v2690 = vsub.f32 %v2626, %v2644
    %v2691 = vsub.f32 %v2627, %v2647
    %v2692 = vsub.f32 %v2628, %v2650
    %v2693 = vsub.f32 %v2629, %v2653
    %v2694 = vsub.f32 %v2630, %v2656
    %v2695 = vsub.f32 %v2631, %v2659
    %v2696 = vsub.f32 %v2632, %v2662
    %v2697 = vsub.f32 %v2633, %v2665
    %v2698 = vsub.f32 %v2634, %v2668
    %v2699 = vsub.f32 %v2635, %v2671
    %v2700 = vsub.f32 %v2636, %v2674
    %v2701 = vsub.f32 %v2637, %v2677
    %v2702 = vsub.f32 %v2638, %v2680
    %v2703 = vsub.f32 %v2639, %v2683
    %v2704 = vsub.f32 %v2640, %v2686
    %v2705 = vsub.f32 %v2641, %v2689
    %v2706 = vmul.f32 %v2690, 1.442695
    %v2707 = vpow.pop %v2706
    %v2708 = vmul.f32 %v2691, 1.442695
    %v2709 = vpow.pop %v2708
    %v2710 = vmul.f32 %v2692, 1.442695
    %v2711 = vpow.pop %v2710
    %v2712 = vmul.f32 %v2693, 1.442695
    %v2713 = vpow.pop %v2712
    %v2714 = vmul.f32 %v2694, 1.442695
    %v2715 = vpow.pop %v2714
    %v2716 = vmul.f32 %v2695, 1.442695
    %v2717 = vpow.pop %v2716
    %v2718 = vmul.f32 %v2696, 1.442695
    %v2719 = vpow.pop %v2718
    %v2720 = vmul.f32 %v2697, 1.442695
    %v2721 = vpow.pop %v2720
    %v2722 = vmul.f32 %v2698, 1.442695
    %v2723 = vpow.pop %v2722
    %v2724 = vmul.f32 %v2699, 1.442695
    %v2725 = vpow.pop %v2724
    %v2726 = vmul.f32 %v2700, 1.442695
    %v2727 = vpow.pop %v2726
    %v2728 = vmul.f32 %v2701, 1.442695
    %v2729 = vpow.pop %v2728
    %v2730 = vmul.f32 %v2702, 1.442695
    %v2731 = vpow.pop %v2730
    %v2732 = vmul.f32 %v2703, 1.442695
    %v2733 = vpow.pop %v2732
    %v2734 = vmul.f32 %v2704, 1.442695
    %v2735 = vpow.pop %v2734
    %v2736 = vmul.f32 %v2705, 1.442695
    %v2737 = vpow.pop %v2736
    %v2738 = vsel %vm65, %v2707, 0.0
    %2739 = vadd.xlane.f32.xlu0 %v2738
    %v2740 = vpop.xlane.xlu0 %2739
    %v2741 = vsel %vm65, %v2709, 0.0
    %2742 = vadd.xlane.f32.xlu0 %v2741
    %v2743 = vpop.xlane.xlu0 %2742
    %v2744 = vsel %vm65, %v2711, 0.0
    %2745 = vadd.xlane.f32.xlu0 %v2744
    %v2746 = vpop.xlane.xlu0 %2745
    %v2747 = vsel %vm65, %v2713, 0.0
    %2748 = vadd.xlane.f32.xlu0 %v2747
    %v2749 = vpop.xlane.xlu0 %2748
    %v2750 = vsel %vm65, %v2715, 0.0
    %2751 = vadd.xlane.f32.xlu0 %v2750
    %v2752 = vpop.xlane.xlu0 %2751
    %v2753 = vsel %vm65, %v2717, 0.0
    %2754 = vadd.xlane.f32.xlu0 %v2753
    %v2755 = vpop.xlane.xlu0 %2754
    %v2756 = vsel %vm65, %v2719, 0.0
    %2757 = vadd.xlane.f32.xlu0 %v2756
    %v2758 = vpop.xlane.xlu0 %2757
    %v2759 = vsel %vm65, %v2721, 0.0
    %2760 = vadd.xlane.f32.xlu0 %v2759
    %v2761 = vpop.xlane.xlu0 %2760
    %v2762 = vsel %vm65, %v2723, 0.0
    %2763 = vadd.xlane.f32.xlu0 %v2762
    %v2764 = vpop.xlane.xlu0 %2763
    %v2765 = vsel %vm65, %v2725, 0.0
    %2766 = vadd.xlane.f32.xlu0 %v2765
    %v2767 = vpop.xlane.xlu0 %2766
    %v2768 = vsel %vm65, %v2727, 0.0
    %2769 = vadd.xlane.f32.xlu0 %v2768
    %v2770 = vpop.xlane.xlu0 %2769
    %v2771 = vsel %vm65, %v2729, 0.0
    %2772 = vadd.xlane.f32.xlu0 %v2771
    %v2773 = vpop.xlane.xlu0 %2772
    %v2774 = vsel %vm65, %v2731, 0.0
    %2775 = vadd.xlane.f32.xlu0 %v2774
    %v2776 = vpop.xlane.xlu0 %2775
    %v2777 = vsel %vm65, %v2733, 0.0
    %2778 = vadd.xlane.f32.xlu0 %v2777
    %v2779 = vpop.xlane.xlu0 %2778
    %v2780 = vsel %vm65, %v2735, 0.0
    %2781 = vadd.xlane.f32.xlu0 %v2780
    %v2782 = vpop.xlane.xlu0 %2781
    %v2783 = vsel %vm65, %v2737, 0.0
    %2784 = vadd.xlane.f32.xlu0 %v2783
    %v2785 = vpop.xlane.xlu0 %2784
    %v2786 = vrcp.pop %v2740
    %v2787 = vrcp.pop %v2743
    %v2788 = vrcp.pop %v2746
    %v2789 = vrcp.pop %v2749
    %v2790 = vrcp.pop %v2752
    %v2791 = vrcp.pop %v2755
    %v2792 = vrcp.pop %v2758
    %v2793 = vrcp.pop %v2761
    %v2794 = vrcp.pop %v2764
    %v2795 = vrcp.pop %v2767
    %v2796 = vrcp.pop %v2770
    %v2797 = vrcp.pop %v2773
    %v2798 = vrcp.pop %v2776
    %v2799 = vrcp.pop %v2779
    %v2800 = vrcp.pop %v2782
    %v2801 = vrcp.pop %v2785
    %v2802 = vmul.f32 %v2707, %v2786
    %v2803 = vmul.f32 %v2709, %v2787
    %v2804 = vmul.f32 %v2711, %v2788
    %v2805 = vmul.f32 %v2713, %v2789
    %v2806 = vmul.f32 %v2715, %v2790
    %v2807 = vmul.f32 %v2717, %v2791
    %v2808 = vmul.f32 %v2719, %v2792
    %v2809 = vmul.f32 %v2721, %v2793
    %v2810 = vmul.f32 %v2723, %v2794
    %v2811 = vmul.f32 %v2725, %v2795
    %v2812 = vmul.f32 %v2727, %v2796
    %v2813 = vmul.f32 %v2729, %v2797
    %v2814 = vmul.f32 %v2731, %v2798
    %v2815 = vmul.f32 %v2733, %v2799
    %v2816 = vmul.f32 %v2735, %v2800
    %v2817 = vmul.f32 %v2737, %v2801
    %2818 = vrot.lane.b32.xlu0 %v2170, 96
    %v2819 = vpop.permute.xlu0 %2818
    %v2822 = vsel %vm65, %v2802, 0
    %2824 = vmatpush.msra.mxu0 0.0
    %2825 = vmatpush.msra.mxu0 0.0
    %2826 = vmatpush.msra.mxu0 0.0
    %2827 = vmatpush.msra.mxu0 0.0
    %2828 = vmatpush.msra.mxu0 0.0
    %2829 = vmatpush.msra.mxu0 0.0
    %2830 = vmatpush.msra.mxu0 0.0
    %2831 = vmatpush.msra.mxu0 0.0
    %2832 = vmatpush.msra.mxu0 0.0
    %2833 = vmatpush.msra.mxu0 0.0
    %2834 = vmatpush.msra.mxu0 0.0
    %2835 = vmatpush.msra.mxu0 0.0
    %2836 = vmatpush.msra.mxu0 0.0
    %2837 = vmatpush.msra.mxu0 0.0
    %2838 = vmatpush.msra.mxu0 0.0
    %2839 = vmatpush.msra.mxu0 %v2819
    %2840 = vmatmul.f32.gmra.mxu0 %v2822
    %v2841 = vpop.f32.mrf.mxu0
    %v2842 = vadd.f32 0.0, %v2841
    %2843 = vdwg.mxu0
    %2844 = vrot.lane.b32.xlu0 %v2186, 96
    %v2845 = vpop.permute.xlu0 %2844
    %v2848 = vsel %vm65, %v2803, 0
    %2850 = vmatpush.msra.mxu0 0.0
    %2851 = vmatpush.msra.mxu0 0.0
    %2852 = vmatpush.msra.mxu0 0.0
    %2853 = vmatpush.msra.mxu0 0.0
    %2854 = vmatpush.msra.mxu0 0.0
    %2855 = vmatpush.msra.mxu0 0.0
    %2856 = vmatpush.msra.mxu0 0.0
    %2857 = vmatpush.msra.mxu0 0.0
    %2858 = vmatpush.msra.mxu0 0.0
    %2859 = vmatpush.msra.mxu0 0.0
    %2860 = vmatpush.msra.mxu0 0.0
    %2861 = vmatpush.msra.mxu0 0.0
    %2862 = vmatpush.msra.mxu0 0.0
    %2863 = vmatpush.msra.mxu0 0.0
    %2864 = vmatpush.msra.mxu0 0.0
    %2865 = vmatpush.msra.mxu0 %v2845
    %2866 = vmatmul.f32.gmra.mxu0 %v2848
    %v2867 = vpop.f32.mrf.mxu0
    %v2868 = vadd.f32 0.0, %v2867
    %2869 = vdwg.mxu0
    %2870 = vrot.lane.b32.xlu0 %v2194, 96
    %v2871 = vpop.permute.xlu0 %2870
    %v2874 = vsel %vm65, %v2804, 0
    %2876 = vmatpush.msra.mxu0 0.0
    %2877 = vmatpush.msra.mxu0 0.0
    %2878 = vmatpush.msra.mxu0 0.0
    %2879 = vmatpush.msra.mxu0 0.0
    %2880 = vmatpush.msra.mxu0 0.0
    %2881 = vmatpush.msra.mxu0 0.0
    %2882 = vmatpush.msra.mxu0 0.0
    %2883 = vmatpush.msra.mxu0 0.0
    %2884 = vmatpush.msra.mxu0 0.0
    %2885 = vmatpush.msra.mxu0 0.0
    %2886 = vmatpush.msra.mxu0 0.0
    %2887 = vmatpush.msra.mxu0 0.0
    %2888 = vmatpush.msra.mxu0 0.0
    %2889 = vmatpush.msra.mxu0 0.0
    %2890 = vmatpush.msra.mxu0 0.0
    %2891 = vmatpush.msra.mxu0 %v2871
    %2892 = vmatmul.f32.gmra.mxu0 %v2874
    %v2893 = vpop.f32.mrf.mxu0
    %v2894 = vadd.f32 0.0, %v2893
    %2895 = vdwg.mxu0
    %2896 = vrot.lane.b32.xlu0 %v2202, 96
    %v2897 = vpop.permute.xlu0 %2896
    %v2900 = vsel %vm65, %v2805, 0
    %2902 = vmatpush.msra.mxu0 0.0
    %2903 = vmatpush.msra.mxu0 0.0
    %2904 = vmatpush.msra.mxu0 0.0
    %2905 = vmatpush.msra.mxu0 0.0
    %2906 = vmatpush.msra.mxu0 0.0
    %2907 = vmatpush.msra.mxu0 0.0
    %2908 = vmatpush.msra.mxu0 0.0
    %2909 = vmatpush.msra.mxu0 0.0
    %2910 = vmatpush.msra.mxu0 0.0
    %2911 = vmatpush.msra.mxu0 0.0
    %2912 = vmatpush.msra.mxu0 0.0
    %2913 = vmatpush.msra.mxu0 0.0
    %2914 = vmatpush.msra.mxu0 0.0
    %2915 = vmatpush.msra.mxu0 0.0
    %2916 = vmatpush.msra.mxu0 0.0
    %2917 = vmatpush.msra.mxu0 %v2897
    %2918 = vmatmul.f32.gmra.mxu0 %v2900
    %v2919 = vpop.f32.mrf.mxu0
    %v2920 = vadd.f32 0.0, %v2919
    %2921 = vdwg.mxu0
    %2922 = vrot.lane.b32.xlu0 %v2173, 96
    %v2923 = vpop.permute.xlu0 %2922
    %v2926 = vsel %vm65, %v2806, 0
    %2928 = vmatpush.msra.mxu0 0.0
    %2929 = vmatpush.msra.mxu0 0.0
    %2930 = vmatpush.msra.mxu0 0.0
    %2931 = vmatpush.msra.mxu0 0.0
    %2932 = vmatpush.msra.mxu0 0.0
    %2933 = vmatpush.msra.mxu0 0.0
    %2934 = vmatpush.msra.mxu0 0.0
    %2935 = vmatpush.msra.mxu0 0.0
    %2936 = vmatpush.msra.mxu0 0.0
    %2937 = vmatpush.msra.mxu0 0.0
    %2938 = vmatpush.msra.mxu0 0.0
    %2939 = vmatpush.msra.mxu0 0.0
    %2940 = vmatpush.msra.mxu0 0.0
    %2941 = vmatpush.msra.mxu0 0.0
    %2942 = vmatpush.msra.mxu0 0.0
    %2943 = vmatpush.msra.mxu0 %v2923
    %2944 = vmatmul.f32.gmra.mxu0 %v2926
    %v2945 = vpop.f32.mrf.mxu0
    %v2946 = vadd.f32 0.0, %v2945
    %2947 = vdwg.mxu0
    %2948 = vrot.lane.b32.xlu0 %v2188, 96
    %v2949 = vpop.permute.xlu0 %2948
    %v2952 = vsel %vm65, %v2807, 0
    %2954 = vmatpush.msra.mxu0 0.0
    %2955 = vmatpush.msra.mxu0 0.0
    %2956 = vmatpush.msra.mxu0 0.0
    %2957 = vmatpush.msra.mxu0 0.0
    %2958 = vmatpush.msra.mxu0 0.0
    %2959 = vmatpush.msra.mxu0 0.0
    %2960 = vmatpush.msra.mxu0 0.0
    %2961 = vmatpush.msra.mxu0 0.0
    %2962 = vmatpush.msra.mxu0 0.0
    %2963 = vmatpush.msra.mxu0 0.0
    %2964 = vmatpush.msra.mxu0 0.0
    %2965 = vmatpush.msra.mxu0 0.0
    %2966 = vmatpush.msra.mxu0 0.0
    %2967 = vmatpush.msra.mxu0 0.0
    %2968 = vmatpush.msra.mxu0 0.0
    %2969 = vmatpush.msra.mxu0 %v2949
    %2970 = vmatmul.f32.gmra.mxu0 %v2952
    %v2971 = vpop.f32.mrf.mxu0
    %v2972 = vadd.f32 0.0, %v2971
    %2973 = vdwg.mxu0
    %2974 = vrot.lane.b32.xlu0 %v2196, 96
    %v2975 = vpop.permute.xlu0 %2974
    %v2978 = vsel %vm65, %v2808, 0
    %2980 = vmatpush.msra.mxu0 0.0
    %2981 = vmatpush.msra.mxu0 0.0
    %2982 = vmatpush.msra.mxu0 0.0
    %2983 = vmatpush.msra.mxu0 0.0
    %2984 = vmatpush.msra.mxu0 0.0
    %2985 = vmatpush.msra.mxu0 0.0
    %2986 = vmatpush.msra.mxu0 0.0
    %2987 = vmatpush.msra.mxu0 0.0
    %2988 = vmatpush.msra.mxu0 0.0
    %2989 = vmatpush.msra.mxu0 0.0
    %2990 = vmatpush.msra.mxu0 0.0
    %2991 = vmatpush.msra.mxu0 0.0
    %2992 = vmatpush.msra.mxu0 0.0
    %2993 = vmatpush.msra.mxu0 0.0
    %2994 = vmatpush.msra.mxu0 0.0
    %2995 = vmatpush.msra.mxu0 %v2975
    %2996 = vmatmul.f32.gmra.mxu0 %v2978
    %v2997 = vpop.f32.mrf.mxu0
    %v2998 = vadd.f32 0.0, %v2997
    %2999 = vdwg.mxu0
    %3000 = vrot.lane.b32.xlu0 %v2204, 96
    %v3001 = vpop.permute.xlu0 %3000
    %v3004 = vsel %vm65, %v2809, 0
    %3006 = vmatpush.msra.mxu0 0.0
    %3007 = vmatpush.msra.mxu0 0.0
    %3008 = vmatpush.msra.mxu0 0.0
    %3009 = vmatpush.msra.mxu0 0.0
    %3010 = vmatpush.msra.mxu0 0.0
    %3011 = vmatpush.msra.mxu0 0.0
    %3012 = vmatpush.msra.mxu0 0.0
    %3013 = vmatpush.msra.mxu0 0.0
    %3014 = vmatpush.msra.mxu0 0.0
    %3015 = vmatpush.msra.mxu0 0.0
    %3016 = vmatpush.msra.mxu0 0.0
    %3017 = vmatpush.msra.mxu0 0.0
    %3018 = vmatpush.msra.mxu0 0.0
    %3019 = vmatpush.msra.mxu0 0.0
    %3020 = vmatpush.msra.mxu0 0.0
    %3021 = vmatpush.msra.mxu0 %v3001
    %3022 = vmatmul.f32.gmra.mxu0 %v3004
    %v3023 = vpop.f32.mrf.mxu0
    %v3024 = vadd.f32 0.0, %v3023
    %3025 = vdwg.mxu0
    %3026 = vrot.lane.b32.xlu0 %v2176, 96
    %v3027 = vpop.permute.xlu0 %3026
    %v3030 = vsel %vm65, %v2810, 0
    %3032 = vmatpush.msra.mxu0 0.0
    %3033 = vmatpush.msra.mxu0 0.0
    %3034 = vmatpush.msra.mxu0 0.0
    %3035 = vmatpush.msra.mxu0 0.0
    %3036 = vmatpush.msra.mxu0 0.0
    %3037 = vmatpush.msra.mxu0 0.0
    %3038 = vmatpush.msra.mxu0 0.0
    %3039 = vmatpush.msra.mxu0 0.0
    %3040 = vmatpush.msra.mxu0 0.0
    %3041 = vmatpush.msra.mxu0 0.0
    %3042 = vmatpush.msra.mxu0 0.0
    %3043 = vmatpush.msra.mxu0 0.0
    %3044 = vmatpush.msra.mxu0 0.0
    %3045 = vmatpush.msra.mxu0 0.0
    %3046 = vmatpush.msra.mxu0 0.0
    %3047 = vmatpush.msra.mxu0 %v3027
    %3048 = vmatmul.f32.gmra.mxu0 %v3030
    %v3049 = vpop.f32.mrf.mxu0
    %v3050 = vadd.f32 0.0, %v3049
    %3051 = vdwg.mxu0
    %3052 = vrot.lane.b32.xlu0 %v2190, 96
    %v3053 = vpop.permute.xlu0 %3052
    %v3056 = vsel %vm65, %v2811, 0
    %3058 = vmatpush.msra.mxu0 0.0
    %3059 = vmatpush.msra.mxu0 0.0
    %3060 = vmatpush.msra.mxu0 0.0
    %3061 = vmatpush.msra.mxu0 0.0
    %3062 = vmatpush.msra.mxu0 0.0
    %3063 = vmatpush.msra.mxu0 0.0
    %3064 = vmatpush.msra.mxu0 0.0
    %3065 = vmatpush.msra.mxu0 0.0
    %3066 = vmatpush.msra.mxu0 0.0
    %3067 = vmatpush.msra.mxu0 0.0
    %3068 = vmatpush.msra.mxu0 0.0
    %3069 = vmatpush.msra.mxu0 0.0
    %3070 = vmatpush.msra.mxu0 0.0
    %3071 = vmatpush.msra.mxu0 0.0
    %3072 = vmatpush.msra.mxu0 0.0
    %3073 = vmatpush.msra.mxu0 %v3053
    %3074 = vmatmul.f32.gmra.mxu0 %v3056
    %v3075 = vpop.f32.mrf.mxu0
    %v3076 = vadd.f32 0.0, %v3075
    %3077 = vdwg.mxu0
    %3078 = vrot.lane.b32.xlu0 %v2198, 96
    %v3079 = vpop.permute.xlu0 %3078
    %v3082 = vsel %vm65, %v2812, 0
    %3084 = vmatpush.msra.mxu0 0.0
    %3085 = vmatpush.msra.mxu0 0.0
    %3086 = vmatpush.msra.mxu0 0.0
    %3087 = vmatpush.msra.mxu0 0.0
    %3088 = vmatpush.msra.mxu0 0.0
    %3089 = vmatpush.msra.mxu0 0.0
    %3090 = vmatpush.msra.mxu0 0.0
    %3091 = vmatpush.msra.mxu0 0.0
    %3092 = vmatpush.msra.mxu0 0.0
    %3093 = vmatpush.msra.mxu0 0.0
    %3094 = vmatpush.msra.mxu0 0.0
    %3095 = vmatpush.msra.mxu0 0.0
    %3096 = vmatpush.msra.mxu0 0.0
    %3097 = vmatpush.msra.mxu0 0.0
    %3098 = vmatpush.msra.mxu0 0.0
    %3099 = vmatpush.msra.mxu0 %v3079
    %3100 = vmatmul.f32.gmra.mxu0 %v3082
    %v3101 = vpop.f32.mrf.mxu0
    %v3102 = vadd.f32 0.0, %v3101
    %3103 = vdwg.mxu0
    %3104 = vrot.lane.b32.xlu0 %v2206, 96
    %v3105 = vpop.permute.xlu0 %3104
    %v3108 = vsel %vm65, %v2813, 0
    %3110 = vmatpush.msra.mxu0 0.0
    %3111 = vmatpush.msra.mxu0 0.0
    %3112 = vmatpush.msra.mxu0 0.0
    %3113 = vmatpush.msra.mxu0 0.0
    %3114 = vmatpush.msra.mxu0 0.0
    %3115 = vmatpush.msra.mxu0 0.0
    %3116 = vmatpush.msra.mxu0 0.0
    %3117 = vmatpush.msra.mxu0 0.0
    %3118 = vmatpush.msra.mxu0 0.0
    %3119 = vmatpush.msra.mxu0 0.0
    %3120 = vmatpush.msra.mxu0 0.0
    %3121 = vmatpush.msra.mxu0 0.0
    %3122 = vmatpush.msra.mxu0 0.0
    %3123 = vmatpush.msra.mxu0 0.0
    %3124 = vmatpush.msra.mxu0 0.0
    %3125 = vmatpush.msra.mxu0 %v3105
    %3126 = vmatmul.f32.gmra.mxu0 %v3108
    %v3127 = vpop.f32.mrf.mxu0
    %v3128 = vadd.f32 0.0, %v3127
    %3129 = vdwg.mxu0
    %3130 = vrot.lane.b32.xlu0 %v2179, 96
    %v3131 = vpop.permute.xlu0 %3130
    %v3134 = vsel %vm65, %v2814, 0
    %3136 = vmatpush.msra.mxu0 0.0
    %3137 = vmatpush.msra.mxu0 0.0
    %3138 = vmatpush.msra.mxu0 0.0
    %3139 = vmatpush.msra.mxu0 0.0
    %3140 = vmatpush.msra.mxu0 0.0
    %3141 = vmatpush.msra.mxu0 0.0
    %3142 = vmatpush.msra.mxu0 0.0
    %3143 = vmatpush.msra.mxu0 0.0
    %3144 = vmatpush.msra.mxu0 0.0
    %3145 = vmatpush.msra.mxu0 0.0
    %3146 = vmatpush.msra.mxu0 0.0
    %3147 = vmatpush.msra.mxu0 0.0
    %3148 = vmatpush.msra.mxu0 0.0
    %3149 = vmatpush.msra.mxu0 0.0
    %3150 = vmatpush.msra.mxu0 0.0
    %3151 = vmatpush.msra.mxu0 %v3131
    %3152 = vmatmul.f32.gmra.mxu0 %v3134
    %v3153 = vpop.f32.mrf.mxu0
    %v3154 = vadd.f32 0.0, %v3153
    %3155 = vdwg.mxu0
    %3156 = vrot.lane.b32.xlu0 %v2192, 96
    %v3157 = vpop.permute.xlu0 %3156
    %v3160 = vsel %vm65, %v2815, 0
    %3162 = vmatpush.msra.mxu0 0.0
    %3163 = vmatpush.msra.mxu0 0.0
    %3164 = vmatpush.msra.mxu0 0.0
    %3165 = vmatpush.msra.mxu0 0.0
    %3166 = vmatpush.msra.mxu0 0.0
    %3167 = vmatpush.msra.mxu0 0.0
    %3168 = vmatpush.msra.mxu0 0.0
    %3169 = vmatpush.msra.mxu0 0.0
    %3170 = vmatpush.msra.mxu0 0.0
    %3171 = vmatpush.msra.mxu0 0.0
    %3172 = vmatpush.msra.mxu0 0.0
    %3173 = vmatpush.msra.mxu0 0.0
    %3174 = vmatpush.msra.mxu0 0.0
    %3175 = vmatpush.msra.mxu0 0.0
    %3176 = vmatpush.msra.mxu0 0.0
    %3177 = vmatpush.msra.mxu0 %v3157
    %3178 = vmatmul.f32.gmra.mxu0 %v3160
    %v3179 = vpop.f32.mrf.mxu0
    %v3180 = vadd.f32 0.0, %v3179
    %3181 = vdwg.mxu0
    %3182 = vrot.lane.b32.xlu0 %v2200, 96
    %v3183 = vpop.permute.xlu0 %3182
    %v3186 = vsel %vm65, %v2816, 0
    %3188 = vmatpush.msra.mxu0 0.0
    %3189 = vmatpush.msra.mxu0 0.0
    %3190 = vmatpush.msra.mxu0 0.0
    %3191 = vmatpush.msra.mxu0 0.0
    %3192 = vmatpush.msra.mxu0 0.0
    %3193 = vmatpush.msra.mxu0 0.0
    %3194 = vmatpush.msra.mxu0 0.0
    %3195 = vmatpush.msra.mxu0 0.0
    %3196 = vmatpush.msra.mxu0 0.0
    %3197 = vmatpush.msra.mxu0 0.0
    %3198 = vmatpush.msra.mxu0 0.0
    %3199 = vmatpush.msra.mxu0 0.0
    %3200 = vmatpush.msra.mxu0 0.0
    %3201 = vmatpush.msra.mxu0 0.0
    %3202 = vmatpush.msra.mxu0 0.0
    %3203 = vmatpush.msra.mxu0 %v3183
    %3204 = vmatmul.f32.gmra.mxu0 %v3186
    %v3205 = vpop.f32.mrf.mxu0
    %v3206 = vadd.f32 0.0, %v3205
    %3207 = vdwg.mxu0
    %3208 = vrot.lane.b32.xlu0 %v2208, 96
    %v3209 = vpop.permute.xlu0 %3208
    %v3212 = vsel %vm65, %v2817, 0
    %3214 = vmatpush.msra.mxu0 0.0
    %3215 = vmatpush.msra.mxu0 0.0
    %3216 = vmatpush.msra.mxu0 0.0
    %3217 = vmatpush.msra.mxu0 0.0
    %3218 = vmatpush.msra.mxu0 0.0
    %3219 = vmatpush.msra.mxu0 0.0
    %3220 = vmatpush.msra.mxu0 0.0
    %3221 = vmatpush.msra.mxu0 0.0
    %3222 = vmatpush.msra.mxu0 0.0
    %3223 = vmatpush.msra.mxu0 0.0
    %3224 = vmatpush.msra.mxu0 0.0
    %3225 = vmatpush.msra.mxu0 0.0
    %3226 = vmatpush.msra.mxu0 0.0
    %3227 = vmatpush.msra.mxu0 0.0
    %3228 = vmatpush.msra.mxu0 0.0
    %3229 = vmatpush.msra.mxu0 %v3209
    %3230 = vmatmul.f32.gmra.mxu0 %v3212
    %v3231 = vpop.f32.mrf.mxu0
    %v3232 = vadd.f32 0.0, %v3231
    %3233 = vdwg.mxu0
    %3238 = vrot.lane.b32.xlu0 %v2868, 4
    %v3239 = vpop.permute.xlu0 %3238
    %3240 = vrot.lane.b32.xlu0 %v2972, 4
    %v3241 = vpop.permute.xlu0 %3240
    %3242 = vrot.lane.b32.xlu0 %v3076, 4
    %v3243 = vpop.permute.xlu0 %3242
    %3244 = vrot.lane.b32.xlu0 %v3180, 4
    %v3245 = vpop.permute.xlu0 %3244
    %3254 = vrot.lane.b32.xlu0 %v2894, 8
    %v3255 = vpop.permute.xlu0 %3254
    %3256 = vrot.lane.b32.xlu0 %v2998, 8
    %v3257 = vpop.permute.xlu0 %3256
    %3258 = vrot.lane.b32.xlu0 %v3102, 8
    %v3259 = vpop.permute.xlu0 %3258
    %3260 = vrot.lane.b32.xlu0 %v3206, 8
    %v3261 = vpop.permute.xlu0 %3260
    %3270 = vrot.lane.b32.xlu0 %v2920, 12
    %v3271 = vpop.permute.xlu0 %3270
    %3272 = vrot.lane.b32.xlu0 %v3024, 12
    %v3273 = vpop.permute.xlu0 %3272
    %3274 = vrot.lane.b32.xlu0 %v3128, 12
    %v3275 = vpop.permute.xlu0 %3274
    %3276 = vrot.lane.b32.xlu0 %v3232, 12
    %v3277 = vpop.permute.xlu0 %3276
    %v3282 = vsel %vm2211, %v2842, %v3239
    %v3283 = vsel %vm2211, %v2946, %v3241
    %v3284 = vsel %vm2211, %v3050, %v3243
    %v3285 = vsel %vm2211, %v3154, %v3245
    %v3286 = vsel %vm65, %v3282, %v3255
    %v3287 = vsel %vm65, %v3283, %v3257
    %v3288 = vsel %vm65, %v3284, %v3259
    %v3289 = vsel %vm65, %v3285, %v3261
    %vm3290 = vcmask 97280
    %v3291 = vsel %vm3290, %v3286, %v3271
    %v3292 = vsel %vm3290, %v3287, %v3273
    %v3293 = vsel %vm3290, %v3288, %v3275
    %v3294 = vsel %vm3290, %v3289, %v3277
    %v3295 = vld [vmem:[%s10] sm:$0xff]
    %v3296 = vld [vmem:[%s10 + $0x8] sm:$0xff]
    %v3298 = vsel %vm1554, %v3291, 0
    %v3301 = vsel %vm1554, %v3292, 0
    %v3304 = vsel %vm1554, %v3293, 0
    %v3307 = vsel %vm1554, %v3294, 0
    %3309 = vmatpush.msra.mxu0 0.0
    %3310 = vmatpush.msra.mxu0 0.0
    %3311 = vmatpush.msra.mxu0 0.0
    %3312 = vmatpush.msra.mxu0 0.0
    %3313 = vmatpush.msra.mxu0 0.0
    %3314 = vmatpush.msra.mxu0 0.0
    %3315 = vmatpush.msra.mxu0 0.0
    %3316 = vmatpush.msra.mxu0 0.0
    %3317 = vmatpush.msra.mxu0 0.0
    %3318 = vmatpush.msra.mxu0 0.0
    %3319 = vmatpush.msra.mxu0 0.0
    %3320 = vmatpush.msra.mxu0 0.0
    %3321 = vmatpush.msra.mxu0 0.0
    %3322 = vmatpush.msra.mxu0 0.0
    %3323 = vmatpush.msra.mxu0 %v3296
    %3324 = vmatpush.msra.mxu0 %v3295
    %3325 = vmatmul.f32.gmra.mxu0 %v3298
    %v3326 = vpop.f32.mrf.mxu0
    %v3327 = vadd.f32 %v2134, %v3326
    %3328 = vmatmul.f32.gmra.mxu0 %v3301
    %v3329 = vpop.f32.mrf.mxu0
    %v3330 = vadd.f32 %v2135, %v3329
    %3331 = vmatmul.f32.gmra.mxu0 %v3304
    %v3332 = vpop.f32.mrf.mxu0
    %v3333 = vadd.f32 %v2136, %v3332
    %3334 = vmatmul.f32.gmra.mxu0 %v3307
    %v3335 = vpop.f32.mrf.mxu0
    %v3336 = vadd.f32 %v2137, %v3335
    %3337 = vdwg.mxu0
    %v3338 = vsel %vm1554, %v3327, 0.0
    %3339 = vadd.xlane.f32.xlu0 %v3338
    %v3340 = vpop.xlane.xlu0 %3339
    %v3341 = vsel %vm1554, %v3330, 0.0
    %3342 = vadd.xlane.f32.xlu0 %v3341
    %v3343 = vpop.xlane.xlu0 %3342
    %v3344 = vsel %vm1554, %v3333, 0.0
    %3345 = vadd.xlane.f32.xlu0 %v3344
    %v3346 = vpop.xlane.xlu0 %3345
    %v3347 = vsel %vm1554, %v3336, 0.0
    %3348 = vadd.xlane.f32.xlu0 %v3347
    %v3349 = vpop.xlane.xlu0 %3348
    %v3350 = vrcp.pop 16.0
    %v3351 = vmul.f32 16.0, %v3350
    %v3352 = vsub.f32 1.0, %v3351
    %v3353 = vmul.f32 %v3350, %v3352
    %v3354 = vadd.f32 %v3350, %v3353
    %vm3355 = vweird.f32 %v3350
    %v3356 = vsel %vm3355, %v3350, %v3354
    %v3357 = vmul.f32 %v3340, %v3356
    %v3358 = vmul.f32 %v3343, %v3356
    %v3359 = vmul.f32 %v3346, %v3356
    %v3360 = vmul.f32 %v3349, %v3356
    %v3361 = vsub.f32 %v3327, %v3357
    %v3362 = vsub.f32 %v3330, %v3358
    %v3363 = vsub.f32 %v3333, %v3359
    %v3364 = vsub.f32 %v3336, %v3360
    %v3365 = vmul.f32 %v3361, %v3361
    %v3366 = vmul.f32 %v3362, %v3362
    %v3367 = vmul.f32 %v3363, %v3363
    %v3368 = vmul.f32 %v3364, %v3364
    %v3369 = vsel %vm1554, %v3365, 0.0
    %3370 = vadd.xlane.f32.xlu0 %v3369
    %v3371 = vpop.xlane.xlu0 %3370
    %v3372 = vsel %vm1554, %v3366, 0.0
    %3373 = vadd.xlane.f32.xlu0 %v3372
    %v3374 = vpop.xlane.xlu0 %3373
    %v3375 = vsel %vm1554, %v3367, 0.0
    %3376 = vadd.xlane.f32.xlu0 %v3375
    %v3377 = vpop.xlane.xlu0 %3376
    %v3378 = vsel %vm1554, %v3368, 0.0
    %3379 = vadd.xlane.f32.xlu0 %v3378
    %v3380 = vpop.xlane.xlu0 %3379
    %v3381 = vmul.f32 %v3371, %v3356
    %v3382 = vmul.f32 %v3374, %v3356
    %v3383 = vmul.f32 %v3377, %v3356
    %v3384 = vmul.f32 %v3380, %v3356
    %v3385 = vadd.f32 %v3381, 1e-05
    %v3386 = vadd.f32 %v3382, 1e-05
    %v3387 = vadd.f32 %v3383, 1e-05
    %v3388 = vadd.f32 %v3384, 1e-05
    %v3389 = vrsqrt.pop %v3385
    %v3390 = vmul.f32 %v3389, %v3385
    %v3391 = vmul.f32 %v3390, %v3389
    %v3392 = vmul.f32 0.5, %v3391
    %v3393 = vsub.f32 1.5, %v3392
    %v3394 = vmul.f32 %v3389, %v3393
    %vm3395 = vweird.f32 %v3385
    %vm3396 = vweird.f32 %v3389
    %vm3397 = vmor %vm3395, %vm3396
    %v3398 = vsel %vm3397, %v3389, %v3394
    %v3399 = vrsqrt.pop %v3386
    %v3400 = vmul.f32 %v3399, %v3386
    %v3401 = vmul.f32 %v3400, %v3399
    %v3402 = vmul.f32 0.5, %v3401
    %v3403 = vsub.f32 1.5, %v3402
    %v3404 = vmul.f32 %v3399, %v3403
    %vm3405 = vweird.f32 %v3386
    %vm3406 = vweird.f32 %v3399
    %vm3407 = vmor %vm3405, %vm3406
    %v3408 = vsel %vm3407, %v3399, %v3404
    %v3409 = vrsqrt.pop %v3387
    %v3410 = vmul.f32 %v3409, %v3387
    %v3411 = vmul.f32 %v3410, %v3409
    %v3412 = vmul.f32 0.5, %v3411
    %v3413 = vsub.f32 1.5, %v3412
    %v3414 = vmul.f32 %v3409, %v3413
    %vm3415 = vweird.f32 %v3387
    %vm3416 = vweird.f32 %v3409
    %vm3417 = vmor %vm3415, %vm3416
    %v3418 = vsel %vm3417, %v3409, %v3414
    %v3419 = vrsqrt.pop %v3388
    %v3420 = vmul.f32 %v3419, %v3388
    %v3421 = vmul.f32 %v3420, %v3419
    %v3422 = vmul.f32 0.5, %v3421
    %v3423 = vsub.f32 1.5, %v3422
    %v3424 = vmul.f32 %v3419, %v3423
    %vm3425 = vweird.f32 %v3388
    %vm3426 = vweird.f32 %v3419
    %vm3427 = vmor %vm3425, %vm3426
    %v3428 = vsel %vm3427, %v3419, %v3424
    %v3429 = vmul.f32 %v3361, %v3398
    %v3430 = vmul.f32 %v3362, %v3408
    %v3431 = vmul.f32 %v3363, %v3418
    %v3432 = vmul.f32 %v3364, %v3428
    %v3433 = vld [vmem:[%s11] sm:$0x1]
    %v3435 = vperm.slane %v3433, 0
    %v3437 = vmul.f32 %v3429, %v3435
    %v3438 = vmul.f32 %v3430, %v3435
    %v3439 = vmul.f32 %v3431, %v3435
    %v3440 = vmul.f32 %v3432, %v3435
    %v3441 = vld [vmem:[%s12] sm:$0x1]
    %v3443 = vperm.slane %v3441, 0
    %v3445 = vadd.f32 %v3437, %v3443
    %v3446 = vadd.f32 %v3438, %v3443
    %v3447 = vadd.f32 %v3439, %v3443
    %v3448 = vadd.f32 %v3440, %v3443
    %v3453 = vrot.slane %v3446, 7
    %v3454 = vsel %vm1768, %v3453, %v3445
    %v3455 = vrot.slane %v3447, 6
    %v3456 = vsel %vm1771, %v3455, %v3454
    %v3457 = vrot.slane %v3448, 5
    %v3458 = vsel %vm1774, %v3457, %v3456
    %v3460 = vrot.slane %v3445, 1
    %v3461 = vsel %vm1768, %v3446, %v3460
    %v3462 = vrot.slane %v3447, 7
    %v3463 = vsel %vm1771, %v3462, %v3461
    %v3464 = vrot.slane %v3448, 6
    %v3465 = vsel %vm1774, %v3464, %v3463
    %3466 = vrot.lane.b32.xlu0 %v3465, 16
    %v3467 = vpop.permute.xlu0 %3466
    %v3469 = vrot.slane %v3445, 2
    %v3470 = vrot.slane %v3446, 1
    %v3471 = vsel %vm1768, %v3470, %v3469
    %v3472 = vsel %vm1771, %v3447, %v3471
    %v3473 = vrot.slane %v3448, 7
    %v3474 = vsel %vm1774, %v3473, %v3472
    %3475 = vrot.lane.b32.xlu0 %v3474, 32
    %v3476 = vpop.permute.xlu0 %3475
    %v3478 = vrot.slane %v3445, 3
    %v3479 = vrot.slane %v3446, 2
    %v3480 = vsel %vm1768, %v3479, %v3478
    %v3481 = vrot.slane %v3447, 1
    %v3482 = vsel %vm1771, %v3481, %v3480
    %v3483 = vsel %vm1774, %v3448, %v3482
    %3484 = vrot.lane.b32.xlu0 %v3483, 48
    %v3485 = vpop.permute.xlu0 %3484
    %v3487 = vrot.slane %v3445, 4
    %v3488 = vrot.slane %v3446, 3
    %v3489 = vsel %vm1768, %v3488, %v3487
    %v3490 = vrot.slane %v3447, 2
    %v3491 = vsel %vm1771, %v3490, %v3489
    %v3492 = vrot.slane %v3448, 1
    %v3493 = vsel %vm1774, %v3492, %v3491
    %3494 = vrot.lane.b32.xlu0 %v3493, 64
    %v3495 = vpop.permute.xlu0 %3494
    %v3497 = vrot.slane %v3445, 5
    %v3498 = vrot.slane %v3446, 4
    %v3499 = vsel %vm1768, %v3498, %v3497
    %v3500 = vrot.slane %v3447, 3
    %v3501 = vsel %vm1771, %v3500, %v3499
    %v3502 = vrot.slane %v3448, 2
    %v3503 = vsel %vm1774, %v3502, %v3501
    %3504 = vrot.lane.b32.xlu0 %v3503, 80
    %v3505 = vpop.permute.xlu0 %3504
    %v3507 = vrot.slane %v3445, 6
    %v3508 = vrot.slane %v3446, 5
    %v3509 = vsel %vm1768, %v3508, %v3507
    %v3510 = vrot.slane %v3447, 4
    %v3511 = vsel %vm1771, %v3510, %v3509
    %v3512 = vrot.slane %v3448, 3
    %v3513 = vsel %vm1774, %v3512, %v3511
    %3514 = vrot.lane.b32.xlu0 %v3513, 96
    %v3515 = vpop.permute.xlu0 %3514
    %v3517 = vrot.slane %v3445, 7
    %v3518 = vrot.slane %v3446, 6
    %v3519 = vsel %vm1768, %v3518, %v3517
    %v3520 = vrot.slane %v3447, 5
    %v3521 = vsel %vm1771, %v3520, %v3519
    %v3522 = vrot.slane %v3448, 4
    %v3523 = vsel %vm1774, %v3522, %v3521
    %3524 = vrot.lane.b32.xlu0 %v3523, 112
    %v3525 = vpop.permute.xlu0 %3524
    %v3527 = vsel %vm1554, %v3458, %v3467
    %v3528 = vsel %vm408, %v3527, %v3476
    %vm3529 = vcmask 392192
    %v3530 = vsel %vm3529, %v3528, %v3485
    %vm3531 = vcmask 523264
    %v3532 = vsel %vm3531, %v3530, %v3495
    %vm3533 = vcmask 654336
    %v3534 = vsel %vm3533, %v3532, %v3505
    %vm3535 = vcmask 785408
    %v3536 = vsel %vm3535, %v3534, %v3515
    %vm3537 = vcmask 916480
    %v3538 = vsel %vm3537, %v3536, %v3525
    %3539 = vst [vmem:[#allocation2] sm:$0xf] %v3538
    // Predicated region
    $region54: #{tpu_custom_call.1} parent=1 // pred_check
      _
    $region55: #{tpu_custom_call.1} parent=1 // pred_check_branch
      %3541 = sbr.rel (0) target = $region57
    $region56: #{tpu_custom_call.1} parent=1 // pred_region
      %3543 = vsyncadd [#allocation3], 0
      %s3545 = sshll.u32 [#allocation2], 4
      %s3546 = int_to_ptr.vmem [resolvable:$true] %s3545
      %s3547 = sshll.u32 %s13, 4
      %s3548 = int_to_ptr.hbm [resolvable:$true] %s3547
      %3550 = dma.vmem_to_hbm [thread:$0]  %s3546, 64, %s3548, [#allocation3]
    $region57: #{tpu_custom_call.1} parent=1 // pred_fallthru
      _
    // Predicated region
    $region58: #{tpu_custom_call.1} parent=1 // pred_check
      _
    $region59: #{tpu_custom_call.1} parent=1 // pred_check_branch
      %3552 = sbr.rel (0) target = $region61
    $region60: #{tpu_custom_call.1} parent=1 // pred_region
      %3554 = dma.done [#allocation3], 64
    $region61: #{tpu_custom_call.1} parent=1 // pred_fallthru
      _
    %3555 = vsyncpa [#allocation3], 1

</llo_original>
